<compile_context>
chip_gen: v7x
topology: tpu7x:2x2x1
jax: 0.10.0
libtpu: 0.0.40
codegen_flags: <defaults>
</compile_context>

<pallas_src>
import functools

import jax
import jax.numpy as jnp
from jax.experimental import pallas as pl
from jax.experimental.pallas import tpu as pltpu


_MIB = 1024 * 1024
_FUSED_VMEM_BUDGET = 10 * _MIB   # single-kernel path if the whole problem fits
_TILE_VMEM_BUDGET = 8 * _MIB     # target for the per-step double-buffered working set
_MAX_TN = 2048


def _round_up(x, m):
    return ((x + m - 1) // m) * m


def _pick_tn(n_rows, per_row_bytes):
    """Largest power-of-two node tile (>=8, <=_MAX_TN) under the VMEM budget."""
    cap = max(8, min(_MAX_TN, _TILE_VMEM_BUDGET // max(per_row_bytes, 1)))
    tn = 8
    while tn * 2 <= cap:
        tn *= 2
    return min(tn, _round_up(n_rows, 8))


def _vmem_limit(est_bytes):
    """Explicit scoped-VMEM limit: 2x headroom, clamped to [16 MiB, 48 MiB]."""
    return int(min(max(2 * est_bytes, 16 * _MIB), 48 * _MIB))


def _default_tanh_bf16():
    """bf16 tanh on chips with a bf16 EUP (v6e/v7x); f32 on v5e and older."""
    try:
        kind = jax.devices()[0].device_kind.lower()
    except Exception:
        return False
    return not any(tag in kind for tag in ("v2", "v3", "v4", "v5"))


def _apply_tanh(h_f32, tanh_bf16):
    if tanh_bf16:
        return jnp.tanh(h_f32.astype(jnp.bfloat16)).astype(jnp.float32)
    return jnp.tanh(h_f32)


# ---------------------------------------------------------------------------
# Fused single-kernel path (whole problem resident in VMEM, x read once).
# ---------------------------------------------------------------------------
def _fused_kernel(emb_ref, tgt_ref, w_ref, b_ref, att_ref, z_ref, beta_ref,
                  *, m_views, n_rows, tanh_bf16):
    nviews = m_views + 1
    logits = []
    for v in range(nviews):
        x32 = emb_ref[v] if v < m_views else tgt_ref[...]
        xb = x32.astype(jnp.bfloat16)
        h = jnp.dot(xb, w_ref[...], preferred_element_type=jnp.float32) + b_ref[...]
        h = _apply_tanh(h, tanh_bf16)
        logits.append(jnp.sum(h * att_ref[...]) * (1.0 / n_rows))

    # length-V softmax in-kernel (scalars, V is tiny and static)
    mx = logits[0]
    for l in logits[1:]:
        mx = jnp.maximum(mx, l)
    exps = [jnp.exp(l - mx) for l in logits]
    denom = exps[0]
    for e in exps[1:]:
        denom = denom + e
    inv = 1.0 / denom
    betas = [e * inv for e in exps]

    acc = jnp.zeros(z_ref.shape, jnp.float32)
    for v in range(nviews):
        x32 = emb_ref[v] if v < m_views else tgt_ref[...]
        acc = acc + betas[v] * x32.astype(jnp.bfloat16)   # same bf16 recipe as 2-pass
    z_ref[...] = acc.astype(z_ref.dtype)

    lane = jax.lax.broadcasted_iota(jnp.int32, (1, 128), 1)
    bvec = jnp.zeros((1, 128), jnp.float32)
    for v in range(nviews):
        bvec = bvec + jnp.where(lane == v, betas[v], 0.0)
    beta_ref[...] = bvec


def _fused_call(emb32, tgt32, w_t, b, a, *, M, N, D, V, out_dtype, tanh_bf16):
    est = N * D * (4 * V + 14) + 4 * D * D
    z, beta_pad = pl.pallas_call(
        functools.partial(_fused_kernel, m_views=M, n_rows=N, tanh_bf16=tanh_bf16),
        out_shape=(jax.ShapeDtypeStruct((N, D), out_dtype),
                   jax.ShapeDtypeStruct((1, 128), jnp.float32)),
        compiler_params=pltpu.CompilerParams(vmem_limit_bytes=_vmem_limit(est)),
    )(emb32, tgt32, w_t, b, a)
    return z, beta_pad[0, :V]


# ---------------------------------------------------------------------------
# Two-pass path (large N).
# Pass 1 (grid = node tiles, fully "parallel"):
#   reads f32 views, writes the stacked bf16 copy, and per-tile partial logits
#   partial[n, v] = att . sum_{rows in tile n}( tanh(x_v @ W + b) )
# ---------------------------------------------------------------------------
def _logit_cast_kernel(emb_ref, tgt_ref, w_ref, b_ref, att_ref,
                       part_ref, xbf_ref,
                       *, m_views, n_rows, tn, tanh_bf16, needs_mask):
    n = pl.program_id(0)
    lane = jax.lax.broadcasted_iota(jnp.int32, (8, 128), 1)
    if needs_mask:
        rows = n * tn + jax.lax.broadcasted_iota(jnp.int32, (tn, 1), 0)
        valid = rows < n_rows

    acc = jnp.zeros((8, 128), jnp.float32)
    for v in range(m_views + 1):
        x32 = emb_ref[v] if v < m_views else tgt_ref[...]
        xb = x32.astype(jnp.bfloat16)
        xbf_ref[v] = xb                                      # fused concat+cast output
        h = jnp.dot(xb, w_ref[...], preferred_element_type=jnp.float32) + b_ref[...]
        h = _apply_tanh(h, tanh_bf16)
        if needs_mask:
            h = jnp.where(valid, h, 0.0)
        p = jnp.sum(h * att_ref[...])                        # scalar partial logit
        acc = acc + jnp.where(lane == v, p, 0.0)
    part_ref[0] = acc                                        # lane-dense (8,128) store


# Pass 2 (grid = node tiles, fully "parallel"): z = sum_v beta[v] * x_bf16[v]
def _wsum_kernel(beta_ref, x_ref, z_ref, *, m_views):
    acc = jnp.zeros(z_ref.shape, jnp.float32)
    for v in range(m_views + 1):
        acc = acc + beta_ref[v] * x_ref[v]                   # f32 scalar * bf16 -> f32
    z_ref[...] = acc.astype(z_ref.dtype)


def _two_pass_call(emb32, tgt32, w_t, b, a, *, M, N, D, V, tn, out_dtype, tanh_bf16):
    n_tiles = pl.cdiv(N, tn)
    needs_mask = (N % tn) != 0
    out_bytes = jnp.dtype(out_dtype).itemsize

    est1 = (2 * M * tn * D * 4 + 2 * tn * D * 4 + 2 * V * tn * D * 2
            + 2 * D * D * 2 + 4 * D * 4 + 2 * 8 * 128 * 4 + 2 * tn * D * 4)
    part, x_bf16 = pl.pallas_call(
        functools.partial(_logit_cast_kernel, m_views=M, n_rows=N, tn=tn,
                          tanh_bf16=tanh_bf16, needs_mask=needs_mask),
        out_shape=(jax.ShapeDtypeStruct((n_tiles, 8, 128), jnp.float32),
                   jax.ShapeDtypeStruct((V, N, D), jnp.bfloat16)),
        grid_spec=pltpu.PrefetchScalarGridSpec(
            num_scalar_prefetch=0,
            grid=(n_tiles,),
            in_specs=[
                pl.BlockSpec((M, tn, D), lambda n: (0, n, 0)),   # embeds (f32)
                pl.BlockSpec((tn, D), lambda n: (n, 0)),         # target (f32)
                pl.BlockSpec((D, D), lambda n: (0, 0)),          # W^T (bf16)
                pl.BlockSpec((1, D), lambda n: (0, 0)),          # bias (f32)
                pl.BlockSpec((1, D), lambda n: (0, 0)),          # att  (f32)
            ],
            out_specs=[
                pl.BlockSpec((1, 8, 128), lambda n: (n, 0, 0)),  # per-tile partial logits
                pl.BlockSpec((V, tn, D), lambda n: (0, n, 0)),   # stacked bf16 copy
            ],
        ),
        compiler_params=pltpu.CompilerParams(
            dimension_semantics=("parallel",),
            vmem_limit_bytes=_vmem_limit(est1)),
    )(emb32, tgt32, w_t, b, a)

    # tiny combine + softmax glue (stays inside the same jit)
    logits = jnp.sum(part[:, 0, :V], axis=0) * (1.0 / N)
    beta = jax.nn.softmax(logits)

    est2 = 2 * V * tn * D * 2 + 2 * tn * D * out_bytes + tn * D * 4
    z = pl.pallas_call(
        functools.partial(_wsum_kernel, m_views=M),
        out_shape=jax.ShapeDtypeStruct((N, D), out_dtype),
        grid_spec=pltpu.PrefetchScalarGridSpec(
            num_scalar_prefetch=0,
            grid=(n_tiles,),
            in_specs=[
                pl.BlockSpec(memory_space=pltpu.SMEM),           # beta (V,)
                pl.BlockSpec((V, tn, D), lambda n: (0, n, 0)),   # x_bf16 tile
            ],
            out_specs=pl.BlockSpec((tn, D), lambda n: (n, 0)),
        ),
        compiler_params=pltpu.CompilerParams(
            dimension_semantics=("parallel",),
            vmem_limit_bytes=_vmem_limit(est2)),
    )(beta, x_bf16)
    return z, beta


# ---------------------------------------------------------------------------
# Public wrapper
# ---------------------------------------------------------------------------
def inter_att_forward(embeds, target_features, w_fc, b_fc, att, *,
                      tn=None, out_dtype=jnp.float32,
                      force_two_pass=False, tanh_bf16=None):
    """embeds: (M, N, D); target_features: (N, D). Returns (z_mc [N,D], beta [V])."""
    M, N, D = embeds.shape
    V = M + 1
    assert target_features.shape == (N, D)
    assert V <= 128

    if tanh_bf16 is None:
        tanh_bf16 = _default_tanh_bf16()

    w_t = jnp.transpose(w_fc).astype(jnp.bfloat16)   # x @ w_t == x @ W^T
    b = b_fc.reshape(1, D).astype(jnp.float32)
    a = att.reshape(1, D).astype(jnp.float32)
    emb32 = embeds.astype(jnp.float32)
    tgt32 = target_features.astype(jnp.float32)

    fused_est = N * D * (4 * V + 14) + 4 * D * D
    if (not force_two_pass) and fused_est <= _FUSED_VMEM_BUDGET:
        return _fused_call(emb32, tgt32, w_t, b, a, M=M, N=N, D=D, V=V,
                           out_dtype=out_dtype, tanh_bf16=tanh_bf16)

    if tn is None:
        per_row = D * (8 * M + 8 + 4 * V + 8)        # pass-1 double-buffered bytes/row
        tn = _pick_tn(N, per_row)
    tn = max(8, (int(tn) // 8) * 8)
    tn = min(tn, _round_up(N, 8))                    # never a tn=N VMEM bomb; cdiv+mask
    return _two_pass_call(emb32, tgt32, w_t, b, a, M=M, N=N, D=D, V=V, tn=tn,
                          out_dtype=out_dtype, tanh_bf16=tanh_bf16)


# ---------------------------------------------------------------------------
# Pure-JAX reference (same bf16-storage / f32-accumulate recipe as the kernels)
# ---------------------------------------------------------------------------
def _reference(embeds, target_features, w_fc, b_fc, att, *, tanh_bf16=False):
    x = jnp.concatenate([embeds, target_features[None]], axis=0).astype(jnp.bfloat16)
    w_t = jnp.transpose(w_fc).astype(jnp.bfloat16)
    h = jnp.einsum("vnd,de->vne", x, w_t,
                   preferred_element_type=jnp.float32) + b_fc[None, None, :]
    h = _apply_tanh(h, tanh_bf16)
    sp = h.mean(axis=1)                              # (V, D) f32
    logits = sp @ att.reshape(-1)                    # (V,)
    beta = jax.nn.softmax(logits)
    z = jnp.einsum("v,vnd->nd", beta, x.astype(jnp.float32))
    return z, beta


if __name__ == "__main__":
    M, N, D = 3, 512, 128        # metapath views, nodes, hidden_dim
    key = jax.random.PRNGKey(0)
    k1, k2, k3, k4 = jax.random.split(key, 4)

    embeds = jax.random.normal(k1, (M, N, D), dtype=jnp.float32)
    target_features = jax.random.normal(k2, (N, D), dtype=jnp.float32)

    # deterministic parameter init (xavier_normal with gain=1.414, zero bias)
    gain = 1.414
    std_w = gain * (2.0 / (D + D)) ** 0.5
    w_fc = std_w * jax.random.normal(k3, (D, D), dtype=jnp.float32)   # nn.Linear weight (out, in)
    b_fc = jnp.zeros((D,), dtype=jnp.float32)
    std_a = gain * (2.0 / (1 + D)) ** 0.5
    att = std_a * jax.random.normal(k4, (1, D), dtype=jnp.float32)

    tanh_bf16 = _default_tanh_bf16()

    # Path A: fused single-kernel (small/medium N fits VMEM).
    fwd_fused = jax.jit(functools.partial(inter_att_forward, tanh_bf16=tanh_bf16))
    z1, beta1 = fwd_fused(embeds, target_features, w_fc, b_fc, att)
    jax.block_until_ready(z1)

    # Path B: two-pass tiled (exercises the pipelined / megacore path).
    fwd_2p = jax.jit(functools.partial(inter_att_forward, force_two_pass=True,
                                       tn=128, tanh_bf16=tanh_bf16))
    z2, beta2 = fwd_2p(embeds, target_features, w_fc, b_fc, att)
    jax.block_until_ready(z2)

    z_ref, beta_ref = _reference(embeds, target_features, w_fc, b_fc, att,
                                 tanh_bf16=tanh_bf16)
    for z, beta in ((z1, beta1), (z2, beta2)):
        assert z.shape == (N, D) and z.dtype == jnp.float32
        assert beta.shape == (M + 1,)
        assert jnp.allclose(beta, beta_ref, atol=2e-4, rtol=2e-4), "beta mismatch"
        assert jnp.allclose(z, z_ref, atol=2e-3, rtol=2e-3), "z_mc mismatch"

    # Path C: non-divisible N -> cdiv grid + masked final tile (no tn=N fallback).
    N2 = 200
    embeds2 = jax.random.normal(k1, (M, N2, D), dtype=jnp.float32)
    target2 = jax.random.normal(k2, (N2, D), dtype=jnp.float32)
    fwd_mask = jax.jit(functools.partial(inter_att_forward, force_two_pass=True,
                                         tn=64, tanh_bf16=tanh_bf16))
    z3, beta3 = fwd_mask(embeds2, target2, w_fc, b_fc, att)
    jax.block_until_ready(z3)
    z3_ref, beta3_ref = _reference(embeds2, target2, w_fc, b_fc, att,
                                   tanh_bf16=tanh_bf16)
    assert jnp.allclose(beta3, beta3_ref, atol=2e-4, rtol=2e-4), "beta mismatch (masked)"
    assert jnp.allclose(z3, z3_ref, atol=2e-3, rtol=2e-3), "z_mc mismatch (masked)"

    print("KERNEL_OK")
</pallas_src>

<mosaic_0001>
module attributes {stable_mosaic.version = 11 : i64} {
  func.func @_fused_kernel(%arg0: memref<3x512x128xf32, #tpu.memory_space<vmem>>, %arg1: memref<512x128xf32, #tpu.memory_space<vmem>>, %arg2: memref<128x128xbf16, #tpu.memory_space<vmem>>, %arg3: memref<1x128xf32, #tpu.memory_space<vmem>>, %arg4: memref<1x128xf32, #tpu.memory_space<vmem>>, %arg5: memref<512x128xf32, #tpu.memory_space<vmem>>, %arg6: memref<1x128xf32, #tpu.memory_space<vmem>>) attributes {dimension_semantics = [], scalar_prefetch = 0 : i64, scratch_operands = 0 : i64, tpu.core_type = #tpu.core_type<tc>} {
    %c0 = arith.constant 0 : index
    %c0_0 = arith.constant 0 : index
    %c0_1 = arith.constant 0 : index
    %0 = vector.load %arg0[%c0, %c0_0, %c0_1] : memref<3x512x128xf32, #tpu.memory_space<vmem>>, vector<1x512x128xf32>
    %1 = vector.shape_cast %0 : vector<1x512x128xf32> to vector<512x128xf32>
    %2 = arith.truncf %1 : vector<512x128xf32> to vector<512x128xbf16>
    %c0_2 = arith.constant 0 : index
    %c0_3 = arith.constant 0 : index
    %3 = vector.load %arg2[%c0_2, %c0_3] : memref<128x128xbf16, #tpu.memory_space<vmem>>, vector<128x128xbf16>
    %cst = arith.constant dense<0.000000e+00> : vector<512x128xf32>
    %4 = tpu.matmul %2, %3, %cst {dimension_numbers = #tpu.dot_dimension_numbers<[1], [0], [0], [1], [0, 0, 1, 1], [], []>} : vector<512x128xbf16>, vector<128x128xbf16>, vector<512x128xf32> -> vector<512x128xf32>
    %c0_4 = arith.constant 0 : index
    %c0_5 = arith.constant 0 : index
    %5 = vector.load %arg3[%c0_4, %c0_5] : memref<1x128xf32, #tpu.memory_space<vmem>>, vector<1x128xf32>
    %6 = vector.broadcast %5 : vector<1x128xf32> to vector<512x128xf32>
    %7 = arith.addf %4, %6 : vector<512x128xf32>
    %8 = arith.truncf %7 : vector<512x128xf32> to vector<512x128xbf16>
    %9 = math.tanh %8 : vector<512x128xbf16>
    %10 = arith.extf %9 : vector<512x128xbf16> to vector<512x128xf32>
    %c0_6 = arith.constant 0 : index
    %c0_7 = arith.constant 0 : index
    %11 = vector.load %arg4[%c0_6, %c0_7] : memref<1x128xf32, #tpu.memory_space<vmem>>, vector<1x128xf32>
    %12 = vector.broadcast %11 : vector<1x128xf32> to vector<512x128xf32>
    %13 = arith.mulf %10, %12 : vector<512x128xf32>
    %14 = vector.shape_cast %13 : vector<512x128xf32> to vector<1x512x128xf32>
    %cst_8 = arith.constant dense<0.000000e+00> : vector<1xf32>
    %15 = vector.multi_reduction <add>, %14, %cst_8 [1, 2] : vector<1x512x128xf32> to vector<1xf32>
    %16 = vector.shape_cast %15 : vector<1xf32> to vector<1x1x1xf32>
    %17 = vector.extract %16[0, 0, 0] : f32 from vector<1x1x1xf32>
    %cst_9 = arith.constant 0.001953125 : f32
    %18 = arith.mulf %17, %cst_9 : f32
    %c1 = arith.constant 1 : index
    %c0_10 = arith.constant 0 : index
    %c0_11 = arith.constant 0 : index
    %19 = vector.load %arg0[%c1, %c0_10, %c0_11] : memref<3x512x128xf32, #tpu.memory_space<vmem>>, vector<1x512x128xf32>
    %20 = vector.shape_cast %19 : vector<1x512x128xf32> to vector<512x128xf32>
    %21 = arith.truncf %20 : vector<512x128xf32> to vector<512x128xbf16>
    %c0_12 = arith.constant 0 : index
    %c0_13 = arith.constant 0 : index
    %22 = vector.load %arg2[%c0_12, %c0_13] : memref<128x128xbf16, #tpu.memory_space<vmem>>, vector<128x128xbf16>
    %cst_14 = arith.constant dense<0.000000e+00> : vector<512x128xf32>
    %23 = tpu.matmul %21, %22, %cst_14 {dimension_numbers = #tpu.dot_dimension_numbers<[1], [0], [0], [1], [0, 0, 1, 1], [], []>} : vector<512x128xbf16>, vector<128x128xbf16>, vector<512x128xf32> -> vector<512x128xf32>
    %c0_15 = arith.constant 0 : index
    %c0_16 = arith.constant 0 : index
    %24 = vector.load %arg3[%c0_15, %c0_16] : memref<1x128xf32, #tpu.memory_space<vmem>>, vector<1x128xf32>
    %25 = vector.broadcast %24 : vector<1x128xf32> to vector<512x128xf32>
    %26 = arith.addf %23, %25 : vector<512x128xf32>
    %27 = arith.truncf %26 : vector<512x128xf32> to vector<512x128xbf16>
    %28 = math.tanh %27 : vector<512x128xbf16>
    %29 = arith.extf %28 : vector<512x128xbf16> to vector<512x128xf32>
    %c0_17 = arith.constant 0 : index
    %c0_18 = arith.constant 0 : index
    %30 = vector.load %arg4[%c0_17, %c0_18] : memref<1x128xf32, #tpu.memory_space<vmem>>, vector<1x128xf32>
    %31 = vector.broadcast %30 : vector<1x128xf32> to vector<512x128xf32>
    %32 = arith.mulf %29, %31 : vector<512x128xf32>
    %33 = vector.shape_cast %32 : vector<512x128xf32> to vector<1x512x128xf32>
    %cst_19 = arith.constant dense<0.000000e+00> : vector<1xf32>
    %34 = vector.multi_reduction <add>, %33, %cst_19 [1, 2] : vector<1x512x128xf32> to vector<1xf32>
    %35 = vector.shape_cast %34 : vector<1xf32> to vector<1x1x1xf32>
    %36 = vector.extract %35[0, 0, 0] : f32 from vector<1x1x1xf32>
    %cst_20 = arith.constant 0.001953125 : f32
    %37 = arith.mulf %36, %cst_20 : f32
    %c2 = arith.constant 2 : index
    %c0_21 = arith.constant 0 : index
    %c0_22 = arith.constant 0 : index
    %38 = vector.load %arg0[%c2, %c0_21, %c0_22] : memref<3x512x128xf32, #tpu.memory_space<vmem>>, vector<1x512x128xf32>
    %39 = vector.shape_cast %38 : vector<1x512x128xf32> to vector<512x128xf32>
    %40 = arith.truncf %39 : vector<512x128xf32> to vector<512x128xbf16>
    %c0_23 = arith.constant 0 : index
    %c0_24 = arith.constant 0 : index
    %41 = vector.load %arg2[%c0_23, %c0_24] : memref<128x128xbf16, #tpu.memory_space<vmem>>, vector<128x128xbf16>
    %cst_25 = arith.constant dense<0.000000e+00> : vector<512x128xf32>
    %42 = tpu.matmul %40, %41, %cst_25 {dimension_numbers = #tpu.dot_dimension_numbers<[1], [0], [0], [1], [0, 0, 1, 1], [], []>} : vector<512x128xbf16>, vector<128x128xbf16>, vector<512x128xf32> -> vector<512x128xf32>
    %c0_26 = arith.constant 0 : index
    %c0_27 = arith.constant 0 : index
    %43 = vector.load %arg3[%c0_26, %c0_27] : memref<1x128xf32, #tpu.memory_space<vmem>>, vector<1x128xf32>
    %44 = vector.broadcast %43 : vector<1x128xf32> to vector<512x128xf32>
    %45 = arith.addf %42, %44 : vector<512x128xf32>
    %46 = arith.truncf %45 : vector<512x128xf32> to vector<512x128xbf16>
    %47 = math.tanh %46 : vector<512x128xbf16>
    %48 = arith.extf %47 : vector<512x128xbf16> to vector<512x128xf32>
    %c0_28 = arith.constant 0 : index
    %c0_29 = arith.constant 0 : index
    %49 = vector.load %arg4[%c0_28, %c0_29] : memref<1x128xf32, #tpu.memory_space<vmem>>, vector<1x128xf32>
    %50 = vector.broadcast %49 : vector<1x128xf32> to vector<512x128xf32>
    %51 = arith.mulf %48, %50 : vector<512x128xf32>
    %52 = vector.shape_cast %51 : vector<512x128xf32> to vector<1x512x128xf32>
    %cst_30 = arith.constant dense<0.000000e+00> : vector<1xf32>
    %53 = vector.multi_reduction <add>, %52, %cst_30 [1, 2] : vector<1x512x128xf32> to vector<1xf32>
    %54 = vector.shape_cast %53 : vector<1xf32> to vector<1x1x1xf32>
    %55 = vector.extract %54[0, 0, 0] : f32 from vector<1x1x1xf32>
    %cst_31 = arith.constant 0.001953125 : f32
    %56 = arith.mulf %55, %cst_31 : f32
    %c0_32 = arith.constant 0 : index
    %c0_33 = arith.constant 0 : index
    %57 = vector.load %arg1[%c0_32, %c0_33] : memref<512x128xf32, #tpu.memory_space<vmem>>, vector<512x128xf32>
    %58 = arith.truncf %57 : vector<512x128xf32> to vector<512x128xbf16>
    %c0_34 = arith.constant 0 : index
    %c0_35 = arith.constant 0 : index
    %59 = vector.load %arg2[%c0_34, %c0_35] : memref<128x128xbf16, #tpu.memory_space<vmem>>, vector<128x128xbf16>
    %cst_36 = arith.constant dense<0.000000e+00> : vector<512x128xf32>
    %60 = tpu.matmul %58, %59, %cst_36 {dimension_numbers = #tpu.dot_dimension_numbers<[1], [0], [0], [1], [0, 0, 1, 1], [], []>} : vector<512x128xbf16>, vector<128x128xbf16>, vector<512x128xf32> -> vector<512x128xf32>
    %c0_37 = arith.constant 0 : index
    %c0_38 = arith.constant 0 : index
    %61 = vector.load %arg3[%c0_37, %c0_38] : memref<1x128xf32, #tpu.memory_space<vmem>>, vector<1x128xf32>
    %62 = vector.broadcast %61 : vector<1x128xf32> to vector<512x128xf32>
    %63 = arith.addf %60, %62 : vector<512x128xf32>
    %64 = arith.truncf %63 : vector<512x128xf32> to vector<512x128xbf16>
    %65 = math.tanh %64 : vector<512x128xbf16>
    %66 = arith.extf %65 : vector<512x128xbf16> to vector<512x128xf32>
    %c0_39 = arith.constant 0 : index
    %c0_40 = arith.constant 0 : index
    %67 = vector.load %arg4[%c0_39, %c0_40] : memref<1x128xf32, #tpu.memory_space<vmem>>, vector<1x128xf32>
    %68 = vector.broadcast %67 : vector<1x128xf32> to vector<512x128xf32>
    %69 = arith.mulf %66, %68 : vector<512x128xf32>
    %70 = vector.shape_cast %69 : vector<512x128xf32> to vector<1x512x128xf32>
    %cst_41 = arith.constant dense<0.000000e+00> : vector<1xf32>
    %71 = vector.multi_reduction <add>, %70, %cst_41 [1, 2] : vector<1x512x128xf32> to vector<1xf32>
    %72 = vector.shape_cast %71 : vector<1xf32> to vector<1x1x1xf32>
    %73 = vector.extract %72[0, 0, 0] : f32 from vector<1x1x1xf32>
    %cst_42 = arith.constant 0.001953125 : f32
    %74 = arith.mulf %73, %cst_42 : f32
    %75 = arith.maximumf %18, %37 : f32
    %76 = arith.maximumf %75, %56 : f32
    %77 = arith.maximumf %76, %74 : f32
    %78 = arith.subf %18, %77 : f32
    %79 = math.exp %78 : f32
    %80 = arith.subf %37, %77 : f32
    %81 = math.exp %80 : f32
    %82 = arith.subf %56, %77 : f32
    %83 = math.exp %82 : f32
    %84 = arith.subf %74, %77 : f32
    %85 = math.exp %84 : f32
    %86 = arith.addf %79, %81 : f32
    %87 = arith.addf %86, %83 : f32
    %88 = arith.addf %87, %85 : f32
    %cst_43 = arith.constant 1.000000e+00 : f32
    %89 = arith.divf %cst_43, %88 : f32
    %90 = arith.mulf %79, %89 : f32
    %91 = arith.mulf %81, %89 : f32
    %92 = arith.mulf %83, %89 : f32
    %93 = arith.mulf %85, %89 : f32
    %cst_44 = arith.constant 0.000000e+00 : f32
    %94 = vector.broadcast %cst_44 : f32 to vector<512x128xf32>
    %c0_45 = arith.constant 0 : index
    %c0_46 = arith.constant 0 : index
    %c0_47 = arith.constant 0 : index
    %95 = vector.load %arg0[%c0_45, %c0_46, %c0_47] : memref<3x512x128xf32, #tpu.memory_space<vmem>>, vector<1x512x128xf32>
    %96 = vector.shape_cast %95 : vector<1x512x128xf32> to vector<512x128xf32>
    %97 = arith.truncf %96 : vector<512x128xf32> to vector<512x128xbf16>
    %98 = arith.extf %97 : vector<512x128xbf16> to vector<512x128xf32>
    %99 = vector.broadcast %90 : f32 to vector<512x128xf32>
    %100 = arith.mulf %99, %98 : vector<512x128xf32>
    %101 = arith.addf %94, %100 : vector<512x128xf32>
    %c1_48 = arith.constant 1 : index
    %c0_49 = arith.constant 0 : index
    %c0_50 = arith.constant 0 : index
    %102 = vector.load %arg0[%c1_48, %c0_49, %c0_50] : memref<3x512x128xf32, #tpu.memory_space<vmem>>, vector<1x512x128xf32>
    %103 = vector.shape_cast %102 : vector<1x512x128xf32> to vector<512x128xf32>
    %104 = arith.truncf %103 : vector<512x128xf32> to vector<512x128xbf16>
    %105 = arith.extf %104 : vector<512x128xbf16> to vector<512x128xf32>
    %106 = vector.broadcast %91 : f32 to vector<512x128xf32>
    %107 = arith.mulf %106, %105 : vector<512x128xf32>
    %108 = arith.addf %101, %107 : vector<512x128xf32>
    %c2_51 = arith.constant 2 : index
    %c0_52 = arith.constant 0 : index
    %c0_53 = arith.constant 0 : index
    %109 = vector.load %arg0[%c2_51, %c0_52, %c0_53] : memref<3x512x128xf32, #tpu.memory_space<vmem>>, vector<1x512x128xf32>
    %110 = vector.shape_cast %109 : vector<1x512x128xf32> to vector<512x128xf32>
    %111 = arith.truncf %110 : vector<512x128xf32> to vector<512x128xbf16>
    %112 = arith.extf %111 : vector<512x128xbf16> to vector<512x128xf32>
    %113 = vector.broadcast %92 : f32 to vector<512x128xf32>
    %114 = arith.mulf %113, %112 : vector<512x128xf32>
    %115 = arith.addf %108, %114 : vector<512x128xf32>
    %c0_54 = arith.constant 0 : index
    %c0_55 = arith.constant 0 : index
    %116 = vector.load %arg1[%c0_54, %c0_55] : memref<512x128xf32, #tpu.memory_space<vmem>>, vector<512x128xf32>
    %117 = arith.truncf %116 : vector<512x128xf32> to vector<512x128xbf16>
    %118 = arith.extf %117 : vector<512x128xbf16> to vector<512x128xf32>
    %119 = vector.broadcast %93 : f32 to vector<512x128xf32>
    %120 = arith.mulf %119, %118 : vector<512x128xf32>
    %121 = arith.addf %115, %120 : vector<512x128xf32>
    %c0_56 = arith.constant 0 : index
    %c0_57 = arith.constant 0 : index
    %122 = vector.load %arg5[%c0_56, %c0_57] : memref<512x128xf32, #tpu.memory_space<vmem>>, vector<512x128xf32>
    tpu.vector_store %arg5[%c0_56, %c0_57], %121 {strides = array<i32>} : memref<512x128xf32, #tpu.memory_space<vmem>>, vector<512x128xf32>,
    %123 = tpu.iota {dimensions = array<i32: 1>} : vector<1x128xi32>
    %cst_58 = arith.constant 0.000000e+00 : f32
    %124 = vector.broadcast %cst_58 : f32 to vector<1x128xf32>
    %c0_i32 = arith.constant 0 : i32
    %125 = vector.broadcast %c0_i32 : i32 to vector<1x128xi32>
    %126 = arith.cmpi eq, %123, %125 : vector<1x128xi32>
    %cst_59 = arith.constant 0.000000e+00 : f32
    %127 = vector.broadcast %90 : f32 to vector<1x128xf32>
    %128 = vector.broadcast %cst_59 : f32 to vector<1x128xf32>
    %129 = arith.select %126, %127, %128 : vector<1x128xi1>, vector<1x128xf32>
    %130 = arith.addf %124, %129 : vector<1x128xf32>
    %c1_i32 = arith.constant 1 : i32
    %131 = vector.broadcast %c1_i32 : i32 to vector<1x128xi32>
    %132 = arith.cmpi eq, %123, %131 : vector<1x128xi32>
    %cst_60 = arith.constant 0.000000e+00 : f32
    %133 = vector.broadcast %91 : f32 to vector<1x128xf32>
    %134 = vector.broadcast %cst_60 : f32 to vector<1x128xf32>
    %135 = arith.select %132, %133, %134 : vector<1x128xi1>, vector<1x128xf32>
    %136 = arith.addf %130, %135 : vector<1x128xf32>
    %c2_i32 = arith.constant 2 : i32
    %137 = vector.broadcast %c2_i32 : i32 to vector<1x128xi32>
    %138 = arith.cmpi eq, %123, %137 : vector<1x128xi32>
    %cst_61 = arith.constant 0.000000e+00 : f32
    %139 = vector.broadcast %92 : f32 to vector<1x128xf32>
    %140 = vector.broadcast %cst_61 : f32 to vector<1x128xf32>
    %141 = arith.select %138, %139, %140 : vector<1x128xi1>, vector<1x128xf32>
    %142 = arith.addf %136, %141 : vector<1x128xf32>
    %c3_i32 = arith.constant 3 : i32
    %143 = vector.broadcast %c3_i32 : i32 to vector<1x128xi32>
    %144 = arith.cmpi eq, %123, %143 : vector<1x128xi32>
    %cst_62 = arith.constant 0.000000e+00 : f32
    %145 = vector.broadcast %93 : f32 to vector<1x128xf32>
    %146 = vector.broadcast %cst_62 : f32 to vector<1x128xf32>
    %147 = arith.select %144, %145, %146 : vector<1x128xi1>, vector<1x128xf32>
    %148 = arith.addf %142, %147 : vector<1x128xf32>
    %c0_63 = arith.constant 0 : index
    %c0_64 = arith.constant 0 : index
    %149 = vector.load %arg6[%c0_63, %c0_64] : memref<1x128xf32, #tpu.memory_space<vmem>>, vector<1x128xf32>
    tpu.vector_store %arg6[%c0_63, %c0_64], %148 {strides = array<i32>} : memref<1x128xf32, #tpu.memory_space<vmem>>, vector<1x128xf32>,
    return
  }
}

</mosaic_0001>

<llo_original>
// kernel: inter_att_forward.1
$region0: #{inter_att_forward.1}
  #allocation0 [shape = 'u32[]', space=smem, size = 0x4, offset = 0x4, fixed_abs, tag = 'smem constant byte address 0x4 - core index']
  #allocation1 [shape = 'u32[144,128]{1,0:T(1,128)}', space=vmem, size = 0x12000, scoped, tag = 'internal scratch']
  %s0 = inlined_call_operand.hbm [shape: f32[3,512,128], index: 0, kind: input, shape index: {}]
  %s1 = inlined_call_operand.hbm [shape: f32[512,128], index: 1, kind: input, shape index: {}]
  %s2 = inlined_call_operand.vmem [shape: bf16[128,128], index: 2, kind: input, shape index: {}]
  %s3 = inlined_call_operand.vmem [shape: f32[1,128], index: 3, kind: input, shape index: {}]
  %s4 = inlined_call_operand.vmem [shape: f32[1,128], index: 4, kind: input, shape index: {}]
  %s5 = inlined_call_operand.hbm [shape: f32[512,128], index: 5, kind: output, shape index: {0}]
  %s6 = inlined_call_operand.vmem [shape: f32[1,128], index: 6, kind: output, shape index: {1}]
  %7 = xla_tuple %s5, %s6
  %s8 = sld [smem:[#allocation0]]
  $region46: #{inter_att_forward.1} parent=0
    _
  %s10 = ssub.s32 1, %s8
  %s11 = scalar_select 0, %s10, %s8
  $region1: #{inter_att_forward.1} parent=0
    #allocation2 [shape = 'u8[786432]{0}', space=vmem, size = 0xc0000, scoped, tag = 'input window, operand 0, single buffered']
    #allocation3 [shape = 's32[1]{0}', space=sflag, size = 0x4, scoped, tag = 'scoped memory for inter_att_forward.1']
    #allocation4 [shape = 's32[1]{0}', space=sflag, size = 0x4, scoped, tag = 'scoped memory for inter_att_forward.1']
    #allocation5 [shape = 'u8[262144]{0}', space=vmem, size = 0x40000, scoped, tag = 'input window, operand 1, single buffered']
    #allocation6 [shape = 's32[1]{0}', space=sflag, size = 0x4, scoped, tag = 'scoped memory for inter_att_forward.1']
    #allocation7 [shape = 'u8[262144]{0}', space=vmem, size = 0x40000, scoped, tag = 'output window, operand 0, single buffered']
    %12 = vsyncpa [#allocation3], 0
    %13 = vsyncpa [#allocation6], 0
    %14 = vsyncpa [#allocation4], 0
    // Predicated region
    $region2: #{inter_att_forward.1} parent=1 // pred_check
      _
    $region3: #{inter_att_forward.1} parent=1 // pred_check_branch
      %16 = sbr.rel (0) target = $region5
    $region4: #{inter_att_forward.1} parent=1 // pred_region
      %s18 = ssub.s32 24576, 24576
      %19 = vsyncadd [#allocation3], %s18
      %s20 = sshll.u32 [#allocation2], 4
      %s21 = int_to_ptr.vmem [resolvable:$true] %s20
      %26 = dma.hbm_to_vmem [thread:$0]  %s0, 24576, %s21, [#allocation3], 128, 128, 8
    $region5: #{inter_att_forward.1} parent=1 // pred_fallthru
      _
    // Predicated region
    $region6: #{inter_att_forward.1} parent=1 // pred_check
      _
    $region7: #{inter_att_forward.1} parent=1 // pred_check_branch
      %28 = sbr.rel (0) target = $region9
    $region8: #{inter_att_forward.1} parent=1 // pred_region
      %s30 = ssub.s32 8192, 8192
      %31 = vsyncadd [#allocation6], %s30
      %s32 = sshll.u32 [#allocation5], 4
      %s33 = int_to_ptr.vmem [resolvable:$true] %s32
      %38 = dma.hbm_to_vmem [thread:$0]  %s1, 8192, %s33, [#allocation6], 128, 128, 8
    $region9: #{inter_att_forward.1} parent=1 // pred_fallthru
      _
    // Predicated region
    $region10: #{inter_att_forward.1} parent=1 // pred_check
      _
    $region11: #{inter_att_forward.1} parent=1 // pred_check_branch
      %40 = sbr.rel (0) target = $region13
    $region12: #{inter_att_forward.1} parent=1 // pred_region
      _
    $region13: #{inter_att_forward.1} parent=1 // pred_fallthru
      _
    // Predicated region
    $region14: #{inter_att_forward.1} parent=1 // pred_check
      _
    $region15: #{inter_att_forward.1} parent=1 // pred_check_branch
      %42 = sbr.rel (0) target = $region17
    $region16: #{inter_att_forward.1} parent=1 // pred_region
      _
    $region17: #{inter_att_forward.1} parent=1 // pred_fallthru
      _
    // Predicated region
    $region18: #{inter_att_forward.1} parent=1 // pred_check
      _
    $region19: #{inter_att_forward.1} parent=1 // pred_check_branch
      %44 = sbr.rel (0) target = $region21
    $region20: #{inter_att_forward.1} parent=1 // pred_region
      _
    $region21: #{inter_att_forward.1} parent=1 // pred_fallthru
      _
    // Predicated region
    $region22: #{inter_att_forward.1} parent=1 // pred_check
      _
    $region23: #{inter_att_forward.1} parent=1 // pred_check_branch
      %46 = sbr.rel (0) target = $region25
    $region24: #{inter_att_forward.1} parent=1 // pred_region
      %47 = dma.done [#allocation3], 24576
    $region25: #{inter_att_forward.1} parent=1 // pred_fallthru
      _
    // Predicated region
    $region26: #{inter_att_forward.1} parent=1 // pred_check
      _
    $region27: #{inter_att_forward.1} parent=1 // pred_check_branch
      %49 = sbr.rel (0) target = $region29
    $region28: #{inter_att_forward.1} parent=1 // pred_region
      %50 = dma.done [#allocation6], 8192
    $region29: #{inter_att_forward.1} parent=1 // pred_fallthru
      _
    %v52 = vld [vmem:[#allocation2] sm:$0xff]
    %v53 = vld [vmem:[#allocation2 + $0x8] sm:$0xff]
    %v54 = vld [vmem:[#allocation2 + $0x10] sm:$0xff]
    %v55 = vld [vmem:[#allocation2 + $0x18] sm:$0xff]
    %v56 = vld [vmem:[#allocation2 + $0x20] sm:$0xff]
    %v57 = vld [vmem:[#allocation2 + $0x28] sm:$0xff]
    %v58 = vld [vmem:[#allocation2 + $0x30] sm:$0xff]
    %v59 = vld [vmem:[#allocation2 + $0x38] sm:$0xff]
    %v60 = vld [vmem:[#allocation2 + $0x40] sm:$0xff]
    %v61 = vld [vmem:[#allocation2 + $0x48] sm:$0xff]
    %v62 = vld [vmem:[#allocation2 + $0x50] sm:$0xff]
    %v63 = vld [vmem:[#allocation2 + $0x58] sm:$0xff]
    %v64 = vld [vmem:[#allocation2 + $0x60] sm:$0xff]
    %v65 = vld [vmem:[#allocation2 + $0x68] sm:$0xff]
    %v66 = vld [vmem:[#allocation2 + $0x70] sm:$0xff]
    %v67 = vld [vmem:[#allocation2 + $0x78] sm:$0xff]
    %v68 = vld [vmem:[#allocation2 + $0x80] sm:$0xff]
    %v69 = vld [vmem:[#allocation2 + $0x88] sm:$0xff]
    %v70 = vld [vmem:[#allocation2 + $0x90] sm:$0xff]
    %v71 = vld [vmem:[#allocation2 + $0x98] sm:$0xff]
    %v72 = vld [vmem:[#allocation2 + $0xa0] sm:$0xff]
    %v73 = vld [vmem:[#allocation2 + $0xa8] sm:$0xff]
    %v74 = vld [vmem:[#allocation2 + $0xb0] sm:$0xff]
    %v75 = vld [vmem:[#allocation2 + $0xb8] sm:$0xff]
    %v76 = vld [vmem:[#allocation2 + $0xc0] sm:$0xff]
    %v77 = vld [vmem:[#allocation2 + $0xc8] sm:$0xff]
    %v78 = vld [vmem:[#allocation2 + $0xd0] sm:$0xff]
    %v79 = vld [vmem:[#allocation2 + $0xd8] sm:$0xff]
    %v80 = vld [vmem:[#allocation2 + $0xe0] sm:$0xff]
    %v81 = vld [vmem:[#allocation2 + $0xe8] sm:$0xff]
    %v82 = vld [vmem:[#allocation2 + $0xf0] sm:$0xff]
    %v83 = vld [vmem:[#allocation2 + $0xf8] sm:$0xff]
    %v84 = vld [vmem:[#allocation2 + $0x100] sm:$0xff]
    %v85 = vld [vmem:[#allocation2 + $0x108] sm:$0xff]
    %v86 = vld [vmem:[#allocation2 + $0x110] sm:$0xff]
    %v87 = vld [vmem:[#allocation2 + $0x118] sm:$0xff]
    %v88 = vld [vmem:[#allocation2 + $0x120] sm:$0xff]
    %v89 = vld [vmem:[#allocation2 + $0x128] sm:$0xff]
    %v90 = vld [vmem:[#allocation2 + $0x130] sm:$0xff]
    %v91 = vld [vmem:[#allocation2 + $0x138] sm:$0xff]
    %v92 = vld [vmem:[#allocation2 + $0x140] sm:$0xff]
    %v93 = vld [vmem:[#allocation2 + $0x148] sm:$0xff]
    %v94 = vld [vmem:[#allocation2 + $0x150] sm:$0xff]
    %v95 = vld [vmem:[#allocation2 + $0x158] sm:$0xff]
    %v96 = vld [vmem:[#allocation2 + $0x160] sm:$0xff]
    %v97 = vld [vmem:[#allocation2 + $0x168] sm:$0xff]
    %v98 = vld [vmem:[#allocation2 + $0x170] sm:$0xff]
    %v99 = vld [vmem:[#allocation2 + $0x178] sm:$0xff]
    %v100 = vld [vmem:[#allocation2 + $0x180] sm:$0xff]
    %v101 = vld [vmem:[#allocation2 + $0x188] sm:$0xff]
    %v102 = vld [vmem:[#allocation2 + $0x190] sm:$0xff]
    %v103 = vld [vmem:[#allocation2 + $0x198] sm:$0xff]
    %v104 = vld [vmem:[#allocation2 + $0x1a0] sm:$0xff]
    %v105 = vld [vmem:[#allocation2 + $0x1a8] sm:$0xff]
    %v106 = vld [vmem:[#allocation2 + $0x1b0] sm:$0xff]
    %v107 = vld [vmem:[#allocation2 + $0x1b8] sm:$0xff]
    %v108 = vld [vmem:[#allocation2 + $0x1c0] sm:$0xff]
    %v109 = vld [vmem:[#allocation2 + $0x1c8] sm:$0xff]
    %v110 = vld [vmem:[#allocation2 + $0x1d0] sm:$0xff]
    %v111 = vld [vmem:[#allocation2 + $0x1d8] sm:$0xff]
    %v112 = vld [vmem:[#allocation2 + $0x1e0] sm:$0xff]
    %v113 = vld [vmem:[#allocation2 + $0x1e8] sm:$0xff]
    %v114 = vld [vmem:[#allocation2 + $0x1f0] sm:$0xff]
    %v115 = vld [vmem:[#allocation2 + $0x1f8] sm:$0xff]
    %v116 = vpack.c.bf16 %v53, %v52
    %v117 = vpack.c.bf16 %v55, %v54
    %v118 = vpack.c.bf16 %v57, %v56
    %v119 = vpack.c.bf16 %v59, %v58
    %v120 = vpack.c.bf16 %v61, %v60
    %v121 = vpack.c.bf16 %v63, %v62
    %v122 = vpack.c.bf16 %v65, %v64
    %v123 = vpack.c.bf16 %v67, %v66
    %v124 = vpack.c.bf16 %v69, %v68
    %v125 = vpack.c.bf16 %v71, %v70
    %v126 = vpack.c.bf16 %v73, %v72
    %v127 = vpack.c.bf16 %v75, %v74
    %v128 = vpack.c.bf16 %v77, %v76
    %v129 = vpack.c.bf16 %v79, %v78
    %v130 = vpack.c.bf16 %v81, %v80
    %v131 = vpack.c.bf16 %v83, %v82
    %v132 = vpack.c.bf16 %v85, %v84
    %v133 = vpack.c.bf16 %v87, %v86
    %v134 = vpack.c.bf16 %v89, %v88
    %v135 = vpack.c.bf16 %v91, %v90
    %v136 = vpack.c.bf16 %v93, %v92
    %v137 = vpack.c.bf16 %v95, %v94
    %v138 = vpack.c.bf16 %v97, %v96
    %v139 = vpack.c.bf16 %v99, %v98
    %v140 = vpack.c.bf16 %v101, %v100
    %v141 = vpack.c.bf16 %v103, %v102
    %v142 = vpack.c.bf16 %v105, %v104
    %v143 = vpack.c.bf16 %v107, %v106
    %v144 = vpack.c.bf16 %v109, %v108
    %v145 = vpack.c.bf16 %v111, %v110
    %v146 = vpack.c.bf16 %v113, %v112
    %v147 = vpack.c.bf16 %v115, %v114
    %v148 = vld [vmem:[%s2] sm:$0xf]
    %v149 = vld [vmem:[%s2 + $0x4] sm:$0xf]
    %v150 = vld [vmem:[%s2 + $0x8] sm:$0xf]
    %v151 = vld [vmem:[%s2 + $0xc] sm:$0xf]
    %v152 = vld [vmem:[%s2 + $0x10] sm:$0xf]
    %v153 = vld [vmem:[%s2 + $0x14] sm:$0xf]
    %v154 = vld [vmem:[%s2 + $0x18] sm:$0xf]
    %v155 = vld [vmem:[%s2 + $0x1c] sm:$0xf]
    %v156 = vld [vmem:[%s2 + $0x20] sm:$0xf]
    %v157 = vld [vmem:[%s2 + $0x24] sm:$0xf]
    %v158 = vld [vmem:[%s2 + $0x28] sm:$0xf]
    %v159 = vld [vmem:[%s2 + $0x2c] sm:$0xf]
    %v160 = vld [vmem:[%s2 + $0x30] sm:$0xf]
    %v161 = vld [vmem:[%s2 + $0x34] sm:$0xf]
    %v162 = vld [vmem:[%s2 + $0x38] sm:$0xf]
    %v163 = vld [vmem:[%s2 + $0x3c] sm:$0xf]
    %v164 = vld [vmem:[%s3] sm:$0x1]
    %v166 = vlaneseq
    %v167 = vshrl.u32 %v166, 7
    %v168 = vsub.s32 0, %v167
    %v169 = vrot.slane %v164, %v168
    %v187 = vunpack.c.l.b16 %v148
    %v188 = vunpack.c.l.b16 %v149
    %v189 = vunpack.c.l.b16 %v150
    %v190 = vunpack.c.l.b16 %v151
    %v191 = vunpack.c.l.b16 %v152
    %v192 = vunpack.c.l.b16 %v153
    %v193 = vunpack.c.l.b16 %v154
    %v194 = vunpack.c.l.b16 %v155
    %v195 = vunpack.c.l.b16 %v156
    %v196 = vunpack.c.l.b16 %v157
    %v197 = vunpack.c.l.b16 %v158
    %v198 = vunpack.c.l.b16 %v159
    %v199 = vunpack.c.l.b16 %v160
    %v200 = vunpack.c.l.b16 %v161
    %v201 = vunpack.c.l.b16 %v162
    %v202 = vunpack.c.l.b16 %v163
    %v203 = vpack.c.b16 %v188, %v187
    %v204 = vpack.c.b16 %v190, %v189
    %v205 = vpack.c.b16 %v192, %v191
    %v206 = vpack.c.b16 %v194, %v193
    %v207 = vpack.c.b16 %v196, %v195
    %v208 = vpack.c.b16 %v198, %v197
    %v209 = vpack.c.b16 %v200, %v199
    %v210 = vpack.c.b16 %v202, %v201
    %219 = vmatprep.subr.bf16.mxu0 0
    %220 = vmatpush1.bf16.msra.mxu0 %v203
    %221 = vmatprep.subr.bf16.mxu0 0
    %222 = vmatpush1.bf16.msra.mxu0 %v204
    %223 = vmatprep.subr.bf16.mxu0 0
    %224 = vmatpush1.bf16.msra.mxu0 %v205
    %225 = vmatprep.subr.bf16.mxu0 0
    %226 = vmatpush1.bf16.msra.mxu0 %v206
    %227 = vmatprep.subr.bf16.mxu0 0
    %228 = vmatpush1.bf16.msra.mxu0 %v207
    %229 = vmatprep.subr.bf16.mxu0 0
    %230 = vmatpush1.bf16.msra.mxu0 %v208
    %231 = vmatprep.subr.bf16.mxu0 0
    %232 = vmatpush1.bf16.msra.mxu0 %v209
    %233 = vmatprep.subr.bf16.mxu0 0
    %234 = vmatpush1.bf16.msra.mxu0 %v210
    %235 = vmatprep.subr.bf16.mxu0 0
    %236 = vmatpush1.bf16.msra.mxu0 0
    %237 = vmatprep.subr.bf16.mxu0 0
    %238 = vmatpush1.bf16.msra.mxu0 0
    %239 = vmatprep.subr.bf16.mxu0 0
    %240 = vmatpush1.bf16.msra.mxu0 0
    %241 = vmatprep.subr.bf16.mxu0 0
    %242 = vmatpush1.bf16.msra.mxu0 0
    %243 = vmatprep.subr.bf16.mxu0 0
    %244 = vmatpush1.bf16.msra.mxu0 0
    %245 = vmatprep.subr.bf16.mxu0 0
    %246 = vmatpush1.bf16.msra.mxu0 0
    %247 = vmatprep.subr.bf16.mxu0 0
    %248 = vmatpush1.bf16.msra.mxu0 0
    %249 = vmatprep.subr.bf16.mxu0 0
    %250 = vmatpush1.bf16.msra.mxu0 0
    %251 = vmatprep.mubr.bf16.mxu0 0
    %252 = vmatmul.mubr.bf16.gmra.mrb[0].mxu0 %v116
    %v253 = vpop.f32.mrb[0].mxu0
    %v254 = vadd.f32 %v169, %v253
    %v255 = vpop.f32.mrb[0].mxu0
    %v256 = vpop.f32.mrb[0].mxu0
    %v257 = vadd.f32 %v169, %v256
    %v258 = vpop.f32.mrb[0].mxu0
    %259 = vmatprep.mubr.bf16.mxu0 0
    %260 = vmatmul.mubr.bf16.gmra.mrb[0].mxu0 %v117
    %v261 = vpop.f32.mrb[0].mxu0
    %v262 = vadd.f32 %v169, %v261
    %v263 = vpop.f32.mrb[0].mxu0
    %v264 = vpop.f32.mrb[0].mxu0
    %v265 = vadd.f32 %v169, %v264
    %v266 = vpop.f32.mrb[0].mxu0
    %267 = vmatprep.mubr.bf16.mxu0 0
    %268 = vmatmul.mubr.bf16.gmra.mrb[0].mxu0 %v118
    %v269 = vpop.f32.mrb[0].mxu0
    %v270 = vadd.f32 %v169, %v269
    %v271 = vpop.f32.mrb[0].mxu0
    %v272 = vpop.f32.mrb[0].mxu0
    %v273 = vadd.f32 %v169, %v272
    %v274 = vpop.f32.mrb[0].mxu0
    %275 = vmatprep.mubr.bf16.mxu0 0
    %276 = vmatmul.mubr.bf16.gmra.mrb[0].mxu0 %v119
    %v277 = vpop.f32.mrb[0].mxu0
    %v278 = vadd.f32 %v169, %v277
    %v279 = vpop.f32.mrb[0].mxu0
    %v280 = vpop.f32.mrb[0].mxu0
    %v281 = vadd.f32 %v169, %v280
    %v282 = vpop.f32.mrb[0].mxu0
    %283 = vmatprep.mubr.bf16.mxu0 0
    %284 = vmatmul.mubr.bf16.gmra.mrb[0].mxu0 %v120
    %v285 = vpop.f32.mrb[0].mxu0
    %v286 = vadd.f32 %v169, %v285
    %v287 = vpop.f32.mrb[0].mxu0
    %v288 = vpop.f32.mrb[0].mxu0
    %v289 = vadd.f32 %v169, %v288
    %v290 = vpop.f32.mrb[0].mxu0
    %291 = vmatprep.mubr.bf16.mxu0 0
    %292 = vmatmul.mubr.bf16.gmra.mrb[0].mxu0 %v121
    %v293 = vpop.f32.mrb[0].mxu0
    %v294 = vadd.f32 %v169, %v293
    %v295 = vpop.f32.mrb[0].mxu0
    %v296 = vpop.f32.mrb[0].mxu0
    %v297 = vadd.f32 %v169, %v296
    %v298 = vpop.f32.mrb[0].mxu0
    %299 = vmatprep.mubr.bf16.mxu0 0
    %300 = vmatmul.mubr.bf16.gmra.mrb[0].mxu0 %v122
    %v301 = vpop.f32.mrb[0].mxu0
    %v302 = vadd.f32 %v169, %v301
    %v303 = vpop.f32.mrb[0].mxu0
    %v304 = vpop.f32.mrb[0].mxu0
    %v305 = vadd.f32 %v169, %v304
    %v306 = vpop.f32.mrb[0].mxu0
    %307 = vmatprep.mubr.bf16.mxu0 0
    %308 = vmatmul.mubr.bf16.gmra.mrb[0].mxu0 %v123
    %v309 = vpop.f32.mrb[0].mxu0
    %v310 = vadd.f32 %v169, %v309
    %v311 = vpop.f32.mrb[0].mxu0
    %v312 = vpop.f32.mrb[0].mxu0
    %v313 = vadd.f32 %v169, %v312
    %v314 = vpop.f32.mrb[0].mxu0
    %315 = vmatprep.mubr.bf16.mxu0 0
    %316 = vmatmul.mubr.bf16.gmra.mrb[0].mxu0 %v124
    %v317 = vpop.f32.mrb[0].mxu0
    %v318 = vadd.f32 %v169, %v317
    %v319 = vpop.f32.mrb[0].mxu0
    %v320 = vpop.f32.mrb[0].mxu0
    %v321 = vadd.f32 %v169, %v320
    %v322 = vpop.f32.mrb[0].mxu0
    %323 = vmatprep.mubr.bf16.mxu0 0
    %324 = vmatmul.mubr.bf16.gmra.mrb[0].mxu0 %v125
    %v325 = vpop.f32.mrb[0].mxu0
    %v326 = vadd.f32 %v169, %v325
    %v327 = vpop.f32.mrb[0].mxu0
    %v328 = vpop.f32.mrb[0].mxu0
    %v329 = vadd.f32 %v169, %v328
    %v330 = vpop.f32.mrb[0].mxu0
    %331 = vmatprep.mubr.bf16.mxu0 0
    %332 = vmatmul.mubr.bf16.gmra.mrb[0].mxu0 %v126
    %v333 = vpop.f32.mrb[0].mxu0
    %v334 = vadd.f32 %v169, %v333
    %v335 = vpop.f32.mrb[0].mxu0
    %v336 = vpop.f32.mrb[0].mxu0
    %v337 = vadd.f32 %v169, %v336
    %v338 = vpop.f32.mrb[0].mxu0
    %339 = vmatprep.mubr.bf16.mxu0 0
    %340 = vmatmul.mubr.bf16.gmra.mrb[0].mxu0 %v127
    %v341 = vpop.f32.mrb[0].mxu0
    %v342 = vadd.f32 %v169, %v341
    %v343 = vpop.f32.mrb[0].mxu0
    %v344 = vpop.f32.mrb[0].mxu0
    %v345 = vadd.f32 %v169, %v344
    %v346 = vpop.f32.mrb[0].mxu0
    %347 = vmatprep.mubr.bf16.mxu0 0
    %348 = vmatmul.mubr.bf16.gmra.mrb[0].mxu0 %v128
    %v349 = vpop.f32.mrb[0].mxu0
    %v350 = vadd.f32 %v169, %v349
    %v351 = vpop.f32.mrb[0].mxu0
    %v352 = vpop.f32.mrb[0].mxu0
    %v353 = vadd.f32 %v169, %v352
    %v354 = vpop.f32.mrb[0].mxu0
    %355 = vmatprep.mubr.bf16.mxu0 0
    %356 = vmatmul.mubr.bf16.gmra.mrb[0].mxu0 %v129
    %v357 = vpop.f32.mrb[0].mxu0
    %v358 = vadd.f32 %v169, %v357
    %v359 = vpop.f32.mrb[0].mxu0
    %v360 = vpop.f32.mrb[0].mxu0
    %v361 = vadd.f32 %v169, %v360
    %v362 = vpop.f32.mrb[0].mxu0
    %363 = vmatprep.mubr.bf16.mxu0 0
    %364 = vmatmul.mubr.bf16.gmra.mrb[0].mxu0 %v130
    %v365 = vpop.f32.mrb[0].mxu0
    %v366 = vadd.f32 %v169, %v365
    %v367 = vpop.f32.mrb[0].mxu0
    %v368 = vpop.f32.mrb[0].mxu0
    %v369 = vadd.f32 %v169, %v368
    %v370 = vpop.f32.mrb[0].mxu0
    %371 = vmatprep.mubr.bf16.mxu0 0
    %372 = vmatmul.mubr.bf16.gmra.mrb[0].mxu0 %v131
    %v373 = vpop.f32.mrb[0].mxu0
    %v374 = vadd.f32 %v169, %v373
    %v375 = vpop.f32.mrb[0].mxu0
    %v376 = vpop.f32.mrb[0].mxu0
    %v377 = vadd.f32 %v169, %v376
    %v378 = vpop.f32.mrb[0].mxu0
    %379 = vmatprep.mubr.bf16.mxu0 0
    %380 = vmatmul.mubr.bf16.gmra.mrb[0].mxu0 %v132
    %v381 = vpop.f32.mrb[0].mxu0
    %v382 = vadd.f32 %v169, %v381
    %v383 = vpop.f32.mrb[0].mxu0
    %v384 = vpop.f32.mrb[0].mxu0
    %v385 = vadd.f32 %v169, %v384
    %v386 = vpop.f32.mrb[0].mxu0
    %387 = vmatprep.mubr.bf16.mxu0 0
    %388 = vmatmul.mubr.bf16.gmra.mrb[0].mxu0 %v133
    %v389 = vpop.f32.mrb[0].mxu0
    %v390 = vadd.f32 %v169, %v389
    %v391 = vpop.f32.mrb[0].mxu0
    %v392 = vpop.f32.mrb[0].mxu0
    %v393 = vadd.f32 %v169, %v392
    %v394 = vpop.f32.mrb[0].mxu0
    %395 = vmatprep.mubr.bf16.mxu0 0
    %396 = vmatmul.mubr.bf16.gmra.mrb[0].mxu0 %v134
    %v397 = vpop.f32.mrb[0].mxu0
    %v398 = vadd.f32 %v169, %v397
    %v399 = vpop.f32.mrb[0].mxu0
    %v400 = vpop.f32.mrb[0].mxu0
    %v401 = vadd.f32 %v169, %v400
    %v402 = vpop.f32.mrb[0].mxu0
    %403 = vmatprep.mubr.bf16.mxu0 0
    %404 = vmatmul.mubr.bf16.gmra.mrb[0].mxu0 %v135
    %v405 = vpop.f32.mrb[0].mxu0
    %v406 = vadd.f32 %v169, %v405
    %v407 = vpop.f32.mrb[0].mxu0
    %v408 = vpop.f32.mrb[0].mxu0
    %v409 = vadd.f32 %v169, %v408
    %v410 = vpop.f32.mrb[0].mxu0
    %411 = vmatprep.mubr.bf16.mxu0 0
    %412 = vmatmul.mubr.bf16.gmra.mrb[0].mxu0 %v136
    %v413 = vpop.f32.mrb[0].mxu0
    %v414 = vadd.f32 %v169, %v413
    %v415 = vpop.f32.mrb[0].mxu0
    %v416 = vpop.f32.mrb[0].mxu0
    %v417 = vadd.f32 %v169, %v416
    %v418 = vpop.f32.mrb[0].mxu0
    %419 = vmatprep.mubr.bf16.mxu0 0
    %420 = vmatmul.mubr.bf16.gmra.mrb[0].mxu0 %v137
    %v421 = vpop.f32.mrb[0].mxu0
    %v422 = vadd.f32 %v169, %v421
    %v423 = vpop.f32.mrb[0].mxu0
    %v424 = vpop.f32.mrb[0].mxu0
    %v425 = vadd.f32 %v169, %v424
    %v426 = vpop.f32.mrb[0].mxu0
    %427 = vmatprep.mubr.bf16.mxu0 0
    %428 = vmatmul.mubr.bf16.gmra.mrb[0].mxu0 %v138
    %v429 = vpop.f32.mrb[0].mxu0
    %v430 = vadd.f32 %v169, %v429
    %v431 = vpop.f32.mrb[0].mxu0
    %v432 = vpop.f32.mrb[0].mxu0
    %v433 = vadd.f32 %v169, %v432
    %v434 = vpop.f32.mrb[0].mxu0
    %435 = vmatprep.mubr.bf16.mxu0 0
    %436 = vmatmul.mubr.bf16.gmra.mrb[0].mxu0 %v139
    %v437 = vpop.f32.mrb[0].mxu0
    %v438 = vadd.f32 %v169, %v437
    %v439 = vpop.f32.mrb[0].mxu0
    %v440 = vpop.f32.mrb[0].mxu0
    %v441 = vadd.f32 %v169, %v440
    %v442 = vpop.f32.mrb[0].mxu0
    %443 = vmatprep.mubr.bf16.mxu0 0
    %444 = vmatmul.mubr.bf16.gmra.mrb[0].mxu0 %v140
    %v445 = vpop.f32.mrb[0].mxu0
    %v446 = vadd.f32 %v169, %v445
    %v447 = vpop.f32.mrb[0].mxu0
    %v448 = vpop.f32.mrb[0].mxu0
    %v449 = vadd.f32 %v169, %v448
    %v450 = vpop.f32.mrb[0].mxu0
    %451 = vmatprep.mubr.bf16.mxu0 0
    %452 = vmatmul.mubr.bf16.gmra.mrb[0].mxu0 %v141
    %v453 = vpop.f32.mrb[0].mxu0
    %v454 = vadd.f32 %v169, %v453
    %v455 = vpop.f32.mrb[0].mxu0
    %v456 = vpop.f32.mrb[0].mxu0
    %v457 = vadd.f32 %v169, %v456
    %v458 = vpop.f32.mrb[0].mxu0
    %459 = vmatprep.mubr.bf16.mxu0 0
    %460 = vmatmul.mubr.bf16.gmra.mrb[0].mxu0 %v142
    %v461 = vpop.f32.mrb[0].mxu0
    %v462 = vadd.f32 %v169, %v461
    %v463 = vpop.f32.mrb[0].mxu0
    %v464 = vpop.f32.mrb[0].mxu0
    %v465 = vadd.f32 %v169, %v464
    %v466 = vpop.f32.mrb[0].mxu0
    %467 = vmatprep.mubr.bf16.mxu0 0
    %468 = vmatmul.mubr.bf16.gmra.mrb[0].mxu0 %v143
    %v469 = vpop.f32.mrb[0].mxu0
    %v470 = vadd.f32 %v169, %v469
    %v471 = vpop.f32.mrb[0].mxu0
    %v472 = vpop.f32.mrb[0].mxu0
    %v473 = vadd.f32 %v169, %v472
    %v474 = vpop.f32.mrb[0].mxu0
    %475 = vmatprep.mubr.bf16.mxu0 0
    %476 = vmatmul.mubr.bf16.gmra.mrb[0].mxu0 %v144
    %v477 = vpop.f32.mrb[0].mxu0
    %v478 = vadd.f32 %v169, %v477
    %v479 = vpop.f32.mrb[0].mxu0
    %v480 = vpop.f32.mrb[0].mxu0
    %v481 = vadd.f32 %v169, %v480
    %v482 = vpop.f32.mrb[0].mxu0
    %483 = vmatprep.mubr.bf16.mxu0 0
    %484 = vmatmul.mubr.bf16.gmra.mrb[0].mxu0 %v145
    %v485 = vpop.f32.mrb[0].mxu0
    %v486 = vadd.f32 %v169, %v485
    %v487 = vpop.f32.mrb[0].mxu0
    %v488 = vpop.f32.mrb[0].mxu0
    %v489 = vadd.f32 %v169, %v488
    %v490 = vpop.f32.mrb[0].mxu0
    %491 = vmatprep.mubr.bf16.mxu0 0
    %492 = vmatmul.mubr.bf16.gmra.mrb[0].mxu0 %v146
    %v493 = vpop.f32.mrb[0].mxu0
    %v494 = vadd.f32 %v169, %v493
    %v495 = vpop.f32.mrb[0].mxu0
    %v496 = vpop.f32.mrb[0].mxu0
    %v497 = vadd.f32 %v169, %v496
    %v498 = vpop.f32.mrb[0].mxu0
    %499 = vmatprep.mubr.bf16.mxu0 0
    %500 = vmatmul.mubr.bf16.gmra.mrb[0].mxu0 %v147
    %v501 = vpop.f32.mrb[0].mxu0
    %v502 = vadd.f32 %v169, %v501
    %v503 = vpop.f32.mrb[0].mxu0
    %v504 = vpop.f32.mrb[0].mxu0
    %v505 = vadd.f32 %v169, %v504
    %v506 = vpop.f32.mrb[0].mxu0
    %507 = vdwg.mxu0
    %v508 = vpack.c.bf16 %v257, %v254
    %v509 = vpack.c.bf16 %v265, %v262
    %v510 = vpack.c.bf16 %v273, %v270
    %v511 = vpack.c.bf16 %v281, %v278
    %v512 = vpack.c.bf16 %v289, %v286
    %v513 = vpack.c.bf16 %v297, %v294
    %v514 = vpack.c.bf16 %v305, %v302
    %v515 = vpack.c.bf16 %v313, %v310
    %v516 = vpack.c.bf16 %v321, %v318
    %v517 = vpack.c.bf16 %v329, %v326
    %v518 = vpack.c.bf16 %v337, %v334
    %v519 = vpack.c.bf16 %v345, %v342
    %v520 = vpack.c.bf16 %v353, %v350
    %v521 = vpack.c.bf16 %v361, %v358
    %v522 = vpack.c.bf16 %v369, %v366
    %v523 = vpack.c.bf16 %v377, %v374
    %v524 = vpack.c.bf16 %v385, %v382
    %v525 = vpack.c.bf16 %v393, %v390
    %v526 = vpack.c.bf16 %v401, %v398
    %v527 = vpack.c.bf16 %v409, %v406
    %v528 = vpack.c.bf16 %v417, %v414
    %v529 = vpack.c.bf16 %v425, %v422
    %v530 = vpack.c.bf16 %v433, %v430
    %v531 = vpack.c.bf16 %v441, %v438
    %v532 = vpack.c.bf16 %v449, %v446
    %v533 = vpack.c.bf16 %v457, %v454
    %v534 = vpack.c.bf16 %v465, %v462
    %v535 = vpack.c.bf16 %v473, %v470
    %v536 = vpack.c.bf16 %v481, %v478
    %v537 = vpack.c.bf16 %v489, %v486
    %v538 = vpack.c.bf16 %v497, %v494
    %v539 = vpack.c.bf16 %v505, %v502
    %v540 = vtanh.bf16.pop %v508
    %v541 = vtanh.bf16.pop %v509
    %v542 = vtanh.bf16.pop %v510
    %v543 = vtanh.bf16.pop %v511
    %v544 = vtanh.bf16.pop %v512
    %v545 = vtanh.bf16.pop %v513
    %v546 = vtanh.bf16.pop %v514
    %v547 = vtanh.bf16.pop %v515
    %v548 = vtanh.bf16.pop %v516
    %v549 = vtanh.bf16.pop %v517
    %v550 = vtanh.bf16.pop %v518
    %v551 = vtanh.bf16.pop %v519
    %v552 = vtanh.bf16.pop %v520
    %v553 = vtanh.bf16.pop %v521
    %v554 = vtanh.bf16.pop %v522
    %v555 = vtanh.bf16.pop %v523
    %v556 = vtanh.bf16.pop %v524
    %v557 = vtanh.bf16.pop %v525
    %v558 = vtanh.bf16.pop %v526
    %v559 = vtanh.bf16.pop %v527
    %v560 = vtanh.bf16.pop %v528
    %v561 = vtanh.bf16.pop %v529
    %v562 = vtanh.bf16.pop %v530
    %v563 = vtanh.bf16.pop %v531
    %v564 = vtanh.bf16.pop %v532
    %v565 = vtanh.bf16.pop %v533
    %v566 = vtanh.bf16.pop %v534
    %v567 = vtanh.bf16.pop %v535
    %v568 = vtanh.bf16.pop %v536
    %v569 = vtanh.bf16.pop %v537
    %v570 = vtanh.bf16.pop %v538
    %v571 = vtanh.bf16.pop %v539
    %v572 = vunpack.c.l.bf16 %v540
    %v573 = vunpack.c.h.bf16 %v540
    %v574 = vunpack.c.l.bf16 %v541
    %v575 = vunpack.c.h.bf16 %v541
    %v576 = vunpack.c.l.bf16 %v542
    %v577 = vunpack.c.h.bf16 %v542
    %v578 = vunpack.c.l.bf16 %v543
    %v579 = vunpack.c.h.bf16 %v543
    %v580 = vunpack.c.l.bf16 %v544
    %v581 = vunpack.c.h.bf16 %v544
    %v582 = vunpack.c.l.bf16 %v545
    %v583 = vunpack.c.h.bf16 %v545
    %v584 = vunpack.c.l.bf16 %v546
    %v585 = vunpack.c.h.bf16 %v546
    %v586 = vunpack.c.l.bf16 %v547
    %v587 = vunpack.c.h.bf16 %v547
    %v588 = vunpack.c.l.bf16 %v548
    %v589 = vunpack.c.h.bf16 %v548
    %v590 = vunpack.c.l.bf16 %v549
    %v591 = vunpack.c.h.bf16 %v549
    %v592 = vunpack.c.l.bf16 %v550
    %v593 = vunpack.c.h.bf16 %v550
    %v594 = vunpack.c.l.bf16 %v551
    %v595 = vunpack.c.h.bf16 %v551
    %v596 = vunpack.c.l.bf16 %v552
    %v597 = vunpack.c.h.bf16 %v552
    %v598 = vunpack.c.l.bf16 %v553
    %v599 = vunpack.c.h.bf16 %v553
    %v600 = vunpack.c.l.bf16 %v554
    %v601 = vunpack.c.h.bf16 %v554
    %v602 = vunpack.c.l.bf16 %v555
    %v603 = vunpack.c.h.bf16 %v555
    %v604 = vunpack.c.l.bf16 %v556
    %v605 = vunpack.c.h.bf16 %v556
    %v606 = vunpack.c.l.bf16 %v557
    %v607 = vunpack.c.h.bf16 %v557
    %v608 = vunpack.c.l.bf16 %v558
    %v609 = vunpack.c.h.bf16 %v558
    %v610 = vunpack.c.l.bf16 %v559
    %v611 = vunpack.c.h.bf16 %v559
    %v612 = vunpack.c.l.bf16 %v560
    %v613 = vunpack.c.h.bf16 %v560
    %v614 = vunpack.c.l.bf16 %v561
    %v615 = vunpack.c.h.bf16 %v561
    %v616 = vunpack.c.l.bf16 %v562
    %v617 = vunpack.c.h.bf16 %v562
    %v618 = vunpack.c.l.bf16 %v563
    %v619 = vunpack.c.h.bf16 %v563
    %v620 = vunpack.c.l.bf16 %v564
    %v621 = vunpack.c.h.bf16 %v564
    %v622 = vunpack.c.l.bf16 %v565
    %v623 = vunpack.c.h.bf16 %v565
    %v624 = vunpack.c.l.bf16 %v566
    %v625 = vunpack.c.h.bf16 %v566
    %v626 = vunpack.c.l.bf16 %v567
    %v627 = vunpack.c.h.bf16 %v567
    %v628 = vunpack.c.l.bf16 %v568
    %v629 = vunpack.c.h.bf16 %v568
    %v630 = vunpack.c.l.bf16 %v569
    %v631 = vunpack.c.h.bf16 %v569
    %v632 = vunpack.c.l.bf16 %v570
    %v633 = vunpack.c.h.bf16 %v570
    %v634 = vunpack.c.l.bf16 %v571
    %v635 = vunpack.c.h.bf16 %v571
    %v636 = vld [vmem:[%s4] sm:$0x1]
    %v638 = vlaneseq
    %v639 = vshrl.u32 %v638, 7
    %v640 = vsub.s32 0, %v639
    %v641 = vrot.slane %v636, %v640
    %v643 = vmul.f32 %v572, %v641
    %v644 = vmul.f32 %v573, %v641
    %v645 = vmul.f32 %v574, %v641
    %v646 = vmul.f32 %v575, %v641
    %v647 = vmul.f32 %v576, %v641
    %v648 = vmul.f32 %v577, %v641
    %v649 = vmul.f32 %v578, %v641
    %v650 = vmul.f32 %v579, %v641
    %v651 = vmul.f32 %v580, %v641
    %v652 = vmul.f32 %v581, %v641
    %v653 = vmul.f32 %v582, %v641
    %v654 = vmul.f32 %v583, %v641
    %v655 = vmul.f32 %v584, %v641
    %v656 = vmul.f32 %v585, %v641
    %v657 = vmul.f32 %v586, %v641
    %v658 = vmul.f32 %v587, %v641
    %v659 = vmul.f32 %v588, %v641
    %v660 = vmul.f32 %v589, %v641
    %v661 = vmul.f32 %v590, %v641
    %v662 = vmul.f32 %v591, %v641
    %v663 = vmul.f32 %v592, %v641
    %v664 = vmul.f32 %v593, %v641
    %v665 = vmul.f32 %v594, %v641
    %v666 = vmul.f32 %v595, %v641
    %v667 = vmul.f32 %v596, %v641
    %v668 = vmul.f32 %v597, %v641
    %v669 = vmul.f32 %v598, %v641
    %v670 = vmul.f32 %v599, %v641
    %v671 = vmul.f32 %v600, %v641
    %v672 = vmul.f32 %v601, %v641
    %v673 = vmul.f32 %v602, %v641
    %v674 = vmul.f32 %v603, %v641
    %v675 = vmul.f32 %v604, %v641
    %v676 = vmul.f32 %v605, %v641
    %v677 = vmul.f32 %v606, %v641
    %v678 = vmul.f32 %v607, %v641
    %v679 = vmul.f32 %v608, %v641
    %v680 = vmul.f32 %v609, %v641
    %v681 = vmul.f32 %v610, %v641
    %v682 = vmul.f32 %v611, %v641
    %v683 = vmul.f32 %v612, %v641
    %v684 = vmul.f32 %v613, %v641
    %v685 = vmul.f32 %v614, %v641
    %v686 = vmul.f32 %v615, %v641
    %v687 = vmul.f32 %v616, %v641
    %v688 = vmul.f32 %v617, %v641
    %v689 = vmul.f32 %v618, %v641
    %v690 = vmul.f32 %v619, %v641
    %v691 = vmul.f32 %v620, %v641
    %v692 = vmul.f32 %v621, %v641
    %v693 = vmul.f32 %v622, %v641
    %v694 = vmul.f32 %v623, %v641
    %v695 = vmul.f32 %v624, %v641
    %v696 = vmul.f32 %v625, %v641
    %v697 = vmul.f32 %v626, %v641
    %v698 = vmul.f32 %v627, %v641
    %v699 = vmul.f32 %v628, %v641
    %v700 = vmul.f32 %v629, %v641
    %v701 = vmul.f32 %v630, %v641
    %v702 = vmul.f32 %v631, %v641
    %v703 = vmul.f32 %v632, %v641
    %v704 = vmul.f32 %v633, %v641
    %v705 = vmul.f32 %v634, %v641
    %v706 = vmul.f32 %v635, %v641
    %v707 = vadd.f32 %v643, %v644
    %v708 = vadd.f32 %v707, %v645
    %v709 = vadd.f32 %v708, %v646
    %v710 = vadd.f32 %v709, %v647
    %v711 = vadd.f32 %v710, %v648
    %v712 = vadd.f32 %v711, %v649
    %v713 = vadd.f32 %v712, %v650
    %v714 = vadd.f32 %v713, %v651
    %v715 = vadd.f32 %v714, %v652
    %v716 = vadd.f32 %v715, %v653
    %v717 = vadd.f32 %v716, %v654
    %v718 = vadd.f32 %v717, %v655
    %v719 = vadd.f32 %v718, %v656
    %v720 = vadd.f32 %v719, %v657
    %v721 = vadd.f32 %v720, %v658
    %v722 = vadd.f32 %v721, %v659
    %v723 = vadd.f32 %v722, %v660
    %v724 = vadd.f32 %v723, %v661
    %v725 = vadd.f32 %v724, %v662
    %v726 = vadd.f32 %v725, %v663
    %v727 = vadd.f32 %v726, %v664
    %v728 = vadd.f32 %v727, %v665
    %v729 = vadd.f32 %v728, %v666
    %v730 = vadd.f32 %v729, %v667
    %v731 = vadd.f32 %v730, %v668
    %v732 = vadd.f32 %v731, %v669
    %v733 = vadd.f32 %v732, %v670
    %v734 = vadd.f32 %v733, %v671
    %v735 = vadd.f32 %v734, %v672
    %v736 = vadd.f32 %v735, %v673
    %v737 = vadd.f32 %v736, %v674
    %v738 = vadd.f32 %v737, %v675
    %v739 = vadd.f32 %v738, %v676
    %v740 = vadd.f32 %v739, %v677
    %v741 = vadd.f32 %v740, %v678
    %v742 = vadd.f32 %v741, %v679
    %v743 = vadd.f32 %v742, %v680
    %v744 = vadd.f32 %v743, %v681
    %v745 = vadd.f32 %v744, %v682
    %v746 = vadd.f32 %v745, %v683
    %v747 = vadd.f32 %v746, %v684
    %v748 = vadd.f32 %v747, %v685
    %v749 = vadd.f32 %v748, %v686
    %v750 = vadd.f32 %v749, %v687
    %v751 = vadd.f32 %v750, %v688
    %v752 = vadd.f32 %v751, %v689
    %v753 = vadd.f32 %v752, %v690
    %v754 = vadd.f32 %v753, %v691
    %v755 = vadd.f32 %v754, %v692
    %v756 = vadd.f32 %v755, %v693
    %v757 = vadd.f32 %v756, %v694
    %v758 = vadd.f32 %v757, %v695
    %v759 = vadd.f32 %v758, %v696
    %v760 = vadd.f32 %v759, %v697
    %v761 = vadd.f32 %v760, %v698
    %v762 = vadd.f32 %v761, %v699
    %v763 = vadd.f32 %v762, %v700
    %v764 = vadd.f32 %v763, %v701
    %v765 = vadd.f32 %v764, %v702
    %v766 = vadd.f32 %v765, %v703
    %v767 = vadd.f32 %v766, %v704
    %v768 = vadd.f32 %v767, %v705
    %v769 = vadd.f32 %v768, %v706
    %770 = vadd.xlane.f32.xlu0 %v769
    %v771 = vpop.xlane.xlu0 %770
    %v772 = vrot.slane %v771, 4
    %v773 = vadd.f32 %v771, %v772
    %v774 = vrot.slane %v773, 2
    %v775 = vadd.f32 %v773, %v774
    %v776 = vrot.slane %v775, 1
    %v777 = vadd.f32 %v775, %v776
    %s778 = vtos %v777
    %s779 = smul.f32 %s778, 0.001953125
    %s780 = scalar_lea.vmem [#allocation2], 512
    %v781 = vld [vmem:[%s780] sm:$0xff]
    %v782 = vld [vmem:[%s780 + $0x8] sm:$0xff]
    %v783 = vld [vmem:[%s780 + $0x10] sm:$0xff]
    %v784 = vld [vmem:[%s780 + $0x18] sm:$0xff]
    %v785 = vld [vmem:[%s780 + $0x20] sm:$0xff]
    %v786 = vld [vmem:[%s780 + $0x28] sm:$0xff]
    %v787 = vld [vmem:[%s780 + $0x30] sm:$0xff]
    %v788 = vld [vmem:[%s780 + $0x38] sm:$0xff]
    %v789 = vld [vmem:[%s780 + $0x40] sm:$0xff]
    %v790 = vld [vmem:[%s780 + $0x48] sm:$0xff]
    %v791 = vld [vmem:[%s780 + $0x50] sm:$0xff]
    %v792 = vld [vmem:[%s780 + $0x58] sm:$0xff]
    %v793 = vld [vmem:[%s780 + $0x60] sm:$0xff]
    %v794 = vld [vmem:[%s780 + $0x68] sm:$0xff]
    %v795 = vld [vmem:[%s780 + $0x70] sm:$0xff]
    %v796 = vld [vmem:[%s780 + $0x78] sm:$0xff]
    %v797 = vld [vmem:[%s780 + $0x80] sm:$0xff]
    %v798 = vld [vmem:[%s780 + $0x88] sm:$0xff]
    %v799 = vld [vmem:[%s780 + $0x90] sm:$0xff]
    %v800 = vld [vmem:[%s780 + $0x98] sm:$0xff]
    %v801 = vld [vmem:[%s780 + $0xa0] sm:$0xff]
    %v802 = vld [vmem:[%s780 + $0xa8] sm:$0xff]
    %v803 = vld [vmem:[%s780 + $0xb0] sm:$0xff]
    %v804 = vld [vmem:[%s780 + $0xb8] sm:$0xff]
    %v805 = vld [vmem:[%s780 + $0xc0] sm:$0xff]
    %v806 = vld [vmem:[%s780 + $0xc8] sm:$0xff]
    %v807 = vld [vmem:[%s780 + $0xd0] sm:$0xff]
    %v808 = vld [vmem:[%s780 + $0xd8] sm:$0xff]
    %v809 = vld [vmem:[%s780 + $0xe0] sm:$0xff]
    %v810 = vld [vmem:[%s780 + $0xe8] sm:$0xff]
    %v811 = vld [vmem:[%s780 + $0xf0] sm:$0xff]
    %v812 = vld [vmem:[%s780 + $0xf8] sm:$0xff]
    %v813 = vld [vmem:[%s780 + $0x100] sm:$0xff]
    %v814 = vld [vmem:[%s780 + $0x108] sm:$0xff]
    %v815 = vld [vmem:[%s780 + $0x110] sm:$0xff]
    %v816 = vld [vmem:[%s780 + $0x118] sm:$0xff]
    %v817 = vld [vmem:[%s780 + $0x120] sm:$0xff]
    %v818 = vld [vmem:[%s780 + $0x128] sm:$0xff]
    %v819 = vld [vmem:[%s780 + $0x130] sm:$0xff]
    %v820 = vld [vmem:[%s780 + $0x138] sm:$0xff]
    %v821 = vld [vmem:[%s780 + $0x140] sm:$0xff]
    %v822 = vld [vmem:[%s780 + $0x148] sm:$0xff]
    %v823 = vld [vmem:[%s780 + $0x150] sm:$0xff]
    %v824 = vld [vmem:[%s780 + $0x158] sm:$0xff]
    %v825 = vld [vmem:[%s780 + $0x160] sm:$0xff]
    %v826 = vld [vmem:[%s780 + $0x168] sm:$0xff]
    %v827 = vld [vmem:[%s780 + $0x170] sm:$0xff]
    %v828 = vld [vmem:[%s780 + $0x178] sm:$0xff]
    %v829 = vld [vmem:[%s780 + $0x180] sm:$0xff]
    %v830 = vld [vmem:[%s780 + $0x188] sm:$0xff]
    %v831 = vld [vmem:[%s780 + $0x190] sm:$0xff]
    %v832 = vld [vmem:[%s780 + $0x198] sm:$0xff]
    %v833 = vld [vmem:[%s780 + $0x1a0] sm:$0xff]
    %v834 = vld [vmem:[%s780 + $0x1a8] sm:$0xff]
    %v835 = vld [vmem:[%s780 + $0x1b0] sm:$0xff]
    %v836 = vld [vmem:[%s780 + $0x1b8] sm:$0xff]
    %v837 = vld [vmem:[%s780 + $0x1c0] sm:$0xff]
    %v838 = vld [vmem:[%s780 + $0x1c8] sm:$0xff]
    %v839 = vld [vmem:[%s780 + $0x1d0] sm:$0xff]
    %v840 = vld [vmem:[%s780 + $0x1d8] sm:$0xff]
    %v841 = vld [vmem:[%s780 + $0x1e0] sm:$0xff]
    %v842 = vld [vmem:[%s780 + $0x1e8] sm:$0xff]
    %v843 = vld [vmem:[%s780 + $0x1f0] sm:$0xff]
    %v844 = vld [vmem:[%s780 + $0x1f8] sm:$0xff]
    %v845 = vpack.c.bf16 %v782, %v781
    %v846 = vpack.c.bf16 %v784, %v783
    %v847 = vpack.c.bf16 %v786, %v785
    %v848 = vpack.c.bf16 %v788, %v787
    %v849 = vpack.c.bf16 %v790, %v789
    %v850 = vpack.c.bf16 %v792, %v791
    %v851 = vpack.c.bf16 %v794, %v793
    %v852 = vpack.c.bf16 %v796, %v795
    %v853 = vpack.c.bf16 %v798, %v797
    %v854 = vpack.c.bf16 %v800, %v799
    %v855 = vpack.c.bf16 %v802, %v801
    %v856 = vpack.c.bf16 %v804, %v803
    %v857 = vpack.c.bf16 %v806, %v805
    %v858 = vpack.c.bf16 %v808, %v807
    %v859 = vpack.c.bf16 %v810, %v809
    %v860 = vpack.c.bf16 %v812, %v811
    %v861 = vpack.c.bf16 %v814, %v813
    %v862 = vpack.c.bf16 %v816, %v815
    %v863 = vpack.c.bf16 %v818, %v817
    %v864 = vpack.c.bf16 %v820, %v819
    %v865 = vpack.c.bf16 %v822, %v821
    %v866 = vpack.c.bf16 %v824, %v823
    %v867 = vpack.c.bf16 %v826, %v825
    %v868 = vpack.c.bf16 %v828, %v827
    %v869 = vpack.c.bf16 %v830, %v829
    %v870 = vpack.c.bf16 %v832, %v831
    %v871 = vpack.c.bf16 %v834, %v833
    %v872 = vpack.c.bf16 %v836, %v835
    %v873 = vpack.c.bf16 %v838, %v837
    %v874 = vpack.c.bf16 %v840, %v839
    %v875 = vpack.c.bf16 %v842, %v841
    %v876 = vpack.c.bf16 %v844, %v843
    %877 = vmatprep.subr.bf16.mxu0 0
    %878 = vmatpush1.bf16.msra.mxu0 %v203
    %879 = vmatprep.subr.bf16.mxu0 0
    %880 = vmatpush1.bf16.msra.mxu0 %v204
    %881 = vmatprep.subr.bf16.mxu0 0
    %882 = vmatpush1.bf16.msra.mxu0 %v205
    %883 = vmatprep.subr.bf16.mxu0 0
    %884 = vmatpush1.bf16.msra.mxu0 %v206
    %885 = vmatprep.subr.bf16.mxu0 0
    %886 = vmatpush1.bf16.msra.mxu0 %v207
    %887 = vmatprep.subr.bf16.mxu0 0
    %888 = vmatpush1.bf16.msra.mxu0 %v208
    %889 = vmatprep.subr.bf16.mxu0 0
    %890 = vmatpush1.bf16.msra.mxu0 %v209
    %891 = vmatprep.subr.bf16.mxu0 0
    %892 = vmatpush1.bf16.msra.mxu0 %v210
    %893 = vmatprep.subr.bf16.mxu0 0
    %894 = vmatpush1.bf16.msra.mxu0 0
    %895 = vmatprep.subr.bf16.mxu0 0
    %896 = vmatpush1.bf16.msra.mxu0 0
    %897 = vmatprep.subr.bf16.mxu0 0
    %898 = vmatpush1.bf16.msra.mxu0 0
    %899 = vmatprep.subr.bf16.mxu0 0
    %900 = vmatpush1.bf16.msra.mxu0 0
    %901 = vmatprep.subr.bf16.mxu0 0
    %902 = vmatpush1.bf16.msra.mxu0 0
    %903 = vmatprep.subr.bf16.mxu0 0
    %904 = vmatpush1.bf16.msra.mxu0 0
    %905 = vmatprep.subr.bf16.mxu0 0
    %906 = vmatpush1.bf16.msra.mxu0 0
    %907 = vmatprep.subr.bf16.mxu0 0
    %908 = vmatpush1.bf16.msra.mxu0 0
    %909 = vmatprep.mubr.bf16.mxu0 0
    %910 = vmatmul.mubr.bf16.gmra.mrb[0].mxu0 %v845
    %v911 = vpop.f32.mrb[0].mxu0
    %v912 = vadd.f32 %v169, %v911
    %v913 = vpop.f32.mrb[0].mxu0
    %v914 = vpop.f32.mrb[0].mxu0
    %v915 = vadd.f32 %v169, %v914
    %v916 = vpop.f32.mrb[0].mxu0
    %917 = vmatprep.mubr.bf16.mxu0 0
    %918 = vmatmul.mubr.bf16.gmra.mrb[0].mxu0 %v846
    %v919 = vpop.f32.mrb[0].mxu0
    %v920 = vadd.f32 %v169, %v919
    %v921 = vpop.f32.mrb[0].mxu0
    %v922 = vpop.f32.mrb[0].mxu0
    %v923 = vadd.f32 %v169, %v922
    %v924 = vpop.f32.mrb[0].mxu0
    %925 = vmatprep.mubr.bf16.mxu0 0
    %926 = vmatmul.mubr.bf16.gmra.mrb[0].mxu0 %v847
    %v927 = vpop.f32.mrb[0].mxu0
    %v928 = vadd.f32 %v169, %v927
    %v929 = vpop.f32.mrb[0].mxu0
    %v930 = vpop.f32.mrb[0].mxu0
    %v931 = vadd.f32 %v169, %v930
    %v932 = vpop.f32.mrb[0].mxu0
    %933 = vmatprep.mubr.bf16.mxu0 0
    %934 = vmatmul.mubr.bf16.gmra.mrb[0].mxu0 %v848
    %v935 = vpop.f32.mrb[0].mxu0
    %v936 = vadd.f32 %v169, %v935
    %v937 = vpop.f32.mrb[0].mxu0
    %v938 = vpop.f32.mrb[0].mxu0
    %v939 = vadd.f32 %v169, %v938
    %v940 = vpop.f32.mrb[0].mxu0
    %941 = vmatprep.mubr.bf16.mxu0 0
    %942 = vmatmul.mubr.bf16.gmra.mrb[0].mxu0 %v849
    %v943 = vpop.f32.mrb[0].mxu0
    %v944 = vadd.f32 %v169, %v943
    %v945 = vpop.f32.mrb[0].mxu0
    %v946 = vpop.f32.mrb[0].mxu0
    %v947 = vadd.f32 %v169, %v946
    %v948 = vpop.f32.mrb[0].mxu0
    %949 = vmatprep.mubr.bf16.mxu0 0
    %950 = vmatmul.mubr.bf16.gmra.mrb[0].mxu0 %v850
    %v951 = vpop.f32.mrb[0].mxu0
    %v952 = vadd.f32 %v169, %v951
    %v953 = vpop.f32.mrb[0].mxu0
    %v954 = vpop.f32.mrb[0].mxu0
    %v955 = vadd.f32 %v169, %v954
    %v956 = vpop.f32.mrb[0].mxu0
    %957 = vmatprep.mubr.bf16.mxu0 0
    %958 = vmatmul.mubr.bf16.gmra.mrb[0].mxu0 %v851
    %v959 = vpop.f32.mrb[0].mxu0
    %v960 = vadd.f32 %v169, %v959
    %v961 = vpop.f32.mrb[0].mxu0
    %v962 = vpop.f32.mrb[0].mxu0
    %v963 = vadd.f32 %v169, %v962
    %v964 = vpop.f32.mrb[0].mxu0
    %965 = vmatprep.mubr.bf16.mxu0 0
    %966 = vmatmul.mubr.bf16.gmra.mrb[0].mxu0 %v852
    %v967 = vpop.f32.mrb[0].mxu0
    %v968 = vadd.f32 %v169, %v967
    %v969 = vpop.f32.mrb[0].mxu0
    %v970 = vpop.f32.mrb[0].mxu0
    %v971 = vadd.f32 %v169, %v970
    %v972 = vpop.f32.mrb[0].mxu0
    %973 = vmatprep.mubr.bf16.mxu0 0
    %974 = vmatmul.mubr.bf16.gmra.mrb[0].mxu0 %v853
    %v975 = vpop.f32.mrb[0].mxu0
    %v976 = vadd.f32 %v169, %v975
    %v977 = vpop.f32.mrb[0].mxu0
    %v978 = vpop.f32.mrb[0].mxu0
    %v979 = vadd.f32 %v169, %v978
    %v980 = vpop.f32.mrb[0].mxu0
    %981 = vmatprep.mubr.bf16.mxu0 0
    %982 = vmatmul.mubr.bf16.gmra.mrb[0].mxu0 %v854
    %v983 = vpop.f32.mrb[0].mxu0
    %v984 = vadd.f32 %v169, %v983
    %v985 = vpop.f32.mrb[0].mxu0
    %v986 = vpop.f32.mrb[0].mxu0
    %v987 = vadd.f32 %v169, %v986
    %v988 = vpop.f32.mrb[0].mxu0
    %989 = vmatprep.mubr.bf16.mxu0 0
    %990 = vmatmul.mubr.bf16.gmra.mrb[0].mxu0 %v855
    %v991 = vpop.f32.mrb[0].mxu0
    %v992 = vadd.f32 %v169, %v991
    %v993 = vpop.f32.mrb[0].mxu0
    %v994 = vpop.f32.mrb[0].mxu0
    %v995 = vadd.f32 %v169, %v994
    %v996 = vpop.f32.mrb[0].mxu0
    %997 = vmatprep.mubr.bf16.mxu0 0
    %998 = vmatmul.mubr.bf16.gmra.mrb[0].mxu0 %v856
    %v999 = vpop.f32.mrb[0].mxu0
    %v1000 = vadd.f32 %v169, %v999
    %v1001 = vpop.f32.mrb[0].mxu0
    %v1002 = vpop.f32.mrb[0].mxu0
    %v1003 = vadd.f32 %v169, %v1002
    %v1004 = vpop.f32.mrb[0].mxu0
    %1005 = vmatprep.mubr.bf16.mxu0 0
    %1006 = vmatmul.mubr.bf16.gmra.mrb[0].mxu0 %v857
    %v1007 = vpop.f32.mrb[0].mxu0
    %v1008 = vadd.f32 %v169, %v1007
    %v1009 = vpop.f32.mrb[0].mxu0
    %v1010 = vpop.f32.mrb[0].mxu0
    %v1011 = vadd.f32 %v169, %v1010
    %v1012 = vpop.f32.mrb[0].mxu0
    %1013 = vmatprep.mubr.bf16.mxu0 0
    %1014 = vmatmul.mubr.bf16.gmra.mrb[0].mxu0 %v858
    %v1015 = vpop.f32.mrb[0].mxu0
    %v1016 = vadd.f32 %v169, %v1015
    %v1017 = vpop.f32.mrb[0].mxu0
    %v1018 = vpop.f32.mrb[0].mxu0
    %v1019 = vadd.f32 %v169, %v1018
    %v1020 = vpop.f32.mrb[0].mxu0
    %1021 = vmatprep.mubr.bf16.mxu0 0
    %1022 = vmatmul.mubr.bf16.gmra.mrb[0].mxu0 %v859
    %v1023 = vpop.f32.mrb[0].mxu0
    %v1024 = vadd.f32 %v169, %v1023
    %v1025 = vpop.f32.mrb[0].mxu0
    %v1026 = vpop.f32.mrb[0].mxu0
    %v1027 = vadd.f32 %v169, %v1026
    %v1028 = vpop.f32.mrb[0].mxu0
    %1029 = vmatprep.mubr.bf16.mxu0 0
    %1030 = vmatmul.mubr.bf16.gmra.mrb[0].mxu0 %v860
    %v1031 = vpop.f32.mrb[0].mxu0
    %v1032 = vadd.f32 %v169, %v1031
    %v1033 = vpop.f32.mrb[0].mxu0
    %v1034 = vpop.f32.mrb[0].mxu0
    %v1035 = vadd.f32 %v169, %v1034
    %v1036 = vpop.f32.mrb[0].mxu0
    %1037 = vmatprep.mubr.bf16.mxu0 0
    %1038 = vmatmul.mubr.bf16.gmra.mrb[0].mxu0 %v861
    %v1039 = vpop.f32.mrb[0].mxu0
    %v1040 = vadd.f32 %v169, %v1039
    %v1041 = vpop.f32.mrb[0].mxu0
    %v1042 = vpop.f32.mrb[0].mxu0
    %v1043 = vadd.f32 %v169, %v1042
    %v1044 = vpop.f32.mrb[0].mxu0
    %1045 = vmatprep.mubr.bf16.mxu0 0
    %1046 = vmatmul.mubr.bf16.gmra.mrb[0].mxu0 %v862
    %v1047 = vpop.f32.mrb[0].mxu0
    %v1048 = vadd.f32 %v169, %v1047
    %v1049 = vpop.f32.mrb[0].mxu0
    %v1050 = vpop.f32.mrb[0].mxu0
    %v1051 = vadd.f32 %v169, %v1050
    %v1052 = vpop.f32.mrb[0].mxu0
    %1053 = vmatprep.mubr.bf16.mxu0 0
    %1054 = vmatmul.mubr.bf16.gmra.mrb[0].mxu0 %v863
    %v1055 = vpop.f32.mrb[0].mxu0
    %v1056 = vadd.f32 %v169, %v1055
    %v1057 = vpop.f32.mrb[0].mxu0
    %v1058 = vpop.f32.mrb[0].mxu0
    %v1059 = vadd.f32 %v169, %v1058
    %v1060 = vpop.f32.mrb[0].mxu0
    %1061 = vmatprep.mubr.bf16.mxu0 0
    %1062 = vmatmul.mubr.bf16.gmra.mrb[0].mxu0 %v864
    %v1063 = vpop.f32.mrb[0].mxu0
    %v1064 = vadd.f32 %v169, %v1063
    %v1065 = vpop.f32.mrb[0].mxu0
    %v1066 = vpop.f32.mrb[0].mxu0
    %v1067 = vadd.f32 %v169, %v1066
    %v1068 = vpop.f32.mrb[0].mxu0
    %1069 = vmatprep.mubr.bf16.mxu0 0
    %1070 = vmatmul.mubr.bf16.gmra.mrb[0].mxu0 %v865
    %v1071 = vpop.f32.mrb[0].mxu0
    %v1072 = vadd.f32 %v169, %v1071
    %v1073 = vpop.f32.mrb[0].mxu0
    %v1074 = vpop.f32.mrb[0].mxu0
    %v1075 = vadd.f32 %v169, %v1074
    %v1076 = vpop.f32.mrb[0].mxu0
    %1077 = vmatprep.mubr.bf16.mxu0 0
    %1078 = vmatmul.mubr.bf16.gmra.mrb[0].mxu0 %v866
    %v1079 = vpop.f32.mrb[0].mxu0
    %v1080 = vadd.f32 %v169, %v1079
    %v1081 = vpop.f32.mrb[0].mxu0
    %v1082 = vpop.f32.mrb[0].mxu0
    %v1083 = vadd.f32 %v169, %v1082
    %v1084 = vpop.f32.mrb[0].mxu0
    %1085 = vmatprep.mubr.bf16.mxu0 0
    %1086 = vmatmul.mubr.bf16.gmra.mrb[0].mxu0 %v867
    %v1087 = vpop.f32.mrb[0].mxu0
    %v1088 = vadd.f32 %v169, %v1087
    %v1089 = vpop.f32.mrb[0].mxu0
    %v1090 = vpop.f32.mrb[0].mxu0
    %v1091 = vadd.f32 %v169, %v1090
    %v1092 = vpop.f32.mrb[0].mxu0
    %1093 = vmatprep.mubr.bf16.mxu0 0
    %1094 = vmatmul.mubr.bf16.gmra.mrb[0].mxu0 %v868
    %v1095 = vpop.f32.mrb[0].mxu0
    %v1096 = vadd.f32 %v169, %v1095
    %v1097 = vpop.f32.mrb[0].mxu0
    %v1098 = vpop.f32.mrb[0].mxu0
    %v1099 = vadd.f32 %v169, %v1098
    %v1100 = vpop.f32.mrb[0].mxu0
    %1101 = vmatprep.mubr.bf16.mxu0 0
    %1102 = vmatmul.mubr.bf16.gmra.mrb[0].mxu0 %v869
    %v1103 = vpop.f32.mrb[0].mxu0
    %v1104 = vadd.f32 %v169, %v1103
    %v1105 = vpop.f32.mrb[0].mxu0
    %v1106 = vpop.f32.mrb[0].mxu0
    %v1107 = vadd.f32 %v169, %v1106
    %v1108 = vpop.f32.mrb[0].mxu0
    %1109 = vmatprep.mubr.bf16.mxu0 0
    %1110 = vmatmul.mubr.bf16.gmra.mrb[0].mxu0 %v870
    %v1111 = vpop.f32.mrb[0].mxu0
    %v1112 = vadd.f32 %v169, %v1111
    %v1113 = vpop.f32.mrb[0].mxu0
    %v1114 = vpop.f32.mrb[0].mxu0
    %v1115 = vadd.f32 %v169, %v1114
    %v1116 = vpop.f32.mrb[0].mxu0
    %1117 = vmatprep.mubr.bf16.mxu0 0
    %1118 = vmatmul.mubr.bf16.gmra.mrb[0].mxu0 %v871
    %v1119 = vpop.f32.mrb[0].mxu0
    %v1120 = vadd.f32 %v169, %v1119
    %v1121 = vpop.f32.mrb[0].mxu0
    %v1122 = vpop.f32.mrb[0].mxu0
    %v1123 = vadd.f32 %v169, %v1122
    %v1124 = vpop.f32.mrb[0].mxu0
    %1125 = vmatprep.mubr.bf16.mxu0 0
    %1126 = vmatmul.mubr.bf16.gmra.mrb[0].mxu0 %v872
    %v1127 = vpop.f32.mrb[0].mxu0
    %v1128 = vadd.f32 %v169, %v1127
    %v1129 = vpop.f32.mrb[0].mxu0
    %v1130 = vpop.f32.mrb[0].mxu0
    %v1131 = vadd.f32 %v169, %v1130
    %v1132 = vpop.f32.mrb[0].mxu0
    %1133 = vmatprep.mubr.bf16.mxu0 0
    %1134 = vmatmul.mubr.bf16.gmra.mrb[0].mxu0 %v873
    %v1135 = vpop.f32.mrb[0].mxu0
    %v1136 = vadd.f32 %v169, %v1135
    %v1137 = vpop.f32.mrb[0].mxu0
    %v1138 = vpop.f32.mrb[0].mxu0
    %v1139 = vadd.f32 %v169, %v1138
    %v1140 = vpop.f32.mrb[0].mxu0
    %1141 = vmatprep.mubr.bf16.mxu0 0
    %1142 = vmatmul.mubr.bf16.gmra.mrb[0].mxu0 %v874
    %v1143 = vpop.f32.mrb[0].mxu0
    %v1144 = vadd.f32 %v169, %v1143
    %v1145 = vpop.f32.mrb[0].mxu0
    %v1146 = vpop.f32.mrb[0].mxu0
    %v1147 = vadd.f32 %v169, %v1146
    %v1148 = vpop.f32.mrb[0].mxu0
    %1149 = vmatprep.mubr.bf16.mxu0 0
    %1150 = vmatmul.mubr.bf16.gmra.mrb[0].mxu0 %v875
    %v1151 = vpop.f32.mrb[0].mxu0
    %v1152 = vadd.f32 %v169, %v1151
    %v1153 = vpop.f32.mrb[0].mxu0
    %v1154 = vpop.f32.mrb[0].mxu0
    %v1155 = vadd.f32 %v169, %v1154
    %v1156 = vpop.f32.mrb[0].mxu0
    %1157 = vmatprep.mubr.bf16.mxu0 0
    %1158 = vmatmul.mubr.bf16.gmra.mrb[0].mxu0 %v876
    %v1159 = vpop.f32.mrb[0].mxu0
    %v1160 = vadd.f32 %v169, %v1159
    %v1161 = vpop.f32.mrb[0].mxu0
    %v1162 = vpop.f32.mrb[0].mxu0
    %v1163 = vadd.f32 %v169, %v1162
    %v1164 = vpop.f32.mrb[0].mxu0
    %1165 = vdwg.mxu0
    %v1166 = vpack.c.bf16 %v915, %v912
    %v1167 = vpack.c.bf16 %v923, %v920
    %v1168 = vpack.c.bf16 %v931, %v928
    %v1169 = vpack.c.bf16 %v939, %v936
    %v1170 = vpack.c.bf16 %v947, %v944
    %v1171 = vpack.c.bf16 %v955, %v952
    %v1172 = vpack.c.bf16 %v963, %v960
    %v1173 = vpack.c.bf16 %v971, %v968
    %v1174 = vpack.c.bf16 %v979, %v976
    %v1175 = vpack.c.bf16 %v987, %v984
    %v1176 = vpack.c.bf16 %v995, %v992
    %v1177 = vpack.c.bf16 %v1003, %v1000
    %v1178 = vpack.c.bf16 %v1011, %v1008
    %v1179 = vpack.c.bf16 %v1019, %v1016
    %v1180 = vpack.c.bf16 %v1027, %v1024
    %v1181 = vpack.c.bf16 %v1035, %v1032
    %v1182 = vpack.c.bf16 %v1043, %v1040
    %v1183 = vpack.c.bf16 %v1051, %v1048
    %v1184 = vpack.c.bf16 %v1059, %v1056
    %v1185 = vpack.c.bf16 %v1067, %v1064
    %v1186 = vpack.c.bf16 %v1075, %v1072
    %v1187 = vpack.c.bf16 %v1083, %v1080
    %v1188 = vpack.c.bf16 %v1091, %v1088
    %v1189 = vpack.c.bf16 %v1099, %v1096
    %v1190 = vpack.c.bf16 %v1107, %v1104
    %v1191 = vpack.c.bf16 %v1115, %v1112
    %v1192 = vpack.c.bf16 %v1123, %v1120
    %v1193 = vpack.c.bf16 %v1131, %v1128
    %v1194 = vpack.c.bf16 %v1139, %v1136
    %v1195 = vpack.c.bf16 %v1147, %v1144
    %v1196 = vpack.c.bf16 %v1155, %v1152
    %v1197 = vpack.c.bf16 %v1163, %v1160
    %v1198 = vtanh.bf16.pop %v1166
    %v1199 = vtanh.bf16.pop %v1167
    %v1200 = vtanh.bf16.pop %v1168
    %v1201 = vtanh.bf16.pop %v1169
    %v1202 = vtanh.bf16.pop %v1170
    %v1203 = vtanh.bf16.pop %v1171
    %v1204 = vtanh.bf16.pop %v1172
    %v1205 = vtanh.bf16.pop %v1173
    %v1206 = vtanh.bf16.pop %v1174
    %v1207 = vtanh.bf16.pop %v1175
    %v1208 = vtanh.bf16.pop %v1176
    %v1209 = vtanh.bf16.pop %v1177
    %v1210 = vtanh.bf16.pop %v1178
    %v1211 = vtanh.bf16.pop %v1179
    %v1212 = vtanh.bf16.pop %v1180
    %v1213 = vtanh.bf16.pop %v1181
    %v1214 = vtanh.bf16.pop %v1182
    %v1215 = vtanh.bf16.pop %v1183
    %v1216 = vtanh.bf16.pop %v1184
    %v1217 = vtanh.bf16.pop %v1185
    %v1218 = vtanh.bf16.pop %v1186
    %v1219 = vtanh.bf16.pop %v1187
    %v1220 = vtanh.bf16.pop %v1188
    %v1221 = vtanh.bf16.pop %v1189
    %v1222 = vtanh.bf16.pop %v1190
    %v1223 = vtanh.bf16.pop %v1191
    %v1224 = vtanh.bf16.pop %v1192
    %v1225 = vtanh.bf16.pop %v1193
    %v1226 = vtanh.bf16.pop %v1194
    %v1227 = vtanh.bf16.pop %v1195
    %v1228 = vtanh.bf16.pop %v1196
    %v1229 = vtanh.bf16.pop %v1197
    %v1230 = vunpack.c.l.bf16 %v1198
    %v1231 = vunpack.c.h.bf16 %v1198
    %v1232 = vunpack.c.l.bf16 %v1199
    %v1233 = vunpack.c.h.bf16 %v1199
    %v1234 = vunpack.c.l.bf16 %v1200
    %v1235 = vunpack.c.h.bf16 %v1200
    %v1236 = vunpack.c.l.bf16 %v1201
    %v1237 = vunpack.c.h.bf16 %v1201
    %v1238 = vunpack.c.l.bf16 %v1202
    %v1239 = vunpack.c.h.bf16 %v1202
    %v1240 = vunpack.c.l.bf16 %v1203
    %v1241 = vunpack.c.h.bf16 %v1203
    %v1242 = vunpack.c.l.bf16 %v1204
    %v1243 = vunpack.c.h.bf16 %v1204
    %v1244 = vunpack.c.l.bf16 %v1205
    %v1245 = vunpack.c.h.bf16 %v1205
    %v1246 = vunpack.c.l.bf16 %v1206
    %v1247 = vunpack.c.h.bf16 %v1206
    %v1248 = vunpack.c.l.bf16 %v1207
    %v1249 = vunpack.c.h.bf16 %v1207
    %v1250 = vunpack.c.l.bf16 %v1208
    %v1251 = vunpack.c.h.bf16 %v1208
    %v1252 = vunpack.c.l.bf16 %v1209
    %v1253 = vunpack.c.h.bf16 %v1209
    %v1254 = vunpack.c.l.bf16 %v1210
    %v1255 = vunpack.c.h.bf16 %v1210
    %v1256 = vunpack.c.l.bf16 %v1211
    %v1257 = vunpack.c.h.bf16 %v1211
    %v1258 = vunpack.c.l.bf16 %v1212
    %v1259 = vunpack.c.h.bf16 %v1212
    %v1260 = vunpack.c.l.bf16 %v1213
    %v1261 = vunpack.c.h.bf16 %v1213
    %v1262 = vunpack.c.l.bf16 %v1214
    %v1263 = vunpack.c.h.bf16 %v1214
    %v1264 = vunpack.c.l.bf16 %v1215
    %v1265 = vunpack.c.h.bf16 %v1215
    %v1266 = vunpack.c.l.bf16 %v1216
    %v1267 = vunpack.c.h.bf16 %v1216
    %v1268 = vunpack.c.l.bf16 %v1217
    %v1269 = vunpack.c.h.bf16 %v1217
    %v1270 = vunpack.c.l.bf16 %v1218
    %v1271 = vunpack.c.h.bf16 %v1218
    %v1272 = vunpack.c.l.bf16 %v1219
    %v1273 = vunpack.c.h.bf16 %v1219
    %v1274 = vunpack.c.l.bf16 %v1220
    %v1275 = vunpack.c.h.bf16 %v1220
    %v1276 = vunpack.c.l.bf16 %v1221
    %v1277 = vunpack.c.h.bf16 %v1221
    %v1278 = vunpack.c.l.bf16 %v1222
    %v1279 = vunpack.c.h.bf16 %v1222
    %v1280 = vunpack.c.l.bf16 %v1223
    %v1281 = vunpack.c.h.bf16 %v1223
    %v1282 = vunpack.c.l.bf16 %v1224
    %v1283 = vunpack.c.h.bf16 %v1224
    %v1284 = vunpack.c.l.bf16 %v1225
    %v1285 = vunpack.c.h.bf16 %v1225
    %v1286 = vunpack.c.l.bf16 %v1226
    %v1287 = vunpack.c.h.bf16 %v1226
    %v1288 = vunpack.c.l.bf16 %v1227
    %v1289 = vunpack.c.h.bf16 %v1227
    %v1290 = vunpack.c.l.bf16 %v1228
    %v1291 = vunpack.c.h.bf16 %v1228
    %v1292 = vunpack.c.l.bf16 %v1229
    %v1293 = vunpack.c.h.bf16 %v1229
    %v1294 = vmul.f32 %v1230, %v641
    %v1295 = vmul.f32 %v1231, %v641
    %v1296 = vmul.f32 %v1232, %v641
    %v1297 = vmul.f32 %v1233, %v641
    %v1298 = vmul.f32 %v1234, %v641
    %v1299 = vmul.f32 %v1235, %v641
    %v1300 = vmul.f32 %v1236, %v641
    %v1301 = vmul.f32 %v1237, %v641
    %v1302 = vmul.f32 %v1238, %v641
    %v1303 = vmul.f32 %v1239, %v641
    %v1304 = vmul.f32 %v1240, %v641
    %v1305 = vmul.f32 %v1241, %v641
    %v1306 = vmul.f32 %v1242, %v641
    %v1307 = vmul.f32 %v1243, %v641
    %v1308 = vmul.f32 %v1244, %v641
    %v1309 = vmul.f32 %v1245, %v641
    %v1310 = vmul.f32 %v1246, %v641
    %v1311 = vmul.f32 %v1247, %v641
    %v1312 = vmul.f32 %v1248, %v641
    %v1313 = vmul.f32 %v1249, %v641
    %v1314 = vmul.f32 %v1250, %v641
    %v1315 = vmul.f32 %v1251, %v641
    %v1316 = vmul.f32 %v1252, %v641
    %v1317 = vmul.f32 %v1253, %v641
    %v1318 = vmul.f32 %v1254, %v641
    %v1319 = vmul.f32 %v1255, %v641
    %v1320 = vmul.f32 %v1256, %v641
    %v1321 = vmul.f32 %v1257, %v641
    %v1322 = vmul.f32 %v1258, %v641
    %v1323 = vmul.f32 %v1259, %v641
    %v1324 = vmul.f32 %v1260, %v641
    %v1325 = vmul.f32 %v1261, %v641
    %v1326 = vmul.f32 %v1262, %v641
    %v1327 = vmul.f32 %v1263, %v641
    %v1328 = vmul.f32 %v1264, %v641
    %v1329 = vmul.f32 %v1265, %v641
    %v1330 = vmul.f32 %v1266, %v641
    %v1331 = vmul.f32 %v1267, %v641
    %v1332 = vmul.f32 %v1268, %v641
    %v1333 = vmul.f32 %v1269, %v641
    %v1334 = vmul.f32 %v1270, %v641
    %v1335 = vmul.f32 %v1271, %v641
    %v1336 = vmul.f32 %v1272, %v641
    %v1337 = vmul.f32 %v1273, %v641
    %v1338 = vmul.f32 %v1274, %v641
    %v1339 = vmul.f32 %v1275, %v641
    %v1340 = vmul.f32 %v1276, %v641
    %v1341 = vmul.f32 %v1277, %v641
    %v1342 = vmul.f32 %v1278, %v641
    %v1343 = vmul.f32 %v1279, %v641
    %v1344 = vmul.f32 %v1280, %v641
    %v1345 = vmul.f32 %v1281, %v641
    %v1346 = vmul.f32 %v1282, %v641
    %v1347 = vmul.f32 %v1283, %v641
    %v1348 = vmul.f32 %v1284, %v641
    %v1349 = vmul.f32 %v1285, %v641
    %v1350 = vmul.f32 %v1286, %v641
    %v1351 = vmul.f32 %v1287, %v641
    %v1352 = vmul.f32 %v1288, %v641
    %v1353 = vmul.f32 %v1289, %v641
    %v1354 = vmul.f32 %v1290, %v641
    %v1355 = vmul.f32 %v1291, %v641
    %v1356 = vmul.f32 %v1292, %v641
    %v1357 = vmul.f32 %v1293, %v641
    %v1358 = vadd.f32 %v1294, %v1295
    %v1359 = vadd.f32 %v1358, %v1296
    %v1360 = vadd.f32 %v1359, %v1297
    %v1361 = vadd.f32 %v1360, %v1298
    %v1362 = vadd.f32 %v1361, %v1299
    %v1363 = vadd.f32 %v1362, %v1300
    %v1364 = vadd.f32 %v1363, %v1301
    %v1365 = vadd.f32 %v1364, %v1302
    %v1366 = vadd.f32 %v1365, %v1303
    %v1367 = vadd.f32 %v1366, %v1304
    %v1368 = vadd.f32 %v1367, %v1305
    %v1369 = vadd.f32 %v1368, %v1306
    %v1370 = vadd.f32 %v1369, %v1307
    %v1371 = vadd.f32 %v1370, %v1308
    %v1372 = vadd.f32 %v1371, %v1309
    %v1373 = vadd.f32 %v1372, %v1310
    %v1374 = vadd.f32 %v1373, %v1311
    %v1375 = vadd.f32 %v1374, %v1312
    %v1376 = vadd.f32 %v1375, %v1313
    %v1377 = vadd.f32 %v1376, %v1314
    %v1378 = vadd.f32 %v1377, %v1315
    %v1379 = vadd.f32 %v1378, %v1316
    %v1380 = vadd.f32 %v1379, %v1317
    %v1381 = vadd.f32 %v1380, %v1318
    %v1382 = vadd.f32 %v1381, %v1319
    %v1383 = vadd.f32 %v1382, %v1320
    %v1384 = vadd.f32 %v1383, %v1321
    %v1385 = vadd.f32 %v1384, %v1322
    %v1386 = vadd.f32 %v1385, %v1323
    %v1387 = vadd.f32 %v1386, %v1324
    %v1388 = vadd.f32 %v1387, %v1325
    %v1389 = vadd.f32 %v1388, %v1326
    %v1390 = vadd.f32 %v1389, %v1327
    %v1391 = vadd.f32 %v1390, %v1328
    %v1392 = vadd.f32 %v1391, %v1329
    %v1393 = vadd.f32 %v1392, %v1330
    %v1394 = vadd.f32 %v1393, %v1331
    %v1395 = vadd.f32 %v1394, %v1332
    %v1396 = vadd.f32 %v1395, %v1333
    %v1397 = vadd.f32 %v1396, %v1334
    %v1398 = vadd.f32 %v1397, %v1335
    %v1399 = vadd.f32 %v1398, %v1336
    %v1400 = vadd.f32 %v1399, %v1337
    %v1401 = vadd.f32 %v1400, %v1338
    %v1402 = vadd.f32 %v1401, %v1339
    %v1403 = vadd.f32 %v1402, %v1340
    %v1404 = vadd.f32 %v1403, %v1341
    %v1405 = vadd.f32 %v1404, %v1342
    %v1406 = vadd.f32 %v1405, %v1343
    %v1407 = vadd.f32 %v1406, %v1344
    %v1408 = vadd.f32 %v1407, %v1345
    %v1409 = vadd.f32 %v1408, %v1346
    %v1410 = vadd.f32 %v1409, %v1347
    %v1411 = vadd.f32 %v1410, %v1348
    %v1412 = vadd.f32 %v1411, %v1349
    %v1413 = vadd.f32 %v1412, %v1350
    %v1414 = vadd.f32 %v1413, %v1351
    %v1415 = vadd.f32 %v1414, %v1352
    %v1416 = vadd.f32 %v1415, %v1353
    %v1417 = vadd.f32 %v1416, %v1354
    %v1418 = vadd.f32 %v1417, %v1355
    %v1419 = vadd.f32 %v1418, %v1356
    %v1420 = vadd.f32 %v1419, %v1357
    %1421 = vadd.xlane.f32.xlu0 %v1420
    %v1422 = vpop.xlane.xlu0 %1421
    %v1423 = vrot.slane %v1422, 4
    %v1424 = vadd.f32 %v1422, %v1423
    %v1425 = vrot.slane %v1424, 2
    %v1426 = vadd.f32 %v1424, %v1425
    %v1427 = vrot.slane %v1426, 1
    %v1428 = vadd.f32 %v1426, %v1427
    %s1429 = vtos %v1428
    %s1430 = smul.f32 %s1429, 0.001953125
    %s1431 = scalar_lea.vmem [#allocation2], 1024
    %v1432 = vld [vmem:[%s1431] sm:$0xff]
    %v1433 = vld [vmem:[%s1431 + $0x8] sm:$0xff]
    %v1434 = vld [vmem:[%s1431 + $0x10] sm:$0xff]
    %v1435 = vld [vmem:[%s1431 + $0x18] sm:$0xff]
    %v1436 = vld [vmem:[%s1431 + $0x20] sm:$0xff]
    %v1437 = vld [vmem:[%s1431 + $0x28] sm:$0xff]
    %v1438 = vld [vmem:[%s1431 + $0x30] sm:$0xff]
    %v1439 = vld [vmem:[%s1431 + $0x38] sm:$0xff]
    %v1440 = vld [vmem:[%s1431 + $0x40] sm:$0xff]
    %v1441 = vld [vmem:[%s1431 + $0x48] sm:$0xff]
    %v1442 = vld [vmem:[%s1431 + $0x50] sm:$0xff]
    %v1443 = vld [vmem:[%s1431 + $0x58] sm:$0xff]
    %v1444 = vld [vmem:[%s1431 + $0x60] sm:$0xff]
    %v1445 = vld [vmem:[%s1431 + $0x68] sm:$0xff]
    %v1446 = vld [vmem:[%s1431 + $0x70] sm:$0xff]
    %v1447 = vld [vmem:[%s1431 + $0x78] sm:$0xff]
    %v1448 = vld [vmem:[%s1431 + $0x80] sm:$0xff]
    %v1449 = vld [vmem:[%s1431 + $0x88] sm:$0xff]
    %v1450 = vld [vmem:[%s1431 + $0x90] sm:$0xff]
    %v1451 = vld [vmem:[%s1431 + $0x98] sm:$0xff]
    %v1452 = vld [vmem:[%s1431 + $0xa0] sm:$0xff]
    %v1453 = vld [vmem:[%s1431 + $0xa8] sm:$0xff]
    %v1454 = vld [vmem:[%s1431 + $0xb0] sm:$0xff]
    %v1455 = vld [vmem:[%s1431 + $0xb8] sm:$0xff]
    %v1456 = vld [vmem:[%s1431 + $0xc0] sm:$0xff]
    %v1457 = vld [vmem:[%s1431 + $0xc8] sm:$0xff]
    %v1458 = vld [vmem:[%s1431 + $0xd0] sm:$0xff]
    %v1459 = vld [vmem:[%s1431 + $0xd8] sm:$0xff]
    %v1460 = vld [vmem:[%s1431 + $0xe0] sm:$0xff]
    %v1461 = vld [vmem:[%s1431 + $0xe8] sm:$0xff]
    %v1462 = vld [vmem:[%s1431 + $0xf0] sm:$0xff]
    %v1463 = vld [vmem:[%s1431 + $0xf8] sm:$0xff]
    %v1464 = vld [vmem:[%s1431 + $0x100] sm:$0xff]
    %v1465 = vld [vmem:[%s1431 + $0x108] sm:$0xff]
    %v1466 = vld [vmem:[%s1431 + $0x110] sm:$0xff]
    %v1467 = vld [vmem:[%s1431 + $0x118] sm:$0xff]
    %v1468 = vld [vmem:[%s1431 + $0x120] sm:$0xff]
    %v1469 = vld [vmem:[%s1431 + $0x128] sm:$0xff]
    %v1470 = vld [vmem:[%s1431 + $0x130] sm:$0xff]
    %v1471 = vld [vmem:[%s1431 + $0x138] sm:$0xff]
    %v1472 = vld [vmem:[%s1431 + $0x140] sm:$0xff]
    %v1473 = vld [vmem:[%s1431 + $0x148] sm:$0xff]
    %v1474 = vld [vmem:[%s1431 + $0x150] sm:$0xff]
    %v1475 = vld [vmem:[%s1431 + $0x158] sm:$0xff]
    %v1476 = vld [vmem:[%s1431 + $0x160] sm:$0xff]
    %v1477 = vld [vmem:[%s1431 + $0x168] sm:$0xff]
    %v1478 = vld [vmem:[%s1431 + $0x170] sm:$0xff]
    %v1479 = vld [vmem:[%s1431 + $0x178] sm:$0xff]
    %v1480 = vld [vmem:[%s1431 + $0x180] sm:$0xff]
    %v1481 = vld [vmem:[%s1431 + $0x188] sm:$0xff]
    %v1482 = vld [vmem:[%s1431 + $0x190] sm:$0xff]
    %v1483 = vld [vmem:[%s1431 + $0x198] sm:$0xff]
    %v1484 = vld [vmem:[%s1431 + $0x1a0] sm:$0xff]
    %v1485 = vld [vmem:[%s1431 + $0x1a8] sm:$0xff]
    %v1486 = vld [vmem:[%s1431 + $0x1b0] sm:$0xff]
    %v1487 = vld [vmem:[%s1431 + $0x1b8] sm:$0xff]
    %v1488 = vld [vmem:[%s1431 + $0x1c0] sm:$0xff]
    %v1489 = vld [vmem:[%s1431 + $0x1c8] sm:$0xff]
    %v1490 = vld [vmem:[%s1431 + $0x1d0] sm:$0xff]
    %v1491 = vld [vmem:[%s1431 + $0x1d8] sm:$0xff]
    %v1492 = vld [vmem:[%s1431 + $0x1e0] sm:$0xff]
    %v1493 = vld [vmem:[%s1431 + $0x1e8] sm:$0xff]
    %v1494 = vld [vmem:[%s1431 + $0x1f0] sm:$0xff]
    %v1495 = vld [vmem:[%s1431 + $0x1f8] sm:$0xff]
    %v1496 = vpack.c.bf16 %v1433, %v1432
    %v1497 = vpack.c.bf16 %v1435, %v1434
    %v1498 = vpack.c.bf16 %v1437, %v1436
    %v1499 = vpack.c.bf16 %v1439, %v1438
    %v1500 = vpack.c.bf16 %v1441, %v1440
    %v1501 = vpack.c.bf16 %v1443, %v1442
    %v1502 = vpack.c.bf16 %v1445, %v1444
    %v1503 = vpack.c.bf16 %v1447, %v1446
    %v1504 = vpack.c.bf16 %v1449, %v1448
    %v1505 = vpack.c.bf16 %v1451, %v1450
    %v1506 = vpack.c.bf16 %v1453, %v1452
    %v1507 = vpack.c.bf16 %v1455, %v1454
    %v1508 = vpack.c.bf16 %v1457, %v1456
    %v1509 = vpack.c.bf16 %v1459, %v1458
    %v1510 = vpack.c.bf16 %v1461, %v1460
    %v1511 = vpack.c.bf16 %v1463, %v1462
    %v1512 = vpack.c.bf16 %v1465, %v1464
    %v1513 = vpack.c.bf16 %v1467, %v1466
    %v1514 = vpack.c.bf16 %v1469, %v1468
    %v1515 = vpack.c.bf16 %v1471, %v1470
    %v1516 = vpack.c.bf16 %v1473, %v1472
    %v1517 = vpack.c.bf16 %v1475, %v1474
    %v1518 = vpack.c.bf16 %v1477, %v1476
    %v1519 = vpack.c.bf16 %v1479, %v1478
    %v1520 = vpack.c.bf16 %v1481, %v1480
    %v1521 = vpack.c.bf16 %v1483, %v1482
    %v1522 = vpack.c.bf16 %v1485, %v1484
    %v1523 = vpack.c.bf16 %v1487, %v1486
    %v1524 = vpack.c.bf16 %v1489, %v1488
    %v1525 = vpack.c.bf16 %v1491, %v1490
    %v1526 = vpack.c.bf16 %v1493, %v1492
    %v1527 = vpack.c.bf16 %v1495, %v1494
    %1528 = vmatprep.subr.bf16.mxu0 0
    %1529 = vmatpush1.bf16.msra.mxu0 %v203
    %1530 = vmatprep.subr.bf16.mxu0 0
    %1531 = vmatpush1.bf16.msra.mxu0 %v204
    %1532 = vmatprep.subr.bf16.mxu0 0
    %1533 = vmatpush1.bf16.msra.mxu0 %v205
    %1534 = vmatprep.subr.bf16.mxu0 0
    %1535 = vmatpush1.bf16.msra.mxu0 %v206
    %1536 = vmatprep.subr.bf16.mxu0 0
    %1537 = vmatpush1.bf16.msra.mxu0 %v207
    %1538 = vmatprep.subr.bf16.mxu0 0
    %1539 = vmatpush1.bf16.msra.mxu0 %v208
    %1540 = vmatprep.subr.bf16.mxu0 0
    %1541 = vmatpush1.bf16.msra.mxu0 %v209
    %1542 = vmatprep.subr.bf16.mxu0 0
    %1543 = vmatpush1.bf16.msra.mxu0 %v210
    %1544 = vmatprep.subr.bf16.mxu0 0
    %1545 = vmatpush1.bf16.msra.mxu0 0
    %1546 = vmatprep.subr.bf16.mxu0 0
    %1547 = vmatpush1.bf16.msra.mxu0 0
    %1548 = vmatprep.subr.bf16.mxu0 0
    %1549 = vmatpush1.bf16.msra.mxu0 0
    %1550 = vmatprep.subr.bf16.mxu0 0
    %1551 = vmatpush1.bf16.msra.mxu0 0
    %1552 = vmatprep.subr.bf16.mxu0 0
    %1553 = vmatpush1.bf16.msra.mxu0 0
    %1554 = vmatprep.subr.bf16.mxu0 0
    %1555 = vmatpush1.bf16.msra.mxu0 0
    %1556 = vmatprep.subr.bf16.mxu0 0
    %1557 = vmatpush1.bf16.msra.mxu0 0
    %1558 = vmatprep.subr.bf16.mxu0 0
    %1559 = vmatpush1.bf16.msra.mxu0 0
    %1560 = vmatprep.mubr.bf16.mxu0 0
    %1561 = vmatmul.mubr.bf16.gmra.mrb[0].mxu0 %v1496
    %v1562 = vpop.f32.mrb[0].mxu0
    %v1563 = vadd.f32 %v169, %v1562
    %v1564 = vpop.f32.mrb[0].mxu0
    %v1565 = vpop.f32.mrb[0].mxu0
    %v1566 = vadd.f32 %v169, %v1565
    %v1567 = vpop.f32.mrb[0].mxu0
    %1568 = vmatprep.mubr.bf16.mxu0 0
    %1569 = vmatmul.mubr.bf16.gmra.mrb[0].mxu0 %v1497
    %v1570 = vpop.f32.mrb[0].mxu0
    %v1571 = vadd.f32 %v169, %v1570
    %v1572 = vpop.f32.mrb[0].mxu0
    %v1573 = vpop.f32.mrb[0].mxu0
    %v1574 = vadd.f32 %v169, %v1573
    %v1575 = vpop.f32.mrb[0].mxu0
    %1576 = vmatprep.mubr.bf16.mxu0 0
    %1577 = vmatmul.mubr.bf16.gmra.mrb[0].mxu0 %v1498
    %v1578 = vpop.f32.mrb[0].mxu0
    %v1579 = vadd.f32 %v169, %v1578
    %v1580 = vpop.f32.mrb[0].mxu0
    %v1581 = vpop.f32.mrb[0].mxu0
    %v1582 = vadd.f32 %v169, %v1581
    %v1583 = vpop.f32.mrb[0].mxu0
    %1584 = vmatprep.mubr.bf16.mxu0 0
    %1585 = vmatmul.mubr.bf16.gmra.mrb[0].mxu0 %v1499
    %v1586 = vpop.f32.mrb[0].mxu0
    %v1587 = vadd.f32 %v169, %v1586
    %v1588 = vpop.f32.mrb[0].mxu0
    %v1589 = vpop.f32.mrb[0].mxu0
    %v1590 = vadd.f32 %v169, %v1589
    %v1591 = vpop.f32.mrb[0].mxu0
    %1592 = vmatprep.mubr.bf16.mxu0 0
    %1593 = vmatmul.mubr.bf16.gmra.mrb[0].mxu0 %v1500
    %v1594 = vpop.f32.mrb[0].mxu0
    %v1595 = vadd.f32 %v169, %v1594
    %v1596 = vpop.f32.mrb[0].mxu0
    %v1597 = vpop.f32.mrb[0].mxu0
    %v1598 = vadd.f32 %v169, %v1597
    %v1599 = vpop.f32.mrb[0].mxu0
    %1600 = vmatprep.mubr.bf16.mxu0 0
    %1601 = vmatmul.mubr.bf16.gmra.mrb[0].mxu0 %v1501
    %v1602 = vpop.f32.mrb[0].mxu0
    %v1603 = vadd.f32 %v169, %v1602
    %v1604 = vpop.f32.mrb[0].mxu0
    %v1605 = vpop.f32.mrb[0].mxu0
    %v1606 = vadd.f32 %v169, %v1605
    %v1607 = vpop.f32.mrb[0].mxu0
    %1608 = vmatprep.mubr.bf16.mxu0 0
    %1609 = vmatmul.mubr.bf16.gmra.mrb[0].mxu0 %v1502
    %v1610 = vpop.f32.mrb[0].mxu0
    %v1611 = vadd.f32 %v169, %v1610
    %v1612 = vpop.f32.mrb[0].mxu0
    %v1613 = vpop.f32.mrb[0].mxu0
    %v1614 = vadd.f32 %v169, %v1613
    %v1615 = vpop.f32.mrb[0].mxu0
    %1616 = vmatprep.mubr.bf16.mxu0 0
    %1617 = vmatmul.mubr.bf16.gmra.mrb[0].mxu0 %v1503
    %v1618 = vpop.f32.mrb[0].mxu0
    %v1619 = vadd.f32 %v169, %v1618
    %v1620 = vpop.f32.mrb[0].mxu0
    %v1621 = vpop.f32.mrb[0].mxu0
    %v1622 = vadd.f32 %v169, %v1621
    %v1623 = vpop.f32.mrb[0].mxu0
    %1624 = vmatprep.mubr.bf16.mxu0 0
    %1625 = vmatmul.mubr.bf16.gmra.mrb[0].mxu0 %v1504
    %v1626 = vpop.f32.mrb[0].mxu0
    %v1627 = vadd.f32 %v169, %v1626
    %v1628 = vpop.f32.mrb[0].mxu0
    %v1629 = vpop.f32.mrb[0].mxu0
    %v1630 = vadd.f32 %v169, %v1629
    %v1631 = vpop.f32.mrb[0].mxu0
    %1632 = vmatprep.mubr.bf16.mxu0 0
    %1633 = vmatmul.mubr.bf16.gmra.mrb[0].mxu0 %v1505
    %v1634 = vpop.f32.mrb[0].mxu0
    %v1635 = vadd.f32 %v169, %v1634
    %v1636 = vpop.f32.mrb[0].mxu0
    %v1637 = vpop.f32.mrb[0].mxu0
    %v1638 = vadd.f32 %v169, %v1637
    %v1639 = vpop.f32.mrb[0].mxu0
    %1640 = vmatprep.mubr.bf16.mxu0 0
    %1641 = vmatmul.mubr.bf16.gmra.mrb[0].mxu0 %v1506
    %v1642 = vpop.f32.mrb[0].mxu0
    %v1643 = vadd.f32 %v169, %v1642
    %v1644 = vpop.f32.mrb[0].mxu0
    %v1645 = vpop.f32.mrb[0].mxu0
    %v1646 = vadd.f32 %v169, %v1645
    %v1647 = vpop.f32.mrb[0].mxu0
    %1648 = vmatprep.mubr.bf16.mxu0 0
    %1649 = vmatmul.mubr.bf16.gmra.mrb[0].mxu0 %v1507
    %v1650 = vpop.f32.mrb[0].mxu0
    %v1651 = vadd.f32 %v169, %v1650
    %v1652 = vpop.f32.mrb[0].mxu0
    %v1653 = vpop.f32.mrb[0].mxu0
    %v1654 = vadd.f32 %v169, %v1653
    %v1655 = vpop.f32.mrb[0].mxu0
    %1656 = vmatprep.mubr.bf16.mxu0 0
    %1657 = vmatmul.mubr.bf16.gmra.mrb[0].mxu0 %v1508
    %v1658 = vpop.f32.mrb[0].mxu0
    %v1659 = vadd.f32 %v169, %v1658
    %v1660 = vpop.f32.mrb[0].mxu0
    %v1661 = vpop.f32.mrb[0].mxu0
    %v1662 = vadd.f32 %v169, %v1661
    %v1663 = vpop.f32.mrb[0].mxu0
    %1664 = vmatprep.mubr.bf16.mxu0 0
    %1665 = vmatmul.mubr.bf16.gmra.mrb[0].mxu0 %v1509
    %v1666 = vpop.f32.mrb[0].mxu0
    %v1667 = vadd.f32 %v169, %v1666
    %v1668 = vpop.f32.mrb[0].mxu0
    %v1669 = vpop.f32.mrb[0].mxu0
    %v1670 = vadd.f32 %v169, %v1669
    %v1671 = vpop.f32.mrb[0].mxu0
    %1672 = vmatprep.mubr.bf16.mxu0 0
    %1673 = vmatmul.mubr.bf16.gmra.mrb[0].mxu0 %v1510
    %v1674 = vpop.f32.mrb[0].mxu0
    %v1675 = vadd.f32 %v169, %v1674
    %v1676 = vpop.f32.mrb[0].mxu0
    %v1677 = vpop.f32.mrb[0].mxu0
    %v1678 = vadd.f32 %v169, %v1677
    %v1679 = vpop.f32.mrb[0].mxu0
    %1680 = vmatprep.mubr.bf16.mxu0 0
    %1681 = vmatmul.mubr.bf16.gmra.mrb[0].mxu0 %v1511
    %v1682 = vpop.f32.mrb[0].mxu0
    %v1683 = vadd.f32 %v169, %v1682
    %v1684 = vpop.f32.mrb[0].mxu0
    %v1685 = vpop.f32.mrb[0].mxu0
    %v1686 = vadd.f32 %v169, %v1685
    %v1687 = vpop.f32.mrb[0].mxu0
    %1688 = vmatprep.mubr.bf16.mxu0 0
    %1689 = vmatmul.mubr.bf16.gmra.mrb[0].mxu0 %v1512
    %v1690 = vpop.f32.mrb[0].mxu0
    %v1691 = vadd.f32 %v169, %v1690
    %v1692 = vpop.f32.mrb[0].mxu0
    %v1693 = vpop.f32.mrb[0].mxu0
    %v1694 = vadd.f32 %v169, %v1693
    %v1695 = vpop.f32.mrb[0].mxu0
    %1696 = vmatprep.mubr.bf16.mxu0 0
    %1697 = vmatmul.mubr.bf16.gmra.mrb[0].mxu0 %v1513
    %v1698 = vpop.f32.mrb[0].mxu0
    %v1699 = vadd.f32 %v169, %v1698
    %v1700 = vpop.f32.mrb[0].mxu0
    %v1701 = vpop.f32.mrb[0].mxu0
    %v1702 = vadd.f32 %v169, %v1701
    %v1703 = vpop.f32.mrb[0].mxu0
    %1704 = vmatprep.mubr.bf16.mxu0 0
    %1705 = vmatmul.mubr.bf16.gmra.mrb[0].mxu0 %v1514
    %v1706 = vpop.f32.mrb[0].mxu0
    %v1707 = vadd.f32 %v169, %v1706
    %v1708 = vpop.f32.mrb[0].mxu0
    %v1709 = vpop.f32.mrb[0].mxu0
    %v1710 = vadd.f32 %v169, %v1709
    %v1711 = vpop.f32.mrb[0].mxu0
    %1712 = vmatprep.mubr.bf16.mxu0 0
    %1713 = vmatmul.mubr.bf16.gmra.mrb[0].mxu0 %v1515
    %v1714 = vpop.f32.mrb[0].mxu0
    %v1715 = vadd.f32 %v169, %v1714
    %v1716 = vpop.f32.mrb[0].mxu0
    %v1717 = vpop.f32.mrb[0].mxu0
    %v1718 = vadd.f32 %v169, %v1717
    %v1719 = vpop.f32.mrb[0].mxu0
    %1720 = vmatprep.mubr.bf16.mxu0 0
    %1721 = vmatmul.mubr.bf16.gmra.mrb[0].mxu0 %v1516
    %v1722 = vpop.f32.mrb[0].mxu0
    %v1723 = vadd.f32 %v169, %v1722
    %v1724 = vpop.f32.mrb[0].mxu0
    %v1725 = vpop.f32.mrb[0].mxu0
    %v1726 = vadd.f32 %v169, %v1725
    %v1727 = vpop.f32.mrb[0].mxu0
    %1728 = vmatprep.mubr.bf16.mxu0 0
    %1729 = vmatmul.mubr.bf16.gmra.mrb[0].mxu0 %v1517
    %v1730 = vpop.f32.mrb[0].mxu0
    %v1731 = vadd.f32 %v169, %v1730
    %v1732 = vpop.f32.mrb[0].mxu0
    %v1733 = vpop.f32.mrb[0].mxu0
    %v1734 = vadd.f32 %v169, %v1733
    %v1735 = vpop.f32.mrb[0].mxu0
    %1736 = vmatprep.mubr.bf16.mxu0 0
    %1737 = vmatmul.mubr.bf16.gmra.mrb[0].mxu0 %v1518
    %v1738 = vpop.f32.mrb[0].mxu0
    %v1739 = vadd.f32 %v169, %v1738
    %v1740 = vpop.f32.mrb[0].mxu0
    %v1741 = vpop.f32.mrb[0].mxu0
    %v1742 = vadd.f32 %v169, %v1741
    %v1743 = vpop.f32.mrb[0].mxu0
    %1744 = vmatprep.mubr.bf16.mxu0 0
    %1745 = vmatmul.mubr.bf16.gmra.mrb[0].mxu0 %v1519
    %v1746 = vpop.f32.mrb[0].mxu0
    %v1747 = vadd.f32 %v169, %v1746
    %v1748 = vpop.f32.mrb[0].mxu0
    %v1749 = vpop.f32.mrb[0].mxu0
    %v1750 = vadd.f32 %v169, %v1749
    %v1751 = vpop.f32.mrb[0].mxu0
    %1752 = vmatprep.mubr.bf16.mxu0 0
    %1753 = vmatmul.mubr.bf16.gmra.mrb[0].mxu0 %v1520
    %v1754 = vpop.f32.mrb[0].mxu0
    %v1755 = vadd.f32 %v169, %v1754
    %v1756 = vpop.f32.mrb[0].mxu0
    %v1757 = vpop.f32.mrb[0].mxu0
    %v1758 = vadd.f32 %v169, %v1757
    %v1759 = vpop.f32.mrb[0].mxu0
    %1760 = vmatprep.mubr.bf16.mxu0 0
    %1761 = vmatmul.mubr.bf16.gmra.mrb[0].mxu0 %v1521
    %v1762 = vpop.f32.mrb[0].mxu0
    %v1763 = vadd.f32 %v169, %v1762
    %v1764 = vpop.f32.mrb[0].mxu0
    %v1765 = vpop.f32.mrb[0].mxu0
    %v1766 = vadd.f32 %v169, %v1765
    %v1767 = vpop.f32.mrb[0].mxu0
    %1768 = vmatprep.mubr.bf16.mxu0 0
    %1769 = vmatmul.mubr.bf16.gmra.mrb[0].mxu0 %v1522
    %v1770 = vpop.f32.mrb[0].mxu0
    %v1771 = vadd.f32 %v169, %v1770
    %v1772 = vpop.f32.mrb[0].mxu0
    %v1773 = vpop.f32.mrb[0].mxu0
    %v1774 = vadd.f32 %v169, %v1773
    %v1775 = vpop.f32.mrb[0].mxu0
    %1776 = vmatprep.mubr.bf16.mxu0 0
    %1777 = vmatmul.mubr.bf16.gmra.mrb[0].mxu0 %v1523
    %v1778 = vpop.f32.mrb[0].mxu0
    %v1779 = vadd.f32 %v169, %v1778
    %v1780 = vpop.f32.mrb[0].mxu0
    %v1781 = vpop.f32.mrb[0].mxu0
    %v1782 = vadd.f32 %v169, %v1781
    %v1783 = vpop.f32.mrb[0].mxu0
    %1784 = vmatprep.mubr.bf16.mxu0 0
    %1785 = vmatmul.mubr.bf16.gmra.mrb[0].mxu0 %v1524
    %v1786 = vpop.f32.mrb[0].mxu0
    %v1787 = vadd.f32 %v169, %v1786
    %v1788 = vpop.f32.mrb[0].mxu0
    %v1789 = vpop.f32.mrb[0].mxu0
    %v1790 = vadd.f32 %v169, %v1789
    %v1791 = vpop.f32.mrb[0].mxu0
    %1792 = vmatprep.mubr.bf16.mxu0 0
    %1793 = vmatmul.mubr.bf16.gmra.mrb[0].mxu0 %v1525
    %v1794 = vpop.f32.mrb[0].mxu0
    %v1795 = vadd.f32 %v169, %v1794
    %v1796 = vpop.f32.mrb[0].mxu0
    %v1797 = vpop.f32.mrb[0].mxu0
    %v1798 = vadd.f32 %v169, %v1797
    %v1799 = vpop.f32.mrb[0].mxu0
    %1800 = vmatprep.mubr.bf16.mxu0 0
    %1801 = vmatmul.mubr.bf16.gmra.mrb[0].mxu0 %v1526
    %v1802 = vpop.f32.mrb[0].mxu0
    %v1803 = vadd.f32 %v169, %v1802
    %v1804 = vpop.f32.mrb[0].mxu0
    %v1805 = vpop.f32.mrb[0].mxu0
    %v1806 = vadd.f32 %v169, %v1805
    %v1807 = vpop.f32.mrb[0].mxu0
    %1808 = vmatprep.mubr.bf16.mxu0 0
    %1809 = vmatmul.mubr.bf16.gmra.mrb[0].mxu0 %v1527
    %v1810 = vpop.f32.mrb[0].mxu0
    %v1811 = vadd.f32 %v169, %v1810
    %v1812 = vpop.f32.mrb[0].mxu0
    %v1813 = vpop.f32.mrb[0].mxu0
    %v1814 = vadd.f32 %v169, %v1813
    %v1815 = vpop.f32.mrb[0].mxu0
    %1816 = vdwg.mxu0
    %v1817 = vpack.c.bf16 %v1566, %v1563
    %v1818 = vpack.c.bf16 %v1574, %v1571
    %v1819 = vpack.c.bf16 %v1582, %v1579
    %v1820 = vpack.c.bf16 %v1590, %v1587
    %v1821 = vpack.c.bf16 %v1598, %v1595
    %v1822 = vpack.c.bf16 %v1606, %v1603
    %v1823 = vpack.c.bf16 %v1614, %v1611
    %v1824 = vpack.c.bf16 %v1622, %v1619
    %v1825 = vpack.c.bf16 %v1630, %v1627
    %v1826 = vpack.c.bf16 %v1638, %v1635
    %v1827 = vpack.c.bf16 %v1646, %v1643
    %v1828 = vpack.c.bf16 %v1654, %v1651
    %v1829 = vpack.c.bf16 %v1662, %v1659
    %v1830 = vpack.c.bf16 %v1670, %v1667
    %v1831 = vpack.c.bf16 %v1678, %v1675
    %v1832 = vpack.c.bf16 %v1686, %v1683
    %v1833 = vpack.c.bf16 %v1694, %v1691
    %v1834 = vpack.c.bf16 %v1702, %v1699
    %v1835 = vpack.c.bf16 %v1710, %v1707
    %v1836 = vpack.c.bf16 %v1718, %v1715
    %v1837 = vpack.c.bf16 %v1726, %v1723
    %v1838 = vpack.c.bf16 %v1734, %v1731
    %v1839 = vpack.c.bf16 %v1742, %v1739
    %v1840 = vpack.c.bf16 %v1750, %v1747
    %v1841 = vpack.c.bf16 %v1758, %v1755
    %v1842 = vpack.c.bf16 %v1766, %v1763
    %v1843 = vpack.c.bf16 %v1774, %v1771
    %v1844 = vpack.c.bf16 %v1782, %v1779
    %v1845 = vpack.c.bf16 %v1790, %v1787
    %v1846 = vpack.c.bf16 %v1798, %v1795
    %v1847 = vpack.c.bf16 %v1806, %v1803
    %v1848 = vpack.c.bf16 %v1814, %v1811
    %v1849 = vtanh.bf16.pop %v1817
    %v1850 = vtanh.bf16.pop %v1818
    %v1851 = vtanh.bf16.pop %v1819
    %v1852 = vtanh.bf16.pop %v1820
    %v1853 = vtanh.bf16.pop %v1821
    %v1854 = vtanh.bf16.pop %v1822
    %v1855 = vtanh.bf16.pop %v1823
    %v1856 = vtanh.bf16.pop %v1824
    %v1857 = vtanh.bf16.pop %v1825
    %v1858 = vtanh.bf16.pop %v1826
    %v1859 = vtanh.bf16.pop %v1827
    %v1860 = vtanh.bf16.pop %v1828
    %v1861 = vtanh.bf16.pop %v1829
    %v1862 = vtanh.bf16.pop %v1830
    %v1863 = vtanh.bf16.pop %v1831
    %v1864 = vtanh.bf16.pop %v1832
    %v1865 = vtanh.bf16.pop %v1833
    %v1866 = vtanh.bf16.pop %v1834
    %v1867 = vtanh.bf16.pop %v1835
    %v1868 = vtanh.bf16.pop %v1836
    %v1869 = vtanh.bf16.pop %v1837
    %v1870 = vtanh.bf16.pop %v1838
    %v1871 = vtanh.bf16.pop %v1839
    %v1872 = vtanh.bf16.pop %v1840
    %v1873 = vtanh.bf16.pop %v1841
    %v1874 = vtanh.bf16.pop %v1842
    %v1875 = vtanh.bf16.pop %v1843
    %v1876 = vtanh.bf16.pop %v1844
    %v1877 = vtanh.bf16.pop %v1845
    %v1878 = vtanh.bf16.pop %v1846
    %v1879 = vtanh.bf16.pop %v1847
    %v1880 = vtanh.bf16.pop %v1848
    %v1881 = vunpack.c.l.bf16 %v1849
    %v1882 = vunpack.c.h.bf16 %v1849
    %v1883 = vunpack.c.l.bf16 %v1850
    %v1884 = vunpack.c.h.bf16 %v1850
    %v1885 = vunpack.c.l.bf16 %v1851
    %v1886 = vunpack.c.h.bf16 %v1851
    %v1887 = vunpack.c.l.bf16 %v1852
    %v1888 = vunpack.c.h.bf16 %v1852
    %v1889 = vunpack.c.l.bf16 %v1853
    %v1890 = vunpack.c.h.bf16 %v1853
    %v1891 = vunpack.c.l.bf16 %v1854
    %v1892 = vunpack.c.h.bf16 %v1854
    %v1893 = vunpack.c.l.bf16 %v1855
    %v1894 = vunpack.c.h.bf16 %v1855
    %v1895 = vunpack.c.l.bf16 %v1856
    %v1896 = vunpack.c.h.bf16 %v1856
    %v1897 = vunpack.c.l.bf16 %v1857
    %v1898 = vunpack.c.h.bf16 %v1857
    %v1899 = vunpack.c.l.bf16 %v1858
    %v1900 = vunpack.c.h.bf16 %v1858
    %v1901 = vunpack.c.l.bf16 %v1859
    %v1902 = vunpack.c.h.bf16 %v1859
    %v1903 = vunpack.c.l.bf16 %v1860
    %v1904 = vunpack.c.h.bf16 %v1860
    %v1905 = vunpack.c.l.bf16 %v1861
    %v1906 = vunpack.c.h.bf16 %v1861
    %v1907 = vunpack.c.l.bf16 %v1862
    %v1908 = vunpack.c.h.bf16 %v1862
    %v1909 = vunpack.c.l.bf16 %v1863
    %v1910 = vunpack.c.h.bf16 %v1863
    %v1911 = vunpack.c.l.bf16 %v1864
    %v1912 = vunpack.c.h.bf16 %v1864
    %v1913 = vunpack.c.l.bf16 %v1865
    %v1914 = vunpack.c.h.bf16 %v1865
    %v1915 = vunpack.c.l.bf16 %v1866
    %v1916 = vunpack.c.h.bf16 %v1866
    %v1917 = vunpack.c.l.bf16 %v1867
    %v1918 = vunpack.c.h.bf16 %v1867
    %v1919 = vunpack.c.l.bf16 %v1868
    %v1920 = vunpack.c.h.bf16 %v1868
    %v1921 = vunpack.c.l.bf16 %v1869
    %v1922 = vunpack.c.h.bf16 %v1869
    %v1923 = vunpack.c.l.bf16 %v1870
    %v1924 = vunpack.c.h.bf16 %v1870
    %v1925 = vunpack.c.l.bf16 %v1871
    %v1926 = vunpack.c.h.bf16 %v1871
    %v1927 = vunpack.c.l.bf16 %v1872
    %v1928 = vunpack.c.h.bf16 %v1872
    %v1929 = vunpack.c.l.bf16 %v1873
    %v1930 = vunpack.c.h.bf16 %v1873
    %v1931 = vunpack.c.l.bf16 %v1874
    %v1932 = vunpack.c.h.bf16 %v1874
    %v1933 = vunpack.c.l.bf16 %v1875
    %v1934 = vunpack.c.h.bf16 %v1875
    %v1935 = vunpack.c.l.bf16 %v1876
    %v1936 = vunpack.c.h.bf16 %v1876
    %v1937 = vunpack.c.l.bf16 %v1877
    %v1938 = vunpack.c.h.bf16 %v1877
    %v1939 = vunpack.c.l.bf16 %v1878
    %v1940 = vunpack.c.h.bf16 %v1878
    %v1941 = vunpack.c.l.bf16 %v1879
    %v1942 = vunpack.c.h.bf16 %v1879
    %v1943 = vunpack.c.l.bf16 %v1880
    %v1944 = vunpack.c.h.bf16 %v1880
    %v1945 = vmul.f32 %v1881, %v641
    %v1946 = vmul.f32 %v1882, %v641
    %v1947 = vmul.f32 %v1883, %v641
    %v1948 = vmul.f32 %v1884, %v641
    %v1949 = vmul.f32 %v1885, %v641
    %v1950 = vmul.f32 %v1886, %v641
    %v1951 = vmul.f32 %v1887, %v641
    %v1952 = vmul.f32 %v1888, %v641
    %v1953 = vmul.f32 %v1889, %v641
    %v1954 = vmul.f32 %v1890, %v641
    %v1955 = vmul.f32 %v1891, %v641
    %v1956 = vmul.f32 %v1892, %v641
    %v1957 = vmul.f32 %v1893, %v641
    %v1958 = vmul.f32 %v1894, %v641
    %v1959 = vmul.f32 %v1895, %v641
    %v1960 = vmul.f32 %v1896, %v641
    %v1961 = vmul.f32 %v1897, %v641
    %v1962 = vmul.f32 %v1898, %v641
    %v1963 = vmul.f32 %v1899, %v641
    %v1964 = vmul.f32 %v1900, %v641
    %v1965 = vmul.f32 %v1901, %v641
    %v1966 = vmul.f32 %v1902, %v641
    %v1967 = vmul.f32 %v1903, %v641
    %v1968 = vmul.f32 %v1904, %v641
    %v1969 = vmul.f32 %v1905, %v641
    %v1970 = vmul.f32 %v1906, %v641
    %v1971 = vmul.f32 %v1907, %v641
    %v1972 = vmul.f32 %v1908, %v641
    %v1973 = vmul.f32 %v1909, %v641
    %v1974 = vmul.f32 %v1910, %v641
    %v1975 = vmul.f32 %v1911, %v641
    %v1976 = vmul.f32 %v1912, %v641
    %v1977 = vmul.f32 %v1913, %v641
    %v1978 = vmul.f32 %v1914, %v641
    %v1979 = vmul.f32 %v1915, %v641
    %v1980 = vmul.f32 %v1916, %v641
    %v1981 = vmul.f32 %v1917, %v641
    %v1982 = vmul.f32 %v1918, %v641
    %v1983 = vmul.f32 %v1919, %v641
    %v1984 = vmul.f32 %v1920, %v641
    %v1985 = vmul.f32 %v1921, %v641
    %v1986 = vmul.f32 %v1922, %v641
    %v1987 = vmul.f32 %v1923, %v641
    %v1988 = vmul.f32 %v1924, %v641
    %v1989 = vmul.f32 %v1925, %v641
    %v1990 = vmul.f32 %v1926, %v641
    %v1991 = vmul.f32 %v1927, %v641
    %v1992 = vmul.f32 %v1928, %v641
    %v1993 = vmul.f32 %v1929, %v641
    %v1994 = vmul.f32 %v1930, %v641
    %v1995 = vmul.f32 %v1931, %v641
    %v1996 = vmul.f32 %v1932, %v641
    %v1997 = vmul.f32 %v1933, %v641
    %v1998 = vmul.f32 %v1934, %v641
    %v1999 = vmul.f32 %v1935, %v641
    %v2000 = vmul.f32 %v1936, %v641
    %v2001 = vmul.f32 %v1937, %v641
    %v2002 = vmul.f32 %v1938, %v641
    %v2003 = vmul.f32 %v1939, %v641
    %v2004 = vmul.f32 %v1940, %v641
    %v2005 = vmul.f32 %v1941, %v641
    %v2006 = vmul.f32 %v1942, %v641
    %v2007 = vmul.f32 %v1943, %v641
    %v2008 = vmul.f32 %v1944, %v641
    %v2009 = vadd.f32 %v1945, %v1946
    %v2010 = vadd.f32 %v2009, %v1947
    %v2011 = vadd.f32 %v2010, %v1948
    %v2012 = vadd.f32 %v2011, %v1949
    %v2013 = vadd.f32 %v2012, %v1950
    %v2014 = vadd.f32 %v2013, %v1951
    %v2015 = vadd.f32 %v2014, %v1952
    %v2016 = vadd.f32 %v2015, %v1953
    %v2017 = vadd.f32 %v2016, %v1954
    %v2018 = vadd.f32 %v2017, %v1955
    %v2019 = vadd.f32 %v2018, %v1956
    %v2020 = vadd.f32 %v2019, %v1957
    %v2021 = vadd.f32 %v2020, %v1958
    %v2022 = vadd.f32 %v2021, %v1959
    %v2023 = vadd.f32 %v2022, %v1960
    %v2024 = vadd.f32 %v2023, %v1961
    %v2025 = vadd.f32 %v2024, %v1962
    %v2026 = vadd.f32 %v2025, %v1963
    %v2027 = vadd.f32 %v2026, %v1964
    %v2028 = vadd.f32 %v2027, %v1965
    %v2029 = vadd.f32 %v2028, %v1966
    %v2030 = vadd.f32 %v2029, %v1967
    %v2031 = vadd.f32 %v2030, %v1968
    %v2032 = vadd.f32 %v2031, %v1969
    %v2033 = vadd.f32 %v2032, %v1970
    %v2034 = vadd.f32 %v2033, %v1971
    %v2035 = vadd.f32 %v2034, %v1972
    %v2036 = vadd.f32 %v2035, %v1973
    %v2037 = vadd.f32 %v2036, %v1974
    %v2038 = vadd.f32 %v2037, %v1975
    %v2039 = vadd.f32 %v2038, %v1976
    %v2040 = vadd.f32 %v2039, %v1977
    %v2041 = vadd.f32 %v2040, %v1978
    %v2042 = vadd.f32 %v2041, %v1979
    %v2043 = vadd.f32 %v2042, %v1980
    %v2044 = vadd.f32 %v2043, %v1981
    %v2045 = vadd.f32 %v2044, %v1982
    %v2046 = vadd.f32 %v2045, %v1983
    %v2047 = vadd.f32 %v2046, %v1984
    %v2048 = vadd.f32 %v2047, %v1985
    %v2049 = vadd.f32 %v2048, %v1986
    %v2050 = vadd.f32 %v2049, %v1987
    %v2051 = vadd.f32 %v2050, %v1988
    %v2052 = vadd.f32 %v2051, %v1989
    %v2053 = vadd.f32 %v2052, %v1990
    %v2054 = vadd.f32 %v2053, %v1991
    %v2055 = vadd.f32 %v2054, %v1992
    %v2056 = vadd.f32 %v2055, %v1993
    %v2057 = vadd.f32 %v2056, %v1994
    %v2058 = vadd.f32 %v2057, %v1995
    %v2059 = vadd.f32 %v2058, %v1996
    %v2060 = vadd.f32 %v2059, %v1997
    %v2061 = vadd.f32 %v2060, %v1998
    %v2062 = vadd.f32 %v2061, %v1999
    %v2063 = vadd.f32 %v2062, %v2000
    %v2064 = vadd.f32 %v2063, %v2001
    %v2065 = vadd.f32 %v2064, %v2002
    %v2066 = vadd.f32 %v2065, %v2003
    %v2067 = vadd.f32 %v2066, %v2004
    %v2068 = vadd.f32 %v2067, %v2005
    %v2069 = vadd.f32 %v2068, %v2006
    %v2070 = vadd.f32 %v2069, %v2007
    %v2071 = vadd.f32 %v2070, %v2008
    %2072 = vadd.xlane.f32.xlu0 %v2071
    %v2073 = vpop.xlane.xlu0 %2072
    %v2074 = vrot.slane %v2073, 4
    %v2075 = vadd.f32 %v2073, %v2074
    %v2076 = vrot.slane %v2075, 2
    %v2077 = vadd.f32 %v2075, %v2076
    %v2078 = vrot.slane %v2077, 1
    %v2079 = vadd.f32 %v2077, %v2078
    %s2080 = vtos %v2079
    %s2081 = smul.f32 %s2080, 0.001953125
    %v2082 = vld [vmem:[#allocation5] sm:$0xff]
    %v2083 = vld [vmem:[#allocation5 + $0x8] sm:$0xff]
    %v2084 = vld [vmem:[#allocation5 + $0x10] sm:$0xff]
    %v2085 = vld [vmem:[#allocation5 + $0x18] sm:$0xff]
    %v2086 = vld [vmem:[#allocation5 + $0x20] sm:$0xff]
    %v2087 = vld [vmem:[#allocation5 + $0x28] sm:$0xff]
    %v2088 = vld [vmem:[#allocation5 + $0x30] sm:$0xff]
    %v2089 = vld [vmem:[#allocation5 + $0x38] sm:$0xff]
    %v2090 = vld [vmem:[#allocation5 + $0x40] sm:$0xff]
    %v2091 = vld [vmem:[#allocation5 + $0x48] sm:$0xff]
    %v2092 = vld [vmem:[#allocation5 + $0x50] sm:$0xff]
    %v2093 = vld [vmem:[#allocation5 + $0x58] sm:$0xff]
    %v2094 = vld [vmem:[#allocation5 + $0x60] sm:$0xff]
    %v2095 = vld [vmem:[#allocation5 + $0x68] sm:$0xff]
    %v2096 = vld [vmem:[#allocation5 + $0x70] sm:$0xff]
    %v2097 = vld [vmem:[#allocation5 + $0x78] sm:$0xff]
    %v2098 = vld [vmem:[#allocation5 + $0x80] sm:$0xff]
    %v2099 = vld [vmem:[#allocation5 + $0x88] sm:$0xff]
    %v2100 = vld [vmem:[#allocation5 + $0x90] sm:$0xff]
    %v2101 = vld [vmem:[#allocation5 + $0x98] sm:$0xff]
    %v2102 = vld [vmem:[#allocation5 + $0xa0] sm:$0xff]
    %v2103 = vld [vmem:[#allocation5 + $0xa8] sm:$0xff]
    %v2104 = vld [vmem:[#allocation5 + $0xb0] sm:$0xff]
    %v2105 = vld [vmem:[#allocation5 + $0xb8] sm:$0xff]
    %v2106 = vld [vmem:[#allocation5 + $0xc0] sm:$0xff]
    %v2107 = vld [vmem:[#allocation5 + $0xc8] sm:$0xff]
    %v2108 = vld [vmem:[#allocation5 + $0xd0] sm:$0xff]
    %v2109 = vld [vmem:[#allocation5 + $0xd8] sm:$0xff]
    %v2110 = vld [vmem:[#allocation5 + $0xe0] sm:$0xff]
    %v2111 = vld [vmem:[#allocation5 + $0xe8] sm:$0xff]
    %v2112 = vld [vmem:[#allocation5 + $0xf0] sm:$0xff]
    %v2113 = vld [vmem:[#allocation5 + $0xf8] sm:$0xff]
    %v2114 = vld [vmem:[#allocation5 + $0x100] sm:$0xff]
    %v2115 = vld [vmem:[#allocation5 + $0x108] sm:$0xff]
    %v2116 = vld [vmem:[#allocation5 + $0x110] sm:$0xff]
    %v2117 = vld [vmem:[#allocation5 + $0x118] sm:$0xff]
    %v2118 = vld [vmem:[#allocation5 + $0x120] sm:$0xff]
    %v2119 = vld [vmem:[#allocation5 + $0x128] sm:$0xff]
    %v2120 = vld [vmem:[#allocation5 + $0x130] sm:$0xff]
    %v2121 = vld [vmem:[#allocation5 + $0x138] sm:$0xff]
    %v2122 = vld [vmem:[#allocation5 + $0x140] sm:$0xff]
    %v2123 = vld [vmem:[#allocation5 + $0x148] sm:$0xff]
    %v2124 = vld [vmem:[#allocation5 + $0x150] sm:$0xff]
    %v2125 = vld [vmem:[#allocation5 + $0x158] sm:$0xff]
    %v2126 = vld [vmem:[#allocation5 + $0x160] sm:$0xff]
    %v2127 = vld [vmem:[#allocation5 + $0x168] sm:$0xff]
    %v2128 = vld [vmem:[#allocation5 + $0x170] sm:$0xff]
    %v2129 = vld [vmem:[#allocation5 + $0x178] sm:$0xff]
    %v2130 = vld [vmem:[#allocation5 + $0x180] sm:$0xff]
    %v2131 = vld [vmem:[#allocation5 + $0x188] sm:$0xff]
    %v2132 = vld [vmem:[#allocation5 + $0x190] sm:$0xff]
    %v2133 = vld [vmem:[#allocation5 + $0x198] sm:$0xff]
    %v2134 = vld [vmem:[#allocation5 + $0x1a0] sm:$0xff]
    %v2135 = vld [vmem:[#allocation5 + $0x1a8] sm:$0xff]
    %v2136 = vld [vmem:[#allocation5 + $0x1b0] sm:$0xff]
    %v2137 = vld [vmem:[#allocation5 + $0x1b8] sm:$0xff]
    %v2138 = vld [vmem:[#allocation5 + $0x1c0] sm:$0xff]
    %v2139 = vld [vmem:[#allocation5 + $0x1c8] sm:$0xff]
    %v2140 = vld [vmem:[#allocation5 + $0x1d0] sm:$0xff]
    %v2141 = vld [vmem:[#allocation5 + $0x1d8] sm:$0xff]
    %v2142 = vld [vmem:[#allocation5 + $0x1e0] sm:$0xff]
    %v2143 = vld [vmem:[#allocation5 + $0x1e8] sm:$0xff]
    %v2144 = vld [vmem:[#allocation5 + $0x1f0] sm:$0xff]
    %v2145 = vld [vmem:[#allocation5 + $0x1f8] sm:$0xff]
    %v2146 = vpack.c.bf16 %v2083, %v2082
    %v2147 = vpack.c.bf16 %v2085, %v2084
    %v2148 = vpack.c.bf16 %v2087, %v2086
    %v2149 = vpack.c.bf16 %v2089, %v2088
    %v2150 = vpack.c.bf16 %v2091, %v2090
    %v2151 = vpack.c.bf16 %v2093, %v2092
    %v2152 = vpack.c.bf16 %v2095, %v2094
    %v2153 = vpack.c.bf16 %v2097, %v2096
    %v2154 = vpack.c.bf16 %v2099, %v2098
    %v2155 = vpack.c.bf16 %v2101, %v2100
    %v2156 = vpack.c.bf16 %v2103, %v2102
    %v2157 = vpack.c.bf16 %v2105, %v2104
    %v2158 = vpack.c.bf16 %v2107, %v2106
    %v2159 = vpack.c.bf16 %v2109, %v2108
    %v2160 = vpack.c.bf16 %v2111, %v2110
    %v2161 = vpack.c.bf16 %v2113, %v2112
    %v2162 = vpack.c.bf16 %v2115, %v2114
    %v2163 = vpack.c.bf16 %v2117, %v2116
    %v2164 = vpack.c.bf16 %v2119, %v2118
    %v2165 = vpack.c.bf16 %v2121, %v2120
    %v2166 = vpack.c.bf16 %v2123, %v2122
    %v2167 = vpack.c.bf16 %v2125, %v2124
    %v2168 = vpack.c.bf16 %v2127, %v2126
    %v2169 = vpack.c.bf16 %v2129, %v2128
    %v2170 = vpack.c.bf16 %v2131, %v2130
    %v2171 = vpack.c.bf16 %v2133, %v2132
    %v2172 = vpack.c.bf16 %v2135, %v2134
    %v2173 = vpack.c.bf16 %v2137, %v2136
    %v2174 = vpack.c.bf16 %v2139, %v2138
    %v2175 = vpack.c.bf16 %v2141, %v2140
    %v2176 = vpack.c.bf16 %v2143, %v2142
    %v2177 = vpack.c.bf16 %v2145, %v2144
    %2178 = vmatprep.subr.bf16.mxu0 0
    %2179 = vmatpush1.bf16.msra.mxu0 %v203
    %2180 = vmatprep.subr.bf16.mxu0 0
    %2181 = vmatpush1.bf16.msra.mxu0 %v204
    %2182 = vmatprep.subr.bf16.mxu0 0
    %2183 = vmatpush1.bf16.msra.mxu0 %v205
    %2184 = vmatprep.subr.bf16.mxu0 0
    %2185 = vmatpush1.bf16.msra.mxu0 %v206
    %2186 = vmatprep.subr.bf16.mxu0 0
    %2187 = vmatpush1.bf16.msra.mxu0 %v207
    %2188 = vmatprep.subr.bf16.mxu0 0
    %2189 = vmatpush1.bf16.msra.mxu0 %v208
    %2190 = vmatprep.subr.bf16.mxu0 0
    %2191 = vmatpush1.bf16.msra.mxu0 %v209
    %2192 = vmatprep.subr.bf16.mxu0 0
    %2193 = vmatpush1.bf16.msra.mxu0 %v210
    %2194 = vmatprep.subr.bf16.mxu0 0
    %2195 = vmatpush1.bf16.msra.mxu0 0
    %2196 = vmatprep.subr.bf16.mxu0 0
    %2197 = vmatpush1.bf16.msra.mxu0 0
    %2198 = vmatprep.subr.bf16.mxu0 0
    %2199 = vmatpush1.bf16.msra.mxu0 0
    %2200 = vmatprep.subr.bf16.mxu0 0
    %2201 = vmatpush1.bf16.msra.mxu0 0
    %2202 = vmatprep.subr.bf16.mxu0 0
    %2203 = vmatpush1.bf16.msra.mxu0 0
    %2204 = vmatprep.subr.bf16.mxu0 0
    %2205 = vmatpush1.bf16.msra.mxu0 0
    %2206 = vmatprep.subr.bf16.mxu0 0
    %2207 = vmatpush1.bf16.msra.mxu0 0
    %2208 = vmatprep.subr.bf16.mxu0 0
    %2209 = vmatpush1.bf16.msra.mxu0 0
    %2210 = vmatprep.mubr.bf16.mxu0 0
    %2211 = vmatmul.mubr.bf16.gmra.mrb[0].mxu0 %v2146
    %v2212 = vpop.f32.mrb[0].mxu0
    %v2213 = vadd.f32 %v169, %v2212
    %v2214 = vpop.f32.mrb[0].mxu0
    %v2215 = vpop.f32.mrb[0].mxu0
    %v2216 = vadd.f32 %v169, %v2215
    %v2217 = vpop.f32.mrb[0].mxu0
    %2218 = vmatprep.mubr.bf16.mxu0 0
    %2219 = vmatmul.mubr.bf16.gmra.mrb[0].mxu0 %v2147
    %v2220 = vpop.f32.mrb[0].mxu0
    %v2221 = vadd.f32 %v169, %v2220
    %v2222 = vpop.f32.mrb[0].mxu0
    %v2223 = vpop.f32.mrb[0].mxu0
    %v2224 = vadd.f32 %v169, %v2223
    %v2225 = vpop.f32.mrb[0].mxu0
    %2226 = vmatprep.mubr.bf16.mxu0 0
    %2227 = vmatmul.mubr.bf16.gmra.mrb[0].mxu0 %v2148
    %v2228 = vpop.f32.mrb[0].mxu0
    %v2229 = vadd.f32 %v169, %v2228
    %v2230 = vpop.f32.mrb[0].mxu0
    %v2231 = vpop.f32.mrb[0].mxu0
    %v2232 = vadd.f32 %v169, %v2231
    %v2233 = vpop.f32.mrb[0].mxu0
    %2234 = vmatprep.mubr.bf16.mxu0 0
    %2235 = vmatmul.mubr.bf16.gmra.mrb[0].mxu0 %v2149
    %v2236 = vpop.f32.mrb[0].mxu0
    %v2237 = vadd.f32 %v169, %v2236
    %v2238 = vpop.f32.mrb[0].mxu0
    %v2239 = vpop.f32.mrb[0].mxu0
    %v2240 = vadd.f32 %v169, %v2239
    %v2241 = vpop.f32.mrb[0].mxu0
    %2242 = vmatprep.mubr.bf16.mxu0 0
    %2243 = vmatmul.mubr.bf16.gmra.mrb[0].mxu0 %v2150
    %v2244 = vpop.f32.mrb[0].mxu0
    %v2245 = vadd.f32 %v169, %v2244
    %v2246 = vpop.f32.mrb[0].mxu0
    %v2247 = vpop.f32.mrb[0].mxu0
    %v2248 = vadd.f32 %v169, %v2247
    %v2249 = vpop.f32.mrb[0].mxu0
    %2250 = vmatprep.mubr.bf16.mxu0 0
    %2251 = vmatmul.mubr.bf16.gmra.mrb[0].mxu0 %v2151
    %v2252 = vpop.f32.mrb[0].mxu0
    %v2253 = vadd.f32 %v169, %v2252
    %v2254 = vpop.f32.mrb[0].mxu0
    %v2255 = vpop.f32.mrb[0].mxu0
    %v2256 = vadd.f32 %v169, %v2255
    %v2257 = vpop.f32.mrb[0].mxu0
    %2258 = vmatprep.mubr.bf16.mxu0 0
    %2259 = vmatmul.mubr.bf16.gmra.mrb[0].mxu0 %v2152
    %v2260 = vpop.f32.mrb[0].mxu0
    %v2261 = vadd.f32 %v169, %v2260
    %v2262 = vpop.f32.mrb[0].mxu0
    %v2263 = vpop.f32.mrb[0].mxu0
    %v2264 = vadd.f32 %v169, %v2263
    %v2265 = vpop.f32.mrb[0].mxu0
    %2266 = vmatprep.mubr.bf16.mxu0 0
    %2267 = vmatmul.mubr.bf16.gmra.mrb[0].mxu0 %v2153
    %v2268 = vpop.f32.mrb[0].mxu0
    %v2269 = vadd.f32 %v169, %v2268
    %v2270 = vpop.f32.mrb[0].mxu0
    %v2271 = vpop.f32.mrb[0].mxu0
    %v2272 = vadd.f32 %v169, %v2271
    %v2273 = vpop.f32.mrb[0].mxu0
    %2274 = vmatprep.mubr.bf16.mxu0 0
    %2275 = vmatmul.mubr.bf16.gmra.mrb[0].mxu0 %v2154
    %v2276 = vpop.f32.mrb[0].mxu0
    %v2277 = vadd.f32 %v169, %v2276
    %v2278 = vpop.f32.mrb[0].mxu0
    %v2279 = vpop.f32.mrb[0].mxu0
    %v2280 = vadd.f32 %v169, %v2279
    %v2281 = vpop.f32.mrb[0].mxu0
    %2282 = vmatprep.mubr.bf16.mxu0 0
    %2283 = vmatmul.mubr.bf16.gmra.mrb[0].mxu0 %v2155
    %v2284 = vpop.f32.mrb[0].mxu0
    %v2285 = vadd.f32 %v169, %v2284
    %v2286 = vpop.f32.mrb[0].mxu0
    %v2287 = vpop.f32.mrb[0].mxu0
    %v2288 = vadd.f32 %v169, %v2287
    %v2289 = vpop.f32.mrb[0].mxu0
    %2290 = vmatprep.mubr.bf16.mxu0 0
    %2291 = vmatmul.mubr.bf16.gmra.mrb[0].mxu0 %v2156
    %v2292 = vpop.f32.mrb[0].mxu0
    %v2293 = vadd.f32 %v169, %v2292
    %v2294 = vpop.f32.mrb[0].mxu0
    %v2295 = vpop.f32.mrb[0].mxu0
    %v2296 = vadd.f32 %v169, %v2295
    %v2297 = vpop.f32.mrb[0].mxu0
    %2298 = vmatprep.mubr.bf16.mxu0 0
    %2299 = vmatmul.mubr.bf16.gmra.mrb[0].mxu0 %v2157
    %v2300 = vpop.f32.mrb[0].mxu0
    %v2301 = vadd.f32 %v169, %v2300
    %v2302 = vpop.f32.mrb[0].mxu0
    %v2303 = vpop.f32.mrb[0].mxu0
    %v2304 = vadd.f32 %v169, %v2303
    %v2305 = vpop.f32.mrb[0].mxu0
    %2306 = vmatprep.mubr.bf16.mxu0 0
    %2307 = vmatmul.mubr.bf16.gmra.mrb[0].mxu0 %v2158
    %v2308 = vpop.f32.mrb[0].mxu0
    %v2309 = vadd.f32 %v169, %v2308
    %v2310 = vpop.f32.mrb[0].mxu0
    %v2311 = vpop.f32.mrb[0].mxu0
    %v2312 = vadd.f32 %v169, %v2311
    %v2313 = vpop.f32.mrb[0].mxu0
    %2314 = vmatprep.mubr.bf16.mxu0 0
    %2315 = vmatmul.mubr.bf16.gmra.mrb[0].mxu0 %v2159
    %v2316 = vpop.f32.mrb[0].mxu0
    %v2317 = vadd.f32 %v169, %v2316
    %v2318 = vpop.f32.mrb[0].mxu0
    %v2319 = vpop.f32.mrb[0].mxu0
    %v2320 = vadd.f32 %v169, %v2319
    %v2321 = vpop.f32.mrb[0].mxu0
    %2322 = vmatprep.mubr.bf16.mxu0 0
    %2323 = vmatmul.mubr.bf16.gmra.mrb[0].mxu0 %v2160
    %v2324 = vpop.f32.mrb[0].mxu0
    %v2325 = vadd.f32 %v169, %v2324
    %v2326 = vpop.f32.mrb[0].mxu0
    %v2327 = vpop.f32.mrb[0].mxu0
    %v2328 = vadd.f32 %v169, %v2327
    %v2329 = vpop.f32.mrb[0].mxu0
    %2330 = vmatprep.mubr.bf16.mxu0 0
    %2331 = vmatmul.mubr.bf16.gmra.mrb[0].mxu0 %v2161
    %v2332 = vpop.f32.mrb[0].mxu0
    %v2333 = vadd.f32 %v169, %v2332
    %v2334 = vpop.f32.mrb[0].mxu0
    %v2335 = vpop.f32.mrb[0].mxu0
    %v2336 = vadd.f32 %v169, %v2335
    %v2337 = vpop.f32.mrb[0].mxu0
    %2338 = vmatprep.mubr.bf16.mxu0 0
    %2339 = vmatmul.mubr.bf16.gmra.mrb[0].mxu0 %v2162
    %v2340 = vpop.f32.mrb[0].mxu0
    %v2341 = vadd.f32 %v169, %v2340
    %v2342 = vpop.f32.mrb[0].mxu0
    %v2343 = vpop.f32.mrb[0].mxu0
    %v2344 = vadd.f32 %v169, %v2343
    %v2345 = vpop.f32.mrb[0].mxu0
    %2346 = vmatprep.mubr.bf16.mxu0 0
    %2347 = vmatmul.mubr.bf16.gmra.mrb[0].mxu0 %v2163
    %v2348 = vpop.f32.mrb[0].mxu0
    %v2349 = vadd.f32 %v169, %v2348
    %v2350 = vpop.f32.mrb[0].mxu0
    %v2351 = vpop.f32.mrb[0].mxu0
    %v2352 = vadd.f32 %v169, %v2351
    %v2353 = vpop.f32.mrb[0].mxu0
    %2354 = vmatprep.mubr.bf16.mxu0 0
    %2355 = vmatmul.mubr.bf16.gmra.mrb[0].mxu0 %v2164
    %v2356 = vpop.f32.mrb[0].mxu0
    %v2357 = vadd.f32 %v169, %v2356
    %v2358 = vpop.f32.mrb[0].mxu0
    %v2359 = vpop.f32.mrb[0].mxu0
    %v2360 = vadd.f32 %v169, %v2359
    %v2361 = vpop.f32.mrb[0].mxu0
    %2362 = vmatprep.mubr.bf16.mxu0 0
    %2363 = vmatmul.mubr.bf16.gmra.mrb[0].mxu0 %v2165
    %v2364 = vpop.f32.mrb[0].mxu0
    %v2365 = vadd.f32 %v169, %v2364
    %v2366 = vpop.f32.mrb[0].mxu0
    %v2367 = vpop.f32.mrb[0].mxu0
    %v2368 = vadd.f32 %v169, %v2367
    %v2369 = vpop.f32.mrb[0].mxu0
    %2370 = vmatprep.mubr.bf16.mxu0 0
    %2371 = vmatmul.mubr.bf16.gmra.mrb[0].mxu0 %v2166
    %v2372 = vpop.f32.mrb[0].mxu0
    %v2373 = vadd.f32 %v169, %v2372
    %v2374 = vpop.f32.mrb[0].mxu0
    %v2375 = vpop.f32.mrb[0].mxu0
    %v2376 = vadd.f32 %v169, %v2375
    %v2377 = vpop.f32.mrb[0].mxu0
    %2378 = vmatprep.mubr.bf16.mxu0 0
    %2379 = vmatmul.mubr.bf16.gmra.mrb[0].mxu0 %v2167
    %v2380 = vpop.f32.mrb[0].mxu0
    %v2381 = vadd.f32 %v169, %v2380
    %v2382 = vpop.f32.mrb[0].mxu0
    %v2383 = vpop.f32.mrb[0].mxu0
    %v2384 = vadd.f32 %v169, %v2383
    %v2385 = vpop.f32.mrb[0].mxu0
    %2386 = vmatprep.mubr.bf16.mxu0 0
    %2387 = vmatmul.mubr.bf16.gmra.mrb[0].mxu0 %v2168
    %v2388 = vpop.f32.mrb[0].mxu0
    %v2389 = vadd.f32 %v169, %v2388
    %v2390 = vpop.f32.mrb[0].mxu0
    %v2391 = vpop.f32.mrb[0].mxu0
    %v2392 = vadd.f32 %v169, %v2391
    %v2393 = vpop.f32.mrb[0].mxu0
    %2394 = vmatprep.mubr.bf16.mxu0 0
    %2395 = vmatmul.mubr.bf16.gmra.mrb[0].mxu0 %v2169
    %v2396 = vpop.f32.mrb[0].mxu0
    %v2397 = vadd.f32 %v169, %v2396
    %v2398 = vpop.f32.mrb[0].mxu0
    %v2399 = vpop.f32.mrb[0].mxu0
    %v2400 = vadd.f32 %v169, %v2399
    %v2401 = vpop.f32.mrb[0].mxu0
    %2402 = vmatprep.mubr.bf16.mxu0 0
    %2403 = vmatmul.mubr.bf16.gmra.mrb[0].mxu0 %v2170
    %v2404 = vpop.f32.mrb[0].mxu0
    %v2405 = vadd.f32 %v169, %v2404
    %v2406 = vpop.f32.mrb[0].mxu0
    %v2407 = vpop.f32.mrb[0].mxu0
    %v2408 = vadd.f32 %v169, %v2407
    %v2409 = vpop.f32.mrb[0].mxu0
    %2410 = vmatprep.mubr.bf16.mxu0 0
    %2411 = vmatmul.mubr.bf16.gmra.mrb[0].mxu0 %v2171
    %v2412 = vpop.f32.mrb[0].mxu0
    %v2413 = vadd.f32 %v169, %v2412
    %v2414 = vpop.f32.mrb[0].mxu0
    %v2415 = vpop.f32.mrb[0].mxu0
    %v2416 = vadd.f32 %v169, %v2415
    %v2417 = vpop.f32.mrb[0].mxu0
    %2418 = vmatprep.mubr.bf16.mxu0 0
    %2419 = vmatmul.mubr.bf16.gmra.mrb[0].mxu0 %v2172
    %v2420 = vpop.f32.mrb[0].mxu0
    %v2421 = vadd.f32 %v169, %v2420
    %v2422 = vpop.f32.mrb[0].mxu0
    %v2423 = vpop.f32.mrb[0].mxu0
    %v2424 = vadd.f32 %v169, %v2423
    %v2425 = vpop.f32.mrb[0].mxu0
    %2426 = vmatprep.mubr.bf16.mxu0 0
    %2427 = vmatmul.mubr.bf16.gmra.mrb[0].mxu0 %v2173
    %v2428 = vpop.f32.mrb[0].mxu0
    %v2429 = vadd.f32 %v169, %v2428
    %v2430 = vpop.f32.mrb[0].mxu0
    %v2431 = vpop.f32.mrb[0].mxu0
    %v2432 = vadd.f32 %v169, %v2431
    %v2433 = vpop.f32.mrb[0].mxu0
    %2434 = vmatprep.mubr.bf16.mxu0 0
    %2435 = vmatmul.mubr.bf16.gmra.mrb[0].mxu0 %v2174
    %v2436 = vpop.f32.mrb[0].mxu0
    %v2437 = vadd.f32 %v169, %v2436
    %v2438 = vpop.f32.mrb[0].mxu0
    %v2439 = vpop.f32.mrb[0].mxu0
    %v2440 = vadd.f32 %v169, %v2439
    %v2441 = vpop.f32.mrb[0].mxu0
    %2442 = vmatprep.mubr.bf16.mxu0 0
    %2443 = vmatmul.mubr.bf16.gmra.mrb[0].mxu0 %v2175
    %v2444 = vpop.f32.mrb[0].mxu0
    %v2445 = vadd.f32 %v169, %v2444
    %v2446 = vpop.f32.mrb[0].mxu0
    %v2447 = vpop.f32.mrb[0].mxu0
    %v2448 = vadd.f32 %v169, %v2447
    %v2449 = vpop.f32.mrb[0].mxu0
    %2450 = vmatprep.mubr.bf16.mxu0 0
    %2451 = vmatmul.mubr.bf16.gmra.mrb[0].mxu0 %v2176
    %v2452 = vpop.f32.mrb[0].mxu0
    %v2453 = vadd.f32 %v169, %v2452
    %v2454 = vpop.f32.mrb[0].mxu0
    %v2455 = vpop.f32.mrb[0].mxu0
    %v2456 = vadd.f32 %v169, %v2455
    %v2457 = vpop.f32.mrb[0].mxu0
    %2458 = vmatprep.mubr.bf16.mxu0 0
    %2459 = vmatmul.mubr.bf16.gmra.mrb[0].mxu0 %v2177
    %v2460 = vpop.f32.mrb[0].mxu0
    %v2461 = vadd.f32 %v169, %v2460
    %v2462 = vpop.f32.mrb[0].mxu0
    %v2463 = vpop.f32.mrb[0].mxu0
    %v2464 = vadd.f32 %v169, %v2463
    %v2465 = vpop.f32.mrb[0].mxu0
    %2466 = vdwg.mxu0
    %v2467 = vpack.c.bf16 %v2216, %v2213
    %v2468 = vpack.c.bf16 %v2224, %v2221
    %v2469 = vpack.c.bf16 %v2232, %v2229
    %v2470 = vpack.c.bf16 %v2240, %v2237
    %v2471 = vpack.c.bf16 %v2248, %v2245
    %v2472 = vpack.c.bf16 %v2256, %v2253
    %v2473 = vpack.c.bf16 %v2264, %v2261
    %v2474 = vpack.c.bf16 %v2272, %v2269
    %v2475 = vpack.c.bf16 %v2280, %v2277
    %v2476 = vpack.c.bf16 %v2288, %v2285
    %v2477 = vpack.c.bf16 %v2296, %v2293
    %v2478 = vpack.c.bf16 %v2304, %v2301
    %v2479 = vpack.c.bf16 %v2312, %v2309
    %v2480 = vpack.c.bf16 %v2320, %v2317
    %v2481 = vpack.c.bf16 %v2328, %v2325
    %v2482 = vpack.c.bf16 %v2336, %v2333
    %v2483 = vpack.c.bf16 %v2344, %v2341
    %v2484 = vpack.c.bf16 %v2352, %v2349
    %v2485 = vpack.c.bf16 %v2360, %v2357
    %v2486 = vpack.c.bf16 %v2368, %v2365
    %v2487 = vpack.c.bf16 %v2376, %v2373
    %v2488 = vpack.c.bf16 %v2384, %v2381
    %v2489 = vpack.c.bf16 %v2392, %v2389
    %v2490 = vpack.c.bf16 %v2400, %v2397
    %v2491 = vpack.c.bf16 %v2408, %v2405
    %v2492 = vpack.c.bf16 %v2416, %v2413
    %v2493 = vpack.c.bf16 %v2424, %v2421
    %v2494 = vpack.c.bf16 %v2432, %v2429
    %v2495 = vpack.c.bf16 %v2440, %v2437
    %v2496 = vpack.c.bf16 %v2448, %v2445
    %v2497 = vpack.c.bf16 %v2456, %v2453
    %v2498 = vpack.c.bf16 %v2464, %v2461
    %v2499 = vtanh.bf16.pop %v2467
    %v2500 = vtanh.bf16.pop %v2468
    %v2501 = vtanh.bf16.pop %v2469
    %v2502 = vtanh.bf16.pop %v2470
    %v2503 = vtanh.bf16.pop %v2471
    %v2504 = vtanh.bf16.pop %v2472
    %v2505 = vtanh.bf16.pop %v2473
    %v2506 = vtanh.bf16.pop %v2474
    %v2507 = vtanh.bf16.pop %v2475
    %v2508 = vtanh.bf16.pop %v2476
    %v2509 = vtanh.bf16.pop %v2477
    %v2510 = vtanh.bf16.pop %v2478
    %v2511 = vtanh.bf16.pop %v2479
    %v2512 = vtanh.bf16.pop %v2480
    %v2513 = vtanh.bf16.pop %v2481
    %v2514 = vtanh.bf16.pop %v2482
    %v2515 = vtanh.bf16.pop %v2483
    %v2516 = vtanh.bf16.pop %v2484
    %v2517 = vtanh.bf16.pop %v2485
    %v2518 = vtanh.bf16.pop %v2486
    %v2519 = vtanh.bf16.pop %v2487
    %v2520 = vtanh.bf16.pop %v2488
    %v2521 = vtanh.bf16.pop %v2489
    %v2522 = vtanh.bf16.pop %v2490
    %v2523 = vtanh.bf16.pop %v2491
    %v2524 = vtanh.bf16.pop %v2492
    %v2525 = vtanh.bf16.pop %v2493
    %v2526 = vtanh.bf16.pop %v2494
    %v2527 = vtanh.bf16.pop %v2495
    %v2528 = vtanh.bf16.pop %v2496
    %v2529 = vtanh.bf16.pop %v2497
    %v2530 = vtanh.bf16.pop %v2498
    %v2531 = vunpack.c.l.bf16 %v2499
    %v2532 = vunpack.c.h.bf16 %v2499
    %v2533 = vunpack.c.l.bf16 %v2500
    %v2534 = vunpack.c.h.bf16 %v2500
    %v2535 = vunpack.c.l.bf16 %v2501
    %v2536 = vunpack.c.h.bf16 %v2501
    %v2537 = vunpack.c.l.bf16 %v2502
    %v2538 = vunpack.c.h.bf16 %v2502
    %v2539 = vunpack.c.l.bf16 %v2503
    %v2540 = vunpack.c.h.bf16 %v2503
    %v2541 = vunpack.c.l.bf16 %v2504
    %v2542 = vunpack.c.h.bf16 %v2504
    %v2543 = vunpack.c.l.bf16 %v2505
    %v2544 = vunpack.c.h.bf16 %v2505
    %v2545 = vunpack.c.l.bf16 %v2506
    %v2546 = vunpack.c.h.bf16 %v2506
    %v2547 = vunpack.c.l.bf16 %v2507
    %v2548 = vunpack.c.h.bf16 %v2507
    %v2549 = vunpack.c.l.bf16 %v2508
    %v2550 = vunpack.c.h.bf16 %v2508
    %v2551 = vunpack.c.l.bf16 %v2509
    %v2552 = vunpack.c.h.bf16 %v2509
    %v2553 = vunpack.c.l.bf16 %v2510
    %v2554 = vunpack.c.h.bf16 %v2510
    %v2555 = vunpack.c.l.bf16 %v2511
    %v2556 = vunpack.c.h.bf16 %v2511
    %v2557 = vunpack.c.l.bf16 %v2512
    %v2558 = vunpack.c.h.bf16 %v2512
    %v2559 = vunpack.c.l.bf16 %v2513
    %v2560 = vunpack.c.h.bf16 %v2513
    %v2561 = vunpack.c.l.bf16 %v2514
    %v2562 = vunpack.c.h.bf16 %v2514
    %v2563 = vunpack.c.l.bf16 %v2515
    %v2564 = vunpack.c.h.bf16 %v2515
    %v2565 = vunpack.c.l.bf16 %v2516
    %v2566 = vunpack.c.h.bf16 %v2516
    %v2567 = vunpack.c.l.bf16 %v2517
    %v2568 = vunpack.c.h.bf16 %v2517
    %v2569 = vunpack.c.l.bf16 %v2518
    %v2570 = vunpack.c.h.bf16 %v2518
    %v2571 = vunpack.c.l.bf16 %v2519
    %v2572 = vunpack.c.h.bf16 %v2519
    %v2573 = vunpack.c.l.bf16 %v2520
    %v2574 = vunpack.c.h.bf16 %v2520
    %v2575 = vunpack.c.l.bf16 %v2521
    %v2576 = vunpack.c.h.bf16 %v2521
    %v2577 = vunpack.c.l.bf16 %v2522
    %v2578 = vunpack.c.h.bf16 %v2522
    %v2579 = vunpack.c.l.bf16 %v2523
    %v2580 = vunpack.c.h.bf16 %v2523
    %v2581 = vunpack.c.l.bf16 %v2524
    %v2582 = vunpack.c.h.bf16 %v2524
    %v2583 = vunpack.c.l.bf16 %v2525
    %v2584 = vunpack.c.h.bf16 %v2525
    %v2585 = vunpack.c.l.bf16 %v2526
    %v2586 = vunpack.c.h.bf16 %v2526
    %v2587 = vunpack.c.l.bf16 %v2527
    %v2588 = vunpack.c.h.bf16 %v2527
    %v2589 = vunpack.c.l.bf16 %v2528
    %v2590 = vunpack.c.h.bf16 %v2528
    %v2591 = vunpack.c.l.bf16 %v2529
    %v2592 = vunpack.c.h.bf16 %v2529
    %v2593 = vunpack.c.l.bf16 %v2530
    %v2594 = vunpack.c.h.bf16 %v2530
    %v2595 = vmul.f32 %v2531, %v641
    %v2596 = vmul.f32 %v2532, %v641
    %v2597 = vmul.f32 %v2533, %v641
    %v2598 = vmul.f32 %v2534, %v641
    %v2599 = vmul.f32 %v2535, %v641
    %v2600 = vmul.f32 %v2536, %v641
    %v2601 = vmul.f32 %v2537, %v641
    %v2602 = vmul.f32 %v2538, %v641
    %v2603 = vmul.f32 %v2539, %v641
    %v2604 = vmul.f32 %v2540, %v641
    %v2605 = vmul.f32 %v2541, %v641
    %v2606 = vmul.f32 %v2542, %v641
    %v2607 = vmul.f32 %v2543, %v641
    %v2608 = vmul.f32 %v2544, %v641
    %v2609 = vmul.f32 %v2545, %v641
    %v2610 = vmul.f32 %v2546, %v641
    %v2611 = vmul.f32 %v2547, %v641
    %v2612 = vmul.f32 %v2548, %v641
    %v2613 = vmul.f32 %v2549, %v641
    %v2614 = vmul.f32 %v2550, %v641
    %v2615 = vmul.f32 %v2551, %v641
    %v2616 = vmul.f32 %v2552, %v641
    %v2617 = vmul.f32 %v2553, %v641
    %v2618 = vmul.f32 %v2554, %v641
    %v2619 = vmul.f32 %v2555, %v641
    %v2620 = vmul.f32 %v2556, %v641
    %v2621 = vmul.f32 %v2557, %v641
    %v2622 = vmul.f32 %v2558, %v641
    %v2623 = vmul.f32 %v2559, %v641
    %v2624 = vmul.f32 %v2560, %v641
    %v2625 = vmul.f32 %v2561, %v641
    %v2626 = vmul.f32 %v2562, %v641
    %v2627 = vmul.f32 %v2563, %v641
    %v2628 = vmul.f32 %v2564, %v641
    %v2629 = vmul.f32 %v2565, %v641
    %v2630 = vmul.f32 %v2566, %v641
    %v2631 = vmul.f32 %v2567, %v641
    %v2632 = vmul.f32 %v2568, %v641
    %v2633 = vmul.f32 %v2569, %v641
    %v2634 = vmul.f32 %v2570, %v641
    %v2635 = vmul.f32 %v2571, %v641
    %v2636 = vmul.f32 %v2572, %v641
    %v2637 = vmul.f32 %v2573, %v641
    %v2638 = vmul.f32 %v2574, %v641
    %v2639 = vmul.f32 %v2575, %v641
    %v2640 = vmul.f32 %v2576, %v641
    %v2641 = vmul.f32 %v2577, %v641
    %v2642 = vmul.f32 %v2578, %v641
    %v2643 = vmul.f32 %v2579, %v641
    %v2644 = vmul.f32 %v2580, %v641
    %v2645 = vmul.f32 %v2581, %v641
    %v2646 = vmul.f32 %v2582, %v641
    %v2647 = vmul.f32 %v2583, %v641
    %v2648 = vmul.f32 %v2584, %v641
    %v2649 = vmul.f32 %v2585, %v641
    %v2650 = vmul.f32 %v2586, %v641
    %v2651 = vmul.f32 %v2587, %v641
    %v2652 = vmul.f32 %v2588, %v641
    %v2653 = vmul.f32 %v2589, %v641
    %v2654 = vmul.f32 %v2590, %v641
    %v2655 = vmul.f32 %v2591, %v641
    %v2656 = vmul.f32 %v2592, %v641
    %v2657 = vmul.f32 %v2593, %v641
    %v2658 = vmul.f32 %v2594, %v641
    %v2659 = vadd.f32 %v2595, %v2596
    %v2660 = vadd.f32 %v2659, %v2597
    %v2661 = vadd.f32 %v2660, %v2598
    %v2662 = vadd.f32 %v2661, %v2599
    %v2663 = vadd.f32 %v2662, %v2600
    %v2664 = vadd.f32 %v2663, %v2601
    %v2665 = vadd.f32 %v2664, %v2602
    %v2666 = vadd.f32 %v2665, %v2603
    %v2667 = vadd.f32 %v2666, %v2604
    %v2668 = vadd.f32 %v2667, %v2605
    %v2669 = vadd.f32 %v2668, %v2606
    %v2670 = vadd.f32 %v2669, %v2607
    %v2671 = vadd.f32 %v2670, %v2608
    %v2672 = vadd.f32 %v2671, %v2609
    %v2673 = vadd.f32 %v2672, %v2610
    %v2674 = vadd.f32 %v2673, %v2611
    %v2675 = vadd.f32 %v2674, %v2612
    %v2676 = vadd.f32 %v2675, %v2613
    %v2677 = vadd.f32 %v2676, %v2614
    %v2678 = vadd.f32 %v2677, %v2615
    %v2679 = vadd.f32 %v2678, %v2616
    %v2680 = vadd.f32 %v2679, %v2617
    %v2681 = vadd.f32 %v2680, %v2618
    %v2682 = vadd.f32 %v2681, %v2619
    %v2683 = vadd.f32 %v2682, %v2620
    %v2684 = vadd.f32 %v2683, %v2621
    %v2685 = vadd.f32 %v2684, %v2622
    %v2686 = vadd.f32 %v2685, %v2623
    %v2687 = vadd.f32 %v2686, %v2624
    %v2688 = vadd.f32 %v2687, %v2625
    %v2689 = vadd.f32 %v2688, %v2626
    %v2690 = vadd.f32 %v2689, %v2627
    %v2691 = vadd.f32 %v2690, %v2628
    %v2692 = vadd.f32 %v2691, %v2629
    %v2693 = vadd.f32 %v2692, %v2630
    %v2694 = vadd.f32 %v2693, %v2631
    %v2695 = vadd.f32 %v2694, %v2632
    %v2696 = vadd.f32 %v2695, %v2633
    %v2697 = vadd.f32 %v2696, %v2634
    %v2698 = vadd.f32 %v2697, %v2635
    %v2699 = vadd.f32 %v2698, %v2636
    %v2700 = vadd.f32 %v2699, %v2637
    %v2701 = vadd.f32 %v2700, %v2638
    %v2702 = vadd.f32 %v2701, %v2639
    %v2703 = vadd.f32 %v2702, %v2640
    %v2704 = vadd.f32 %v2703, %v2641
    %v2705 = vadd.f32 %v2704, %v2642
    %v2706 = vadd.f32 %v2705, %v2643
    %v2707 = vadd.f32 %v2706, %v2644
    %v2708 = vadd.f32 %v2707, %v2645
    %v2709 = vadd.f32 %v2708, %v2646
    %v2710 = vadd.f32 %v2709, %v2647
    %v2711 = vadd.f32 %v2710, %v2648
    %v2712 = vadd.f32 %v2711, %v2649
    %v2713 = vadd.f32 %v2712, %v2650
    %v2714 = vadd.f32 %v2713, %v2651
    %v2715 = vadd.f32 %v2714, %v2652
    %v2716 = vadd.f32 %v2715, %v2653
    %v2717 = vadd.f32 %v2716, %v2654
    %v2718 = vadd.f32 %v2717, %v2655
    %v2719 = vadd.f32 %v2718, %v2656
    %v2720 = vadd.f32 %v2719, %v2657
    %v2721 = vadd.f32 %v2720, %v2658
    %2722 = vadd.xlane.f32.xlu0 %v2721
    %v2723 = vpop.xlane.xlu0 %2722
    %v2724 = vrot.slane %v2723, 4
    %v2725 = vadd.f32 %v2723, %v2724
    %v2726 = vrot.slane %v2725, 2
    %v2727 = vadd.f32 %v2725, %v2726
    %v2728 = vrot.slane %v2727, 1
    %v2729 = vadd.f32 %v2727, %v2728
    %s2730 = vtos %v2729
    %s2731 = smul.f32 %s2730, 0.001953125
    %s2732 = smax.f32 %s779, %s1430
    %s2733 = smax.f32 %s2732, %s2081
    %s2734 = smax.f32 %s2733, %s2731
    %s2735 = ssub.f32 %s779, %s2734
    %v2736 = vstv %s2735
    %v2737 = vmul.f32 %v2736, 1.442695
    %v2738 = vpow.pop %v2737
    %s2739 = vtos %v2738
    %s2740 = ssub.f32 %s1430, %s2734
    %v2741 = vstv %s2740
    %v2742 = vmul.f32 %v2741, 1.442695
    %v2743 = vpow.pop %v2742
    %s2744 = vtos %v2743
    %s2745 = ssub.f32 %s2081, %s2734
    %v2746 = vstv %s2745
    %v2747 = vmul.f32 %v2746, 1.442695
    %v2748 = vpow.pop %v2747
    %s2749 = vtos %v2748
    %s2750 = ssub.f32 %s2731, %s2734
    %v2751 = vstv %s2750
    %v2752 = vmul.f32 %v2751, 1.442695
    %v2753 = vpow.pop %v2752
    %s2754 = vtos %v2753
    %s2755 = sadd.f32 %s2739, %s2744
    %s2756 = sadd.f32 %s2755, %s2749
    %s2757 = sadd.f32 %s2756, %s2754
    %v2758 = vstv %s2757
    %v2759 = vrcp.pop %v2758
    %s2760 = vtos %v2759
    %s2761 = smul.f32 %s2739, %s2760
    %s2762 = smul.f32 %s2744, %s2760
    %s2763 = smul.f32 %s2749, %s2760
    %s2764 = smul.f32 %s2754, %s2760
    %v2765 = vunpack.c.l.bf16 %v116
    %v2766 = vunpack.c.h.bf16 %v116
    %v2767 = vunpack.c.l.bf16 %v117
    %v2768 = vunpack.c.h.bf16 %v117
    %v2769 = vunpack.c.l.bf16 %v118
    %v2770 = vunpack.c.h.bf16 %v118
    %v2771 = vunpack.c.l.bf16 %v119
    %v2772 = vunpack.c.h.bf16 %v119
    %v2773 = vunpack.c.l.bf16 %v120
    %v2774 = vunpack.c.h.bf16 %v120
    %v2775 = vunpack.c.l.bf16 %v121
    %v2776 = vunpack.c.h.bf16 %v121
    %v2777 = vunpack.c.l.bf16 %v122
    %v2778 = vunpack.c.h.bf16 %v122
    %v2779 = vunpack.c.l.bf16 %v123
    %v2780 = vunpack.c.h.bf16 %v123
    %v2781 = vunpack.c.l.bf16 %v124
    %v2782 = vunpack.c.h.bf16 %v124
    %v2783 = vunpack.c.l.bf16 %v125
    %v2784 = vunpack.c.h.bf16 %v125
    %v2785 = vunpack.c.l.bf16 %v126
    %v2786 = vunpack.c.h.bf16 %v126
    %v2787 = vunpack.c.l.bf16 %v127
    %v2788 = vunpack.c.h.bf16 %v127
    %v2789 = vunpack.c.l.bf16 %v128
    %v2790 = vunpack.c.h.bf16 %v128
    %v2791 = vunpack.c.l.bf16 %v129
    %v2792 = vunpack.c.h.bf16 %v129
    %v2793 = vunpack.c.l.bf16 %v130
    %v2794 = vunpack.c.h.bf16 %v130
    %v2795 = vunpack.c.l.bf16 %v131
    %v2796 = vunpack.c.h.bf16 %v131
    %v2797 = vunpack.c.l.bf16 %v132
    %v2798 = vunpack.c.h.bf16 %v132
    %v2799 = vunpack.c.l.bf16 %v133
    %v2800 = vunpack.c.h.bf16 %v133
    %v2801 = vunpack.c.l.bf16 %v134
    %v2802 = vunpack.c.h.bf16 %v134
    %v2803 = vunpack.c.l.bf16 %v135
    %v2804 = vunpack.c.h.bf16 %v135
    %v2805 = vunpack.c.l.bf16 %v136
    %v2806 = vunpack.c.h.bf16 %v136
    %v2807 = vunpack.c.l.bf16 %v137
    %v2808 = vunpack.c.h.bf16 %v137
    %v2809 = vunpack.c.l.bf16 %v138
    %v2810 = vunpack.c.h.bf16 %v138
    %v2811 = vunpack.c.l.bf16 %v139
    %v2812 = vunpack.c.h.bf16 %v139
    %v2813 = vunpack.c.l.bf16 %v140
    %v2814 = vunpack.c.h.bf16 %v140
    %v2815 = vunpack.c.l.bf16 %v141
    %v2816 = vunpack.c.h.bf16 %v141
    %v2817 = vunpack.c.l.bf16 %v142
    %v2818 = vunpack.c.h.bf16 %v142
    %v2819 = vunpack.c.l.bf16 %v143
    %v2820 = vunpack.c.h.bf16 %v143
    %v2821 = vunpack.c.l.bf16 %v144
    %v2822 = vunpack.c.h.bf16 %v144
    %v2823 = vunpack.c.l.bf16 %v145
    %v2824 = vunpack.c.h.bf16 %v145
    %v2825 = vunpack.c.l.bf16 %v146
    %v2826 = vunpack.c.h.bf16 %v146
    %v2827 = vunpack.c.l.bf16 %v147
    %v2828 = vunpack.c.h.bf16 %v147
    %v2829 = vstv %s2761
    %v2830 = vmul.f32 %v2829, %v2765
    %v2831 = vmul.f32 %v2829, %v2766
    %v2832 = vmul.f32 %v2829, %v2767
    %v2833 = vmul.f32 %v2829, %v2768
    %v2834 = vmul.f32 %v2829, %v2769
    %v2835 = vmul.f32 %v2829, %v2770
    %v2836 = vmul.f32 %v2829, %v2771
    %v2837 = vmul.f32 %v2829, %v2772
    %v2838 = vmul.f32 %v2829, %v2773
    %v2839 = vmul.f32 %v2829, %v2774
    %v2840 = vmul.f32 %v2829, %v2775
    %v2841 = vmul.f32 %v2829, %v2776
    %v2842 = vmul.f32 %v2829, %v2777
    %v2843 = vmul.f32 %v2829, %v2778
    %v2844 = vmul.f32 %v2829, %v2779
    %v2845 = vmul.f32 %v2829, %v2780
    %v2846 = vmul.f32 %v2829, %v2781
    %v2847 = vmul.f32 %v2829, %v2782
    %v2848 = vmul.f32 %v2829, %v2783
    %v2849 = vmul.f32 %v2829, %v2784
    %v2850 = vmul.f32 %v2829, %v2785
    %v2851 = vmul.f32 %v2829, %v2786
    %v2852 = vmul.f32 %v2829, %v2787
    %v2853 = vmul.f32 %v2829, %v2788
    %v2854 = vmul.f32 %v2829, %v2789
    %v2855 = vmul.f32 %v2829, %v2790
    %v2856 = vmul.f32 %v2829, %v2791
    %v2857 = vmul.f32 %v2829, %v2792
    %v2858 = vmul.f32 %v2829, %v2793
    %v2859 = vmul.f32 %v2829, %v2794
    %v2860 = vmul.f32 %v2829, %v2795
    %v2861 = vmul.f32 %v2829, %v2796
    %v2862 = vmul.f32 %v2829, %v2797
    %v2863 = vmul.f32 %v2829, %v2798
    %v2864 = vmul.f32 %v2829, %v2799
    %v2865 = vmul.f32 %v2829, %v2800
    %v2866 = vmul.f32 %v2829, %v2801
    %v2867 = vmul.f32 %v2829, %v2802
    %v2868 = vmul.f32 %v2829, %v2803
    %v2869 = vmul.f32 %v2829, %v2804
    %v2870 = vmul.f32 %v2829, %v2805
    %v2871 = vmul.f32 %v2829, %v2806
    %v2872 = vmul.f32 %v2829, %v2807
    %v2873 = vmul.f32 %v2829, %v2808
    %v2874 = vmul.f32 %v2829, %v2809
    %v2875 = vmul.f32 %v2829, %v2810
    %v2876 = vmul.f32 %v2829, %v2811
    %v2877 = vmul.f32 %v2829, %v2812
    %v2878 = vmul.f32 %v2829, %v2813
    %v2879 = vmul.f32 %v2829, %v2814
    %v2880 = vmul.f32 %v2829, %v2815
    %v2881 = vmul.f32 %v2829, %v2816
    %v2882 = vmul.f32 %v2829, %v2817
    %v2883 = vmul.f32 %v2829, %v2818
    %v2884 = vmul.f32 %v2829, %v2819
    %v2885 = vmul.f32 %v2829, %v2820
    %v2886 = vmul.f32 %v2829, %v2821
    %v2887 = vmul.f32 %v2829, %v2822
    %v2888 = vmul.f32 %v2829, %v2823
    %v2889 = vmul.f32 %v2829, %v2824
    %v2890 = vmul.f32 %v2829, %v2825
    %v2891 = vmul.f32 %v2829, %v2826
    %v2892 = vmul.f32 %v2829, %v2827
    %v2893 = vmul.f32 %v2829, %v2828
    %v2894 = vadd.f32 %v2830, 0.0
    %v2895 = vadd.f32 %v2831, 0.0
    %v2896 = vadd.f32 %v2832, 0.0
    %v2897 = vadd.f32 %v2833, 0.0
    %v2898 = vadd.f32 %v2834, 0.0
    %v2899 = vadd.f32 %v2835, 0.0
    %v2900 = vadd.f32 %v2836, 0.0
    %v2901 = vadd.f32 %v2837, 0.0
    %v2902 = vadd.f32 %v2838, 0.0
    %v2903 = vadd.f32 %v2839, 0.0
    %v2904 = vadd.f32 %v2840, 0.0
    %v2905 = vadd.f32 %v2841, 0.0
    %v2906 = vadd.f32 %v2842, 0.0
    %v2907 = vadd.f32 %v2843, 0.0
    %v2908 = vadd.f32 %v2844, 0.0
    %v2909 = vadd.f32 %v2845, 0.0
    %v2910 = vadd.f32 %v2846, 0.0
    %v2911 = vadd.f32 %v2847, 0.0
    %v2912 = vadd.f32 %v2848, 0.0
    %v2913 = vadd.f32 %v2849, 0.0
    %v2914 = vadd.f32 %v2850, 0.0
    %v2915 = vadd.f32 %v2851, 0.0
    %v2916 = vadd.f32 %v2852, 0.0
    %v2917 = vadd.f32 %v2853, 0.0
    %v2918 = vadd.f32 %v2854, 0.0
    %v2919 = vadd.f32 %v2855, 0.0
    %v2920 = vadd.f32 %v2856, 0.0
    %v2921 = vadd.f32 %v2857, 0.0
    %v2922 = vadd.f32 %v2858, 0.0
    %v2923 = vadd.f32 %v2859, 0.0
    %v2924 = vadd.f32 %v2860, 0.0
    %v2925 = vadd.f32 %v2861, 0.0
    %v2926 = vadd.f32 %v2862, 0.0
    %v2927 = vadd.f32 %v2863, 0.0
    %v2928 = vadd.f32 %v2864, 0.0
    %v2929 = vadd.f32 %v2865, 0.0
    %v2930 = vadd.f32 %v2866, 0.0
    %v2931 = vadd.f32 %v2867, 0.0
    %v2932 = vadd.f32 %v2868, 0.0
    %v2933 = vadd.f32 %v2869, 0.0
    %v2934 = vadd.f32 %v2870, 0.0
    %v2935 = vadd.f32 %v2871, 0.0
    %v2936 = vadd.f32 %v2872, 0.0
    %v2937 = vadd.f32 %v2873, 0.0
    %v2938 = vadd.f32 %v2874, 0.0
    %v2939 = vadd.f32 %v2875, 0.0
    %v2940 = vadd.f32 %v2876, 0.0
    %v2941 = vadd.f32 %v2877, 0.0
    %v2942 = vadd.f32 %v2878, 0.0
    %v2943 = vadd.f32 %v2879, 0.0
    %v2944 = vadd.f32 %v2880, 0.0
    %v2945 = vadd.f32 %v2881, 0.0
    %v2946 = vadd.f32 %v2882, 0.0
    %v2947 = vadd.f32 %v2883, 0.0
    %v2948 = vadd.f32 %v2884, 0.0
    %v2949 = vadd.f32 %v2885, 0.0
    %v2950 = vadd.f32 %v2886, 0.0
    %v2951 = vadd.f32 %v2887, 0.0
    %v2952 = vadd.f32 %v2888, 0.0
    %v2953 = vadd.f32 %v2889, 0.0
    %v2954 = vadd.f32 %v2890, 0.0
    %v2955 = vadd.f32 %v2891, 0.0
    %v2956 = vadd.f32 %v2892, 0.0
    %v2957 = vadd.f32 %v2893, 0.0
    %v2958 = vunpack.c.l.bf16 %v845
    %v2959 = vunpack.c.h.bf16 %v845
    %v2960 = vunpack.c.l.bf16 %v846
    %v2961 = vunpack.c.h.bf16 %v846
    %v2962 = vunpack.c.l.bf16 %v847
    %v2963 = vunpack.c.h.bf16 %v847
    %v2964 = vunpack.c.l.bf16 %v848
    %v2965 = vunpack.c.h.bf16 %v848
    %v2966 = vunpack.c.l.bf16 %v849
    %v2967 = vunpack.c.h.bf16 %v849
    %v2968 = vunpack.c.l.bf16 %v850
    %v2969 = vunpack.c.h.bf16 %v850
    %v2970 = vunpack.c.l.bf16 %v851
    %v2971 = vunpack.c.h.bf16 %v851
    %v2972 = vunpack.c.l.bf16 %v852
    %v2973 = vunpack.c.h.bf16 %v852
    %v2974 = vunpack.c.l.bf16 %v853
    %v2975 = vunpack.c.h.bf16 %v853
    %v2976 = vunpack.c.l.bf16 %v854
    %v2977 = vunpack.c.h.bf16 %v854
    %v2978 = vunpack.c.l.bf16 %v855
    %v2979 = vunpack.c.h.bf16 %v855
    %v2980 = vunpack.c.l.bf16 %v856
    %v2981 = vunpack.c.h.bf16 %v856
    %v2982 = vunpack.c.l.bf16 %v857
    %v2983 = vunpack.c.h.bf16 %v857
    %v2984 = vunpack.c.l.bf16 %v858
    %v2985 = vunpack.c.h.bf16 %v858
    %v2986 = vunpack.c.l.bf16 %v859
    %v2987 = vunpack.c.h.bf16 %v859
    %v2988 = vunpack.c.l.bf16 %v860
    %v2989 = vunpack.c.h.bf16 %v860
    %v2990 = vunpack.c.l.bf16 %v861
    %v2991 = vunpack.c.h.bf16 %v861
    %v2992 = vunpack.c.l.bf16 %v862
    %v2993 = vunpack.c.h.bf16 %v862
    %v2994 = vunpack.c.l.bf16 %v863
    %v2995 = vunpack.c.h.bf16 %v863
    %v2996 = vunpack.c.l.bf16 %v864
    %v2997 = vunpack.c.h.bf16 %v864
    %v2998 = vunpack.c.l.bf16 %v865
    %v2999 = vunpack.c.h.bf16 %v865
    %v3000 = vunpack.c.l.bf16 %v866
    %v3001 = vunpack.c.h.bf16 %v866
    %v3002 = vunpack.c.l.bf16 %v867
    %v3003 = vunpack.c.h.bf16 %v867
    %v3004 = vunpack.c.l.bf16 %v868
    %v3005 = vunpack.c.h.bf16 %v868
    %v3006 = vunpack.c.l.bf16 %v869
    %v3007 = vunpack.c.h.bf16 %v869
    %v3008 = vunpack.c.l.bf16 %v870
    %v3009 = vunpack.c.h.bf16 %v870
    %v3010 = vunpack.c.l.bf16 %v871
    %v3011 = vunpack.c.h.bf16 %v871
    %v3012 = vunpack.c.l.bf16 %v872
    %v3013 = vunpack.c.h.bf16 %v872
    %v3014 = vunpack.c.l.bf16 %v873
    %v3015 = vunpack.c.h.bf16 %v873
    %v3016 = vunpack.c.l.bf16 %v874
    %v3017 = vunpack.c.h.bf16 %v874
    %v3018 = vunpack.c.l.bf16 %v875
    %v3019 = vunpack.c.h.bf16 %v875
    %v3020 = vunpack.c.l.bf16 %v876
    %v3021 = vunpack.c.h.bf16 %v876
    %v3022 = vstv %s2762
    %v3023 = vmul.f32 %v3022, %v2958
    %v3024 = vmul.f32 %v3022, %v2959
    %v3025 = vmul.f32 %v3022, %v2960
    %v3026 = vmul.f32 %v3022, %v2961
    %v3027 = vmul.f32 %v3022, %v2962
    %v3028 = vmul.f32 %v3022, %v2963
    %v3029 = vmul.f32 %v3022, %v2964
    %v3030 = vmul.f32 %v3022, %v2965
    %v3031 = vmul.f32 %v3022, %v2966
    %v3032 = vmul.f32 %v3022, %v2967
    %v3033 = vmul.f32 %v3022, %v2968
    %v3034 = vmul.f32 %v3022, %v2969
    %v3035 = vmul.f32 %v3022, %v2970
    %v3036 = vmul.f32 %v3022, %v2971
    %v3037 = vmul.f32 %v3022, %v2972
    %v3038 = vmul.f32 %v3022, %v2973
    %v3039 = vmul.f32 %v3022, %v2974
    %v3040 = vmul.f32 %v3022, %v2975
    %v3041 = vmul.f32 %v3022, %v2976
    %v3042 = vmul.f32 %v3022, %v2977
    %v3043 = vmul.f32 %v3022, %v2978
    %v3044 = vmul.f32 %v3022, %v2979
    %v3045 = vmul.f32 %v3022, %v2980
    %v3046 = vmul.f32 %v3022, %v2981
    %v3047 = vmul.f32 %v3022, %v2982
    %v3048 = vmul.f32 %v3022, %v2983
    %v3049 = vmul.f32 %v3022, %v2984
    %v3050 = vmul.f32 %v3022, %v2985
    %v3051 = vmul.f32 %v3022, %v2986
    %v3052 = vmul.f32 %v3022, %v2987
    %v3053 = vmul.f32 %v3022, %v2988
    %v3054 = vmul.f32 %v3022, %v2989
    %v3055 = vmul.f32 %v3022, %v2990
    %v3056 = vmul.f32 %v3022, %v2991
    %v3057 = vmul.f32 %v3022, %v2992
    %v3058 = vmul.f32 %v3022, %v2993
    %v3059 = vmul.f32 %v3022, %v2994
    %v3060 = vmul.f32 %v3022, %v2995
    %v3061 = vmul.f32 %v3022, %v2996
    %v3062 = vmul.f32 %v3022, %v2997
    %v3063 = vmul.f32 %v3022, %v2998
    %v3064 = vmul.f32 %v3022, %v2999
    %v3065 = vmul.f32 %v3022, %v3000
    %v3066 = vmul.f32 %v3022, %v3001
    %v3067 = vmul.f32 %v3022, %v3002
    %v3068 = vmul.f32 %v3022, %v3003
    %v3069 = vmul.f32 %v3022, %v3004
    %v3070 = vmul.f32 %v3022, %v3005
    %v3071 = vmul.f32 %v3022, %v3006
    %v3072 = vmul.f32 %v3022, %v3007
    %v3073 = vmul.f32 %v3022, %v3008
    %v3074 = vmul.f32 %v3022, %v3009
    %v3075 = vmul.f32 %v3022, %v3010
    %v3076 = vmul.f32 %v3022, %v3011
    %v3077 = vmul.f32 %v3022, %v3012
    %v3078 = vmul.f32 %v3022, %v3013
    %v3079 = vmul.f32 %v3022, %v3014
    %v3080 = vmul.f32 %v3022, %v3015
    %v3081 = vmul.f32 %v3022, %v3016
    %v3082 = vmul.f32 %v3022, %v3017
    %v3083 = vmul.f32 %v3022, %v3018
    %v3084 = vmul.f32 %v3022, %v3019
    %v3085 = vmul.f32 %v3022, %v3020
    %v3086 = vmul.f32 %v3022, %v3021
    %v3087 = vadd.f32 %v2894, %v3023
    %v3088 = vadd.f32 %v2895, %v3024
    %v3089 = vadd.f32 %v2896, %v3025
    %v3090 = vadd.f32 %v2897, %v3026
    %v3091 = vadd.f32 %v2898, %v3027
    %v3092 = vadd.f32 %v2899, %v3028
    %v3093 = vadd.f32 %v2900, %v3029
    %v3094 = vadd.f32 %v2901, %v3030
    %v3095 = vadd.f32 %v2902, %v3031
    %v3096 = vadd.f32 %v2903, %v3032
    %v3097 = vadd.f32 %v2904, %v3033
    %v3098 = vadd.f32 %v2905, %v3034
    %v3099 = vadd.f32 %v2906, %v3035
    %v3100 = vadd.f32 %v2907, %v3036
    %v3101 = vadd.f32 %v2908, %v3037
    %v3102 = vadd.f32 %v2909, %v3038
    %v3103 = vadd.f32 %v2910, %v3039
    %v3104 = vadd.f32 %v2911, %v3040
    %v3105 = vadd.f32 %v2912, %v3041
    %v3106 = vadd.f32 %v2913, %v3042
    %v3107 = vadd.f32 %v2914, %v3043
    %v3108 = vadd.f32 %v2915, %v3044
    %v3109 = vadd.f32 %v2916, %v3045
    %v3110 = vadd.f32 %v2917, %v3046
    %v3111 = vadd.f32 %v2918, %v3047
    %v3112 = vadd.f32 %v2919, %v3048
    %v3113 = vadd.f32 %v2920, %v3049
    %v3114 = vadd.f32 %v2921, %v3050
    %v3115 = vadd.f32 %v2922, %v3051
    %v3116 = vadd.f32 %v2923, %v3052
    %v3117 = vadd.f32 %v2924, %v3053
    %v3118 = vadd.f32 %v2925, %v3054
    %v3119 = vadd.f32 %v2926, %v3055
    %v3120 = vadd.f32 %v2927, %v3056
    %v3121 = vadd.f32 %v2928, %v3057
    %v3122 = vadd.f32 %v2929, %v3058
    %v3123 = vadd.f32 %v2930, %v3059
    %v3124 = vadd.f32 %v2931, %v3060
    %v3125 = vadd.f32 %v2932, %v3061
    %v3126 = vadd.f32 %v2933, %v3062
    %v3127 = vadd.f32 %v2934, %v3063
    %v3128 = vadd.f32 %v2935, %v3064
    %v3129 = vadd.f32 %v2936, %v3065
    %v3130 = vadd.f32 %v2937, %v3066
    %v3131 = vadd.f32 %v2938, %v3067
    %v3132 = vadd.f32 %v2939, %v3068
    %v3133 = vadd.f32 %v2940, %v3069
    %v3134 = vadd.f32 %v2941, %v3070
    %v3135 = vadd.f32 %v2942, %v3071
    %v3136 = vadd.f32 %v2943, %v3072
    %v3137 = vadd.f32 %v2944, %v3073
    %v3138 = vadd.f32 %v2945, %v3074
    %v3139 = vadd.f32 %v2946, %v3075
    %v3140 = vadd.f32 %v2947, %v3076
    %v3141 = vadd.f32 %v2948, %v3077
    %v3142 = vadd.f32 %v2949, %v3078
    %v3143 = vadd.f32 %v2950, %v3079
    %v3144 = vadd.f32 %v2951, %v3080
    %v3145 = vadd.f32 %v2952, %v3081
    %v3146 = vadd.f32 %v2953, %v3082
    %v3147 = vadd.f32 %v2954, %v3083
    %v3148 = vadd.f32 %v2955, %v3084
    %v3149 = vadd.f32 %v2956, %v3085
    %v3150 = vadd.f32 %v2957, %v3086
    %v3151 = vunpack.c.l.bf16 %v1496
    %v3152 = vunpack.c.h.bf16 %v1496
    %v3153 = vunpack.c.l.bf16 %v1497
    %v3154 = vunpack.c.h.bf16 %v1497
    %v3155 = vunpack.c.l.bf16 %v1498
    %v3156 = vunpack.c.h.bf16 %v1498
    %v3157 = vunpack.c.l.bf16 %v1499
    %v3158 = vunpack.c.h.bf16 %v1499
    %v3159 = vunpack.c.l.bf16 %v1500
    %v3160 = vunpack.c.h.bf16 %v1500
    %v3161 = vunpack.c.l.bf16 %v1501
    %v3162 = vunpack.c.h.bf16 %v1501
    %v3163 = vunpack.c.l.bf16 %v1502
    %v3164 = vunpack.c.h.bf16 %v1502
    %v3165 = vunpack.c.l.bf16 %v1503
    %v3166 = vunpack.c.h.bf16 %v1503
    %v3167 = vunpack.c.l.bf16 %v1504
    %v3168 = vunpack.c.h.bf16 %v1504
    %v3169 = vunpack.c.l.bf16 %v1505
    %v3170 = vunpack.c.h.bf16 %v1505
    %v3171 = vunpack.c.l.bf16 %v1506
    %v3172 = vunpack.c.h.bf16 %v1506
    %v3173 = vunpack.c.l.bf16 %v1507
    %v3174 = vunpack.c.h.bf16 %v1507
    %v3175 = vunpack.c.l.bf16 %v1508
    %v3176 = vunpack.c.h.bf16 %v1508
    %v3177 = vunpack.c.l.bf16 %v1509
    %v3178 = vunpack.c.h.bf16 %v1509
    %v3179 = vunpack.c.l.bf16 %v1510
    %v3180 = vunpack.c.h.bf16 %v1510
    %v3181 = vunpack.c.l.bf16 %v1511
    %v3182 = vunpack.c.h.bf16 %v1511
    %v3183 = vunpack.c.l.bf16 %v1512
    %v3184 = vunpack.c.h.bf16 %v1512
    %v3185 = vunpack.c.l.bf16 %v1513
    %v3186 = vunpack.c.h.bf16 %v1513
    %v3187 = vunpack.c.l.bf16 %v1514
    %v3188 = vunpack.c.h.bf16 %v1514
    %v3189 = vunpack.c.l.bf16 %v1515
    %v3190 = vunpack.c.h.bf16 %v1515
    %v3191 = vunpack.c.l.bf16 %v1516
    %v3192 = vunpack.c.h.bf16 %v1516
    %v3193 = vunpack.c.l.bf16 %v1517
    %v3194 = vunpack.c.h.bf16 %v1517
    %v3195 = vunpack.c.l.bf16 %v1518
    %v3196 = vunpack.c.h.bf16 %v1518
    %v3197 = vunpack.c.l.bf16 %v1519
    %v3198 = vunpack.c.h.bf16 %v1519
    %v3199 = vunpack.c.l.bf16 %v1520
    %v3200 = vunpack.c.h.bf16 %v1520
    %v3201 = vunpack.c.l.bf16 %v1521
    %v3202 = vunpack.c.h.bf16 %v1521
    %v3203 = vunpack.c.l.bf16 %v1522
    %v3204 = vunpack.c.h.bf16 %v1522
    %v3205 = vunpack.c.l.bf16 %v1523
    %v3206 = vunpack.c.h.bf16 %v1523
    %v3207 = vunpack.c.l.bf16 %v1524
    %v3208 = vunpack.c.h.bf16 %v1524
    %v3209 = vunpack.c.l.bf16 %v1525
    %v3210 = vunpack.c.h.bf16 %v1525
    %v3211 = vunpack.c.l.bf16 %v1526
    %v3212 = vunpack.c.h.bf16 %v1526
    %v3213 = vunpack.c.l.bf16 %v1527
    %v3214 = vunpack.c.h.bf16 %v1527
    %v3215 = vstv %s2763
    %v3216 = vmul.f32 %v3215, %v3151
    %v3217 = vmul.f32 %v3215, %v3152
    %v3218 = vmul.f32 %v3215, %v3153
    %v3219 = vmul.f32 %v3215, %v3154
    %v3220 = vmul.f32 %v3215, %v3155
    %v3221 = vmul.f32 %v3215, %v3156
    %v3222 = vmul.f32 %v3215, %v3157
    %v3223 = vmul.f32 %v3215, %v3158
    %v3224 = vmul.f32 %v3215, %v3159
    %v3225 = vmul.f32 %v3215, %v3160
    %v3226 = vmul.f32 %v3215, %v3161
    %v3227 = vmul.f32 %v3215, %v3162
    %v3228 = vmul.f32 %v3215, %v3163
    %v3229 = vmul.f32 %v3215, %v3164
    %v3230 = vmul.f32 %v3215, %v3165
    %v3231 = vmul.f32 %v3215, %v3166
    %v3232 = vmul.f32 %v3215, %v3167
    %v3233 = vmul.f32 %v3215, %v3168
    %v3234 = vmul.f32 %v3215, %v3169
    %v3235 = vmul.f32 %v3215, %v3170
    %v3236 = vmul.f32 %v3215, %v3171
    %v3237 = vmul.f32 %v3215, %v3172
    %v3238 = vmul.f32 %v3215, %v3173
    %v3239 = vmul.f32 %v3215, %v3174
    %v3240 = vmul.f32 %v3215, %v3175
    %v3241 = vmul.f32 %v3215, %v3176
    %v3242 = vmul.f32 %v3215, %v3177
    %v3243 = vmul.f32 %v3215, %v3178
    %v3244 = vmul.f32 %v3215, %v3179
    %v3245 = vmul.f32 %v3215, %v3180
    %v3246 = vmul.f32 %v3215, %v3181
    %v3247 = vmul.f32 %v3215, %v3182
    %v3248 = vmul.f32 %v3215, %v3183
    %v3249 = vmul.f32 %v3215, %v3184
    %v3250 = vmul.f32 %v3215, %v3185
    %v3251 = vmul.f32 %v3215, %v3186
    %v3252 = vmul.f32 %v3215, %v3187
    %v3253 = vmul.f32 %v3215, %v3188
    %v3254 = vmul.f32 %v3215, %v3189
    %v3255 = vmul.f32 %v3215, %v3190
    %v3256 = vmul.f32 %v3215, %v3191
    %v3257 = vmul.f32 %v3215, %v3192
    %v3258 = vmul.f32 %v3215, %v3193
    %v3259 = vmul.f32 %v3215, %v3194
    %v3260 = vmul.f32 %v3215, %v3195
    %v3261 = vmul.f32 %v3215, %v3196
    %v3262 = vmul.f32 %v3215, %v3197
    %v3263 = vmul.f32 %v3215, %v3198
    %v3264 = vmul.f32 %v3215, %v3199
    %v3265 = vmul.f32 %v3215, %v3200
    %v3266 = vmul.f32 %v3215, %v3201
    %v3267 = vmul.f32 %v3215, %v3202
    %v3268 = vmul.f32 %v3215, %v3203
    %v3269 = vmul.f32 %v3215, %v3204
    %v3270 = vmul.f32 %v3215, %v3205
    %v3271 = vmul.f32 %v3215, %v3206
    %v3272 = vmul.f32 %v3215, %v3207
    %v3273 = vmul.f32 %v3215, %v3208
    %v3274 = vmul.f32 %v3215, %v3209
    %v3275 = vmul.f32 %v3215, %v3210
    %v3276 = vmul.f32 %v3215, %v3211
    %v3277 = vmul.f32 %v3215, %v3212
    %v3278 = vmul.f32 %v3215, %v3213
    %v3279 = vmul.f32 %v3215, %v3214
    %v3280 = vadd.f32 %v3087, %v3216
    %v3281 = vadd.f32 %v3088, %v3217
    %v3282 = vadd.f32 %v3089, %v3218
    %v3283 = vadd.f32 %v3090, %v3219
    %v3284 = vadd.f32 %v3091, %v3220
    %v3285 = vadd.f32 %v3092, %v3221
    %v3286 = vadd.f32 %v3093, %v3222
    %v3287 = vadd.f32 %v3094, %v3223
    %v3288 = vadd.f32 %v3095, %v3224
    %v3289 = vadd.f32 %v3096, %v3225
    %v3290 = vadd.f32 %v3097, %v3226
    %v3291 = vadd.f32 %v3098, %v3227
    %v3292 = vadd.f32 %v3099, %v3228
    %v3293 = vadd.f32 %v3100, %v3229
    %v3294 = vadd.f32 %v3101, %v3230
    %v3295 = vadd.f32 %v3102, %v3231
    %v3296 = vadd.f32 %v3103, %v3232
    %v3297 = vadd.f32 %v3104, %v3233
    %v3298 = vadd.f32 %v3105, %v3234
    %v3299 = vadd.f32 %v3106, %v3235
    %v3300 = vadd.f32 %v3107, %v3236
    %v3301 = vadd.f32 %v3108, %v3237
    %v3302 = vadd.f32 %v3109, %v3238
    %v3303 = vadd.f32 %v3110, %v3239
    %v3304 = vadd.f32 %v3111, %v3240
    %v3305 = vadd.f32 %v3112, %v3241
    %v3306 = vadd.f32 %v3113, %v3242
    %v3307 = vadd.f32 %v3114, %v3243
    %v3308 = vadd.f32 %v3115, %v3244
    %v3309 = vadd.f32 %v3116, %v3245
    %v3310 = vadd.f32 %v3117, %v3246
    %v3311 = vadd.f32 %v3118, %v3247
    %v3312 = vadd.f32 %v3119, %v3248
    %v3313 = vadd.f32 %v3120, %v3249
    %v3314 = vadd.f32 %v3121, %v3250
    %v3315 = vadd.f32 %v3122, %v3251
    %v3316 = vadd.f32 %v3123, %v3252
    %v3317 = vadd.f32 %v3124, %v3253
    %v3318 = vadd.f32 %v3125, %v3254
    %v3319 = vadd.f32 %v3126, %v3255
    %v3320 = vadd.f32 %v3127, %v3256
    %v3321 = vadd.f32 %v3128, %v3257
    %v3322 = vadd.f32 %v3129, %v3258
    %v3323 = vadd.f32 %v3130, %v3259
    %v3324 = vadd.f32 %v3131, %v3260
    %v3325 = vadd.f32 %v3132, %v3261
    %v3326 = vadd.f32 %v3133, %v3262
    %v3327 = vadd.f32 %v3134, %v3263
    %v3328 = vadd.f32 %v3135, %v3264
    %v3329 = vadd.f32 %v3136, %v3265
    %v3330 = vadd.f32 %v3137, %v3266
    %v3331 = vadd.f32 %v3138, %v3267
    %v3332 = vadd.f32 %v3139, %v3268
    %v3333 = vadd.f32 %v3140, %v3269
    %v3334 = vadd.f32 %v3141, %v3270
    %v3335 = vadd.f32 %v3142, %v3271
    %v3336 = vadd.f32 %v3143, %v3272
    %v3337 = vadd.f32 %v3144, %v3273
    %v3338 = vadd.f32 %v3145, %v3274
    %v3339 = vadd.f32 %v3146, %v3275
    %v3340 = vadd.f32 %v3147, %v3276
    %v3341 = vadd.f32 %v3148, %v3277
    %v3342 = vadd.f32 %v3149, %v3278
    %v3343 = vadd.f32 %v3150, %v3279
    %v3344 = vunpack.c.l.bf16 %v2146
    %v3345 = vunpack.c.h.bf16 %v2146
    %v3346 = vunpack.c.l.bf16 %v2147
    %v3347 = vunpack.c.h.bf16 %v2147
    %v3348 = vunpack.c.l.bf16 %v2148
    %v3349 = vunpack.c.h.bf16 %v2148
    %v3350 = vunpack.c.l.bf16 %v2149
    %v3351 = vunpack.c.h.bf16 %v2149
    %v3352 = vunpack.c.l.bf16 %v2150
    %v3353 = vunpack.c.h.bf16 %v2150
    %v3354 = vunpack.c.l.bf16 %v2151
    %v3355 = vunpack.c.h.bf16 %v2151
    %v3356 = vunpack.c.l.bf16 %v2152
    %v3357 = vunpack.c.h.bf16 %v2152
    %v3358 = vunpack.c.l.bf16 %v2153
    %v3359 = vunpack.c.h.bf16 %v2153
    %v3360 = vunpack.c.l.bf16 %v2154
    %v3361 = vunpack.c.h.bf16 %v2154
    %v3362 = vunpack.c.l.bf16 %v2155
    %v3363 = vunpack.c.h.bf16 %v2155
    %v3364 = vunpack.c.l.bf16 %v2156
    %v3365 = vunpack.c.h.bf16 %v2156
    %v3366 = vunpack.c.l.bf16 %v2157
    %v3367 = vunpack.c.h.bf16 %v2157
    %v3368 = vunpack.c.l.bf16 %v2158
    %v3369 = vunpack.c.h.bf16 %v2158
    %v3370 = vunpack.c.l.bf16 %v2159
    %v3371 = vunpack.c.h.bf16 %v2159
    %v3372 = vunpack.c.l.bf16 %v2160
    %v3373 = vunpack.c.h.bf16 %v2160
    %v3374 = vunpack.c.l.bf16 %v2161
    %v3375 = vunpack.c.h.bf16 %v2161
    %v3376 = vunpack.c.l.bf16 %v2162
    %v3377 = vunpack.c.h.bf16 %v2162
    %v3378 = vunpack.c.l.bf16 %v2163
    %v3379 = vunpack.c.h.bf16 %v2163
    %v3380 = vunpack.c.l.bf16 %v2164
    %v3381 = vunpack.c.h.bf16 %v2164
    %v3382 = vunpack.c.l.bf16 %v2165
    %v3383 = vunpack.c.h.bf16 %v2165
    %v3384 = vunpack.c.l.bf16 %v2166
    %v3385 = vunpack.c.h.bf16 %v2166
    %v3386 = vunpack.c.l.bf16 %v2167
    %v3387 = vunpack.c.h.bf16 %v2167
    %v3388 = vunpack.c.l.bf16 %v2168
    %v3389 = vunpack.c.h.bf16 %v2168
    %v3390 = vunpack.c.l.bf16 %v2169
    %v3391 = vunpack.c.h.bf16 %v2169
    %v3392 = vunpack.c.l.bf16 %v2170
    %v3393 = vunpack.c.h.bf16 %v2170
    %v3394 = vunpack.c.l.bf16 %v2171
    %v3395 = vunpack.c.h.bf16 %v2171
    %v3396 = vunpack.c.l.bf16 %v2172
    %v3397 = vunpack.c.h.bf16 %v2172
    %v3398 = vunpack.c.l.bf16 %v2173
    %v3399 = vunpack.c.h.bf16 %v2173
    %v3400 = vunpack.c.l.bf16 %v2174
    %v3401 = vunpack.c.h.bf16 %v2174
    %v3402 = vunpack.c.l.bf16 %v2175
    %v3403 = vunpack.c.h.bf16 %v2175
    %v3404 = vunpack.c.l.bf16 %v2176
    %v3405 = vunpack.c.h.bf16 %v2176
    %v3406 = vunpack.c.l.bf16 %v2177
    %v3407 = vunpack.c.h.bf16 %v2177
    %v3408 = vstv %s2764
    %v3409 = vmul.f32 %v3408, %v3344
    %v3410 = vmul.f32 %v3408, %v3345
    %v3411 = vmul.f32 %v3408, %v3346
    %v3412 = vmul.f32 %v3408, %v3347
    %v3413 = vmul.f32 %v3408, %v3348
    %v3414 = vmul.f32 %v3408, %v3349
    %v3415 = vmul.f32 %v3408, %v3350
    %v3416 = vmul.f32 %v3408, %v3351
    %v3417 = vmul.f32 %v3408, %v3352
    %v3418 = vmul.f32 %v3408, %v3353
    %v3419 = vmul.f32 %v3408, %v3354
    %v3420 = vmul.f32 %v3408, %v3355
    %v3421 = vmul.f32 %v3408, %v3356
    %v3422 = vmul.f32 %v3408, %v3357
    %v3423 = vmul.f32 %v3408, %v3358
    %v3424 = vmul.f32 %v3408, %v3359
    %v3425 = vmul.f32 %v3408, %v3360
    %v3426 = vmul.f32 %v3408, %v3361
    %v3427 = vmul.f32 %v3408, %v3362
    %v3428 = vmul.f32 %v3408, %v3363
    %v3429 = vmul.f32 %v3408, %v3364
    %v3430 = vmul.f32 %v3408, %v3365
    %v3431 = vmul.f32 %v3408, %v3366
    %v3432 = vmul.f32 %v3408, %v3367
    %v3433 = vmul.f32 %v3408, %v3368
    %v3434 = vmul.f32 %v3408, %v3369
    %v3435 = vmul.f32 %v3408, %v3370
    %v3436 = vmul.f32 %v3408, %v3371
    %v3437 = vmul.f32 %v3408, %v3372
    %v3438 = vmul.f32 %v3408, %v3373
    %v3439 = vmul.f32 %v3408, %v3374
    %v3440 = vmul.f32 %v3408, %v3375
    %v3441 = vmul.f32 %v3408, %v3376
    %v3442 = vmul.f32 %v3408, %v3377
    %v3443 = vmul.f32 %v3408, %v3378
    %v3444 = vmul.f32 %v3408, %v3379
    %v3445 = vmul.f32 %v3408, %v3380
    %v3446 = vmul.f32 %v3408, %v3381
    %v3447 = vmul.f32 %v3408, %v3382
    %v3448 = vmul.f32 %v3408, %v3383
    %v3449 = vmul.f32 %v3408, %v3384
    %v3450 = vmul.f32 %v3408, %v3385
    %v3451 = vmul.f32 %v3408, %v3386
    %v3452 = vmul.f32 %v3408, %v3387
    %v3453 = vmul.f32 %v3408, %v3388
    %v3454 = vmul.f32 %v3408, %v3389
    %v3455 = vmul.f32 %v3408, %v3390
    %v3456 = vmul.f32 %v3408, %v3391
    %v3457 = vmul.f32 %v3408, %v3392
    %v3458 = vmul.f32 %v3408, %v3393
    %v3459 = vmul.f32 %v3408, %v3394
    %v3460 = vmul.f32 %v3408, %v3395
    %v3461 = vmul.f32 %v3408, %v3396
    %v3462 = vmul.f32 %v3408, %v3397
    %v3463 = vmul.f32 %v3408, %v3398
    %v3464 = vmul.f32 %v3408, %v3399
    %v3465 = vmul.f32 %v3408, %v3400
    %v3466 = vmul.f32 %v3408, %v3401
    %v3467 = vmul.f32 %v3408, %v3402
    %v3468 = vmul.f32 %v3408, %v3403
    %v3469 = vmul.f32 %v3408, %v3404
    %v3470 = vmul.f32 %v3408, %v3405
    %v3471 = vmul.f32 %v3408, %v3406
    %v3472 = vmul.f32 %v3408, %v3407
    %v3473 = vadd.f32 %v3280, %v3409
    %v3474 = vadd.f32 %v3281, %v3410
    %v3475 = vadd.f32 %v3282, %v3411
    %v3476 = vadd.f32 %v3283, %v3412
    %v3477 = vadd.f32 %v3284, %v3413
    %v3478 = vadd.f32 %v3285, %v3414
    %v3479 = vadd.f32 %v3286, %v3415
    %v3480 = vadd.f32 %v3287, %v3416
    %v3481 = vadd.f32 %v3288, %v3417
    %v3482 = vadd.f32 %v3289, %v3418
    %v3483 = vadd.f32 %v3290, %v3419
    %v3484 = vadd.f32 %v3291, %v3420
    %v3485 = vadd.f32 %v3292, %v3421
    %v3486 = vadd.f32 %v3293, %v3422
    %v3487 = vadd.f32 %v3294, %v3423
    %v3488 = vadd.f32 %v3295, %v3424
    %v3489 = vadd.f32 %v3296, %v3425
    %v3490 = vadd.f32 %v3297, %v3426
    %v3491 = vadd.f32 %v3298, %v3427
    %v3492 = vadd.f32 %v3299, %v3428
    %v3493 = vadd.f32 %v3300, %v3429
    %v3494 = vadd.f32 %v3301, %v3430
    %v3495 = vadd.f32 %v3302, %v3431
    %v3496 = vadd.f32 %v3303, %v3432
    %v3497 = vadd.f32 %v3304, %v3433
    %v3498 = vadd.f32 %v3305, %v3434
    %v3499 = vadd.f32 %v3306, %v3435
    %v3500 = vadd.f32 %v3307, %v3436
    %v3501 = vadd.f32 %v3308, %v3437
    %v3502 = vadd.f32 %v3309, %v3438
    %v3503 = vadd.f32 %v3310, %v3439
    %v3504 = vadd.f32 %v3311, %v3440
    %v3505 = vadd.f32 %v3312, %v3441
    %v3506 = vadd.f32 %v3313, %v3442
    %v3507 = vadd.f32 %v3314, %v3443
    %v3508 = vadd.f32 %v3315, %v3444
    %v3509 = vadd.f32 %v3316, %v3445
    %v3510 = vadd.f32 %v3317, %v3446
    %v3511 = vadd.f32 %v3318, %v3447
    %v3512 = vadd.f32 %v3319, %v3448
    %v3513 = vadd.f32 %v3320, %v3449
    %v3514 = vadd.f32 %v3321, %v3450
    %v3515 = vadd.f32 %v3322, %v3451
    %v3516 = vadd.f32 %v3323, %v3452
    %v3517 = vadd.f32 %v3324, %v3453
    %v3518 = vadd.f32 %v3325, %v3454
    %v3519 = vadd.f32 %v3326, %v3455
    %v3520 = vadd.f32 %v3327, %v3456
    %v3521 = vadd.f32 %v3328, %v3457
    %v3522 = vadd.f32 %v3329, %v3458
    %v3523 = vadd.f32 %v3330, %v3459
    %v3524 = vadd.f32 %v3331, %v3460
    %v3525 = vadd.f32 %v3332, %v3461
    %v3526 = vadd.f32 %v3333, %v3462
    %v3527 = vadd.f32 %v3334, %v3463
    %v3528 = vadd.f32 %v3335, %v3464
    %v3529 = vadd.f32 %v3336, %v3465
    %v3530 = vadd.f32 %v3337, %v3466
    %v3531 = vadd.f32 %v3338, %v3467
    %v3532 = vadd.f32 %v3339, %v3468
    %v3533 = vadd.f32 %v3340, %v3469
    %v3534 = vadd.f32 %v3341, %v3470
    %v3535 = vadd.f32 %v3342, %v3471
    %v3536 = vadd.f32 %v3343, %v3472
    %3537 = vst [vmem:[#allocation7] sm:$0xff] %v3473
    %3538 = vst [vmem:[#allocation7 + $0x8] sm:$0xff] %v3474
    %3539 = vst [vmem:[#allocation7 + $0x10] sm:$0xff] %v3475
    %3540 = vst [vmem:[#allocation7 + $0x18] sm:$0xff] %v3476
    %3541 = vst [vmem:[#allocation7 + $0x20] sm:$0xff] %v3477
    %3542 = vst [vmem:[#allocation7 + $0x28] sm:$0xff] %v3478
    %3543 = vst [vmem:[#allocation7 + $0x30] sm:$0xff] %v3479
    %3544 = vst [vmem:[#allocation7 + $0x38] sm:$0xff] %v3480
    %3545 = vst [vmem:[#allocation7 + $0x40] sm:$0xff] %v3481
    %3546 = vst [vmem:[#allocation7 + $0x48] sm:$0xff] %v3482
    %3547 = vst [vmem:[#allocation7 + $0x50] sm:$0xff] %v3483
    %3548 = vst [vmem:[#allocation7 + $0x58] sm:$0xff] %v3484
    %3549 = vst [vmem:[#allocation7 + $0x60] sm:$0xff] %v3485
    %3550 = vst [vmem:[#allocation7 + $0x68] sm:$0xff] %v3486
    %3551 = vst [vmem:[#allocation7 + $0x70] sm:$0xff] %v3487
    %3552 = vst [vmem:[#allocation7 + $0x78] sm:$0xff] %v3488
    %3553 = vst [vmem:[#allocation7 + $0x80] sm:$0xff] %v3489
    %3554 = vst [vmem:[#allocation7 + $0x88] sm:$0xff] %v3490
    %3555 = vst [vmem:[#allocation7 + $0x90] sm:$0xff] %v3491
    %3556 = vst [vmem:[#allocation7 + $0x98] sm:$0xff] %v3492
    %3557 = vst [vmem:[#allocation7 + $0xa0] sm:$0xff] %v3493
    %3558 = vst [vmem:[#allocation7 + $0xa8] sm:$0xff] %v3494
    %3559 = vst [vmem:[#allocation7 + $0xb0] sm:$0xff] %v3495
    %3560 = vst [vmem:[#allocation7 + $0xb8] sm:$0xff] %v3496
    %3561 = vst [vmem:[#allocation7 + $0xc0] sm:$0xff] %v3497
    %3562 = vst [vmem:[#allocation7 + $0xc8] sm:$0xff] %v3498
    %3563 = vst [vmem:[#allocation7 + $0xd0] sm:$0xff] %v3499
    %3564 = vst [vmem:[#allocation7 + $0xd8] sm:$0xff] %v3500
    %3565 = vst [vmem:[#allocation7 + $0xe0] sm:$0xff] %v3501
    %3566 = vst [vmem:[#allocation7 + $0xe8] sm:$0xff] %v3502
    %3567 = vst [vmem:[#allocation7 + $0xf0] sm:$0xff] %v3503
    %3568 = vst [vmem:[#allocation7 + $0xf8] sm:$0xff] %v3504
    %3569 = vst [vmem:[#allocation7 + $0x100] sm:$0xff] %v3505
    %3570 = vst [vmem:[#allocation7 + $0x108] sm:$0xff] %v3506
    %3571 = vst [vmem:[#allocation7 + $0x110] sm:$0xff] %v3507
    %3572 = vst [vmem:[#allocation7 + $0x118] sm:$0xff] %v3508
    %3573 = vst [vmem:[#allocation7 + $0x120] sm:$0xff] %v3509
    %3574 = vst [vmem:[#allocation7 + $0x128] sm:$0xff] %v3510
    %3575 = vst [vmem:[#allocation7 + $0x130] sm:$0xff] %v3511
    %3576 = vst [vmem:[#allocation7 + $0x138] sm:$0xff] %v3512
    %3577 = vst [vmem:[#allocation7 + $0x140] sm:$0xff] %v3513
    %3578 = vst [vmem:[#allocation7 + $0x148] sm:$0xff] %v3514
    %3579 = vst [vmem:[#allocation7 + $0x150] sm:$0xff] %v3515
    %3580 = vst [vmem:[#allocation7 + $0x158] sm:$0xff] %v3516
    %3581 = vst [vmem:[#allocation7 + $0x160] sm:$0xff] %v3517
    %3582 = vst [vmem:[#allocation7 + $0x168] sm:$0xff] %v3518
    %3583 = vst [vmem:[#allocation7 + $0x170] sm:$0xff] %v3519
    %3584 = vst [vmem:[#allocation7 + $0x178] sm:$0xff] %v3520
    %3585 = vst [vmem:[#allocation7 + $0x180] sm:$0xff] %v3521
    %3586 = vst [vmem:[#allocation7 + $0x188] sm:$0xff] %v3522
    %3587 = vst [vmem:[#allocation7 + $0x190] sm:$0xff] %v3523
    %3588 = vst [vmem:[#allocation7 + $0x198] sm:$0xff] %v3524
    %3589 = vst [vmem:[#allocation7 + $0x1a0] sm:$0xff] %v3525
    %3590 = vst [vmem:[#allocation7 + $0x1a8] sm:$0xff] %v3526
    %3591 = vst [vmem:[#allocation7 + $0x1b0] sm:$0xff] %v3527
    %3592 = vst [vmem:[#allocation7 + $0x1b8] sm:$0xff] %v3528
    %3593 = vst [vmem:[#allocation7 + $0x1c0] sm:$0xff] %v3529
    %3594 = vst [vmem:[#allocation7 + $0x1c8] sm:$0xff] %v3530
    %3595 = vst [vmem:[#allocation7 + $0x1d0] sm:$0xff] %v3531
    %3596 = vst [vmem:[#allocation7 + $0x1d8] sm:$0xff] %v3532
    %3597 = vst [vmem:[#allocation7 + $0x1e0] sm:$0xff] %v3533
    %3598 = vst [vmem:[#allocation7 + $0x1e8] sm:$0xff] %v3534
    %3599 = vst [vmem:[#allocation7 + $0x1f0] sm:$0xff] %v3535
    %3600 = vst [vmem:[#allocation7 + $0x1f8] sm:$0xff] %v3536
    %v3601 = vlaneseq
    %v3602 = vand.u32 %v3601, 127
    %vm3603 = vcmp.eq.s32.totalorder %v3602, 0
    %v3604 = vsel %vm3603, %v2829, 0.0
    %v3605 = vadd.f32 %v3604, 0.0
    %vm3606 = vcmp.eq.s32.totalorder %v3602, 1
    %v3607 = vsel %vm3606, %v3022, 0.0
    %v3608 = vadd.f32 %v3605, %v3607
    %vm3609 = vcmp.eq.s32.totalorder %v3602, 2
    %v3610 = vsel %vm3609, %v3215, 0.0
    %v3611 = vadd.f32 %v3608, %v3610
    %vm3612 = vcmp.eq.s32.totalorder %v3602, 3
    %v3613 = vsel %vm3612, %v3408, 0.0
    %v3614 = vadd.f32 %v3611, %v3613
    %3615 = vst [vmem:[%s6] sm:$0x1] %v3614
    // Predicated region
    $region30: #{inter_att_forward.1} parent=1 // pred_check
      _
    $region31: #{inter_att_forward.1} parent=1 // pred_check_branch
      %3617 = sbr.rel (0) target = $region33
    $region32: #{inter_att_forward.1} parent=1 // pred_region
      %s3619 = ssub.s32 8192, 8192
      %3620 = vsyncadd [#allocation4], %s3619
      %s3621 = sshll.u32 [#allocation7], 4
      %s3622 = int_to_ptr.vmem [resolvable:$true] %s3621
      %3627 = dma.vmem_to_hbm [thread:$0]  %s3622, 8192, %s5, [#allocation4], 128, 128, 8
    $region33: #{inter_att_forward.1} parent=1 // pred_fallthru
      _
    // Predicated region
    $region34: #{inter_att_forward.1} parent=1 // pred_check
      _
    $region35: #{inter_att_forward.1} parent=1 // pred_check_branch
      %3629 = sbr.rel (0) target = $region37
    $region36: #{inter_att_forward.1} parent=1 // pred_region
      _
    $region37: #{inter_att_forward.1} parent=1 // pred_fallthru
      _
    // Predicated region
    $region38: #{inter_att_forward.1} parent=1 // pred_check
      _
    $region39: #{inter_att_forward.1} parent=1 // pred_check_branch
      %3631 = sbr.rel (0) target = $region41
    $region40: #{inter_att_forward.1} parent=1 // pred_region
      %3632 = dma.done [#allocation4], 8192
    $region41: #{inter_att_forward.1} parent=1 // pred_fallthru
      _
    // Predicated region
    $region42: #{inter_att_forward.1} parent=1 // pred_check
      _
    $region43: #{inter_att_forward.1} parent=1 // pred_check_branch
      %3634 = sbr.rel (0) target = $region45
    $region44: #{inter_att_forward.1} parent=1 // pred_region
      _
    $region45: #{inter_att_forward.1} parent=1 // pred_fallthru
      _
    %3635 = vsyncpa [#allocation3], 1
    %3636 = vsyncpa [#allocation6], 1
    %3637 = vsyncpa [#allocation4], 1

</llo_original>
